<compile_context>
chip_gen: v7x
topology: tpu7x:2x2x1
jax: 0.10.0
libtpu: 0.0.40
codegen_flags: <defaults>
</compile_context>

<pallas_src>
import numpy as np

import jax
import jax.numpy as jnp
from jax.experimental import pallas as pl
from jax.experimental.pallas import tpu as pltpu

# ----------------------------- configuration --------------------------------
INPUT_SIZE = 90      # L (conv length == GRU feature size)
HIDDEN = 312         # GRU hidden size
IN_CH = 1            # Conv1d in_channels (must be 1 for torch.cat to be valid)
OUT_CH = 4           # Conv1d out_channels
KSZ = 3              # Conv1d kernel_size
L1 = 640
L2 = 320
BN_EPS = 1e-5
BATCH = 2            # small-batch demo (overlap path)
BATCH_BIG = 96       # big-batch demo (grid / resident-weight path)

DP = 96              # padded input feature lanes (90 -> 96; sublane multiple, less dead DMA)
HP = 384             # per-gate lane padding (3 * 128) for the fused GRU weight
CNN_FEAT = OUT_CH * 4            # 16 flattened CNN features
FEAT_PAD = 2 * HP + 128          # 896: [h_fwd | h_rev | cnn] padded, all 128-aligned
HEAD1_N = 1024       # padded width of the fused (spec1 | spec2 | dom1) weight
CONV_COLS = 256      # conv dense output columns: [even half | odd half], each 128 wide
CONV_HALF = 128
ROW_TILE = 256       # row tile for the batched (grid) path; matches v6e/v7x MXU M dimension

assert 2 * HIDDEN + CNN_FEAT == L1


# ------------------------------ kernel body ----------------------------------
def _msdan_compute(x_ref, gw_ref, gb_ref, gbhn_ref,
                   wc1_ref, bc1_ref, wc2_ref, bc2_ref, wc3_ref, bc3_ref,
                   bh1_ref, bh2_ref, feat_ref, head2_ref, head_weights):
    """Shared compute: rows = [x1; x2; xt; pad]."""
    xb = x_ref[...].astype(jnp.bfloat16)                 # (rows, 96)

    # ---- bidirectional GRU, single timestep, h0 = 0 --------------------------
    # One fused matmul for both directions and all three gates (r|z|n per dir).
    g = jnp.dot(xb, gw_ref[...], preferred_element_type=jnp.float32) + gb_ref[...]

    def gru_dir(goff, boff):
        # Padded lanes (312..383 of each gate) carry zero weights AND zero biases, so they
        # compute sigmoid(0)=0.5, tanh(0)=0 -> h_pad = 0 exactly; the fused head weight also
        # has zero rows there, so nothing can leak in.
        r = jax.nn.sigmoid(g[:, goff:goff + HP])
        z = jax.nn.sigmoid(g[:, goff + HP:goff + 2 * HP])
        n = jnp.tanh(g[:, goff + 2 * HP:goff + 3 * HP]
                     + r * gbhn_ref[:, boff:boff + HP])
        return (1.0 - z) * n                             # h = (1 - z) * n + z * 0

    h_fwd = gru_dir(0, 0)                                # (rows, 384), real lanes [:312]
    h_rev = gru_dir(3 * HP, HP)

    # ---- CNN branch -----------------------------------------------------------
    # Each Conv1d+BN is a dense matmul whose columns are [even positions | odd positions],
    # each half padded to 128 lanes, so MaxPool1d(2)+ReLU is an elementwise max of two
    # 128-lane-aligned halves.  Pad columns produce exact zeros.
    def conv_block(a, w_ref, b_ref):
        y = jnp.dot(a.astype(jnp.bfloat16), w_ref[...],
                    preferred_element_type=jnp.float32) + b_ref[...]
        return jnp.maximum(jnp.maximum(y[:, :CONV_HALF], y[:, CONV_HALF:]), 0.0)

    p1 = conv_block(xb, wc1_ref, bc1_ref)                # (rows, 128), real [:88]
    p2 = conv_block(p1, wc2_ref, bc2_ref)                # (rows, 128), real [:40]
    p3 = conv_block(p2, wc3_ref, bc3_ref)                # (rows, 128), real [:16]

    # ---- padded features: [h_fwd(384) | h_rev(384) | cnn(128)] = 896 lanes -----
    # All block widths are multiples of 128 -> no lane rotations; the compact 640-lane
    # feature tensor is sliced out in the wrapper (XLA side).
    feats = jnp.concatenate([h_fwd, h_rev, p3], axis=-1)                 # (rows, 896)
    feat_ref[...] = feats

    # ---- heads layer 1: spec1 | spec2 | domain_fc1, fused + ReLU ---------------
    wh1, wh2 = head_weights()            # overlap path: waits on the async copies here
    s = jnp.dot(feats.astype(jnp.bfloat16), wh1,
                preferred_element_type=jnp.float32) + bh1_ref[...]
    s = jnp.maximum(s, 0.0)                                              # (rows, 1024)

    # ---- heads layer 2: pred1/pred2 (sigmoid) + domain_fc3 (linear), fused -----
    o2 = jnp.dot(s.astype(jnp.bfloat16), wh2,
                 preferred_element_type=jnp.float32) + bh2_ref[...]      # (rows, 128)
    col = jax.lax.broadcasted_iota(jnp.int32, o2.shape, 1)
    head2_ref[...] = jnp.where(col < 4, jax.nn.sigmoid(o2), o2)


def _kernel_resident(x_ref, gw_ref, gb_ref, gbhn_ref,
                     wc1_ref, bc1_ref, wc2_ref, bc2_ref, wc3_ref, bc3_ref,
                     wh1_ref, bh1_ref, wh2_ref, bh2_ref,
                     feat_ref, head2_ref):
    """Grid path: all weights are VMEM-resident BlockSpec inputs (constant index_map)."""
    _msdan_compute(x_ref, gw_ref, gb_ref, gbhn_ref,
                   wc1_ref, bc1_ref, wc2_ref, bc2_ref, wc3_ref, bc3_ref,
                   bh1_ref, bh2_ref, feat_ref, head2_ref,
                   head_weights=lambda: (wh1_ref[...], wh2_ref[...]))


def _kernel_overlap(x_ref, gw_ref, gb_ref, gbhn_ref,
                    wc1_ref, bc1_ref, wc2_ref, bc2_ref, wc3_ref, bc3_ref,
                    wh1_hbm, bh1_ref, wh2_hbm, bh2_ref,
                    feat_ref, head2_ref,
                    wh1_vmem, wh2_vmem, sem):
    """Small-batch path: head weights stay in HBM and are DMA'd into VMEM scratch,
    overlapping the GRU/conv compute; the copies are waited on just before the head dots."""
    cp1 = pltpu.make_async_copy(wh1_hbm, wh1_vmem, sem.at[0])
    cp2 = pltpu.make_async_copy(wh2_hbm, wh2_vmem, sem.at[1])
    cp1.start()
    cp2.start()

    def head_weights():
        cp1.wait()
        cp2.wait()
        return wh1_vmem[...], wh2_vmem[...]

    _msdan_compute(x_ref, gw_ref, gb_ref, gbhn_ref,
                   wc1_ref, bc1_ref, wc2_ref, bc2_ref, wc3_ref, bc3_ref,
                   bh1_ref, bh2_ref, feat_ref, head2_ref,
                   head_weights=head_weights)


# ------------------------------- parameters -----------------------------------
def _uniform(key, shape, lo, hi):
    return jax.random.uniform(key, shape, jnp.float32, lo, hi)


def init_params(key):
    """Torch-layout parameters (what the nn.Module would hold)."""
    ks = iter(jax.random.split(key, 48))
    H, D = HIDDEN, INPUT_SIZE
    s_gru = 1.0 / float(np.sqrt(H))
    p = {}
    for d in ("fwd", "rev"):                      # bidirectional single-layer GRU
        p[f"gru_wih_{d}"] = _uniform(next(ks), (3 * H, D), -s_gru, s_gru)
        p[f"gru_bih_{d}"] = _uniform(next(ks), (3 * H,), -s_gru, s_gru)
        p[f"gru_bhh_{d}"] = _uniform(next(ks), (3 * H,), -s_gru, s_gru)
    conv_cfg = [("c1", IN_CH, OUT_CH), ("c2", OUT_CH, OUT_CH * 2), ("c3", OUT_CH * 2, OUT_CH * 4)]
    for name, cin, cout in conv_cfg:
        s = 1.0 / float(np.sqrt(cin * KSZ))
        p[f"{name}_W"] = _uniform(next(ks), (cout, cin, KSZ), -s, s)
        p[f"{name}_b"] = _uniform(next(ks), (cout,), -s, s)
        # mildly non-trivial running stats so the BN folding is actually exercised
        p[f"{name}_bn_gamma"] = _uniform(next(ks), (cout,), 0.8, 1.2)
        p[f"{name}_bn_beta"] = _uniform(next(ks), (cout,), -0.2, 0.2)
        p[f"{name}_bn_mean"] = _uniform(next(ks), (cout,), -0.2, 0.2)
        p[f"{name}_bn_var"] = _uniform(next(ks), (cout,), 0.8, 1.2)

    def lin(name, fin, fout):
        s = 1.0 / float(np.sqrt(fin))
        p[f"{name}_W"] = _uniform(next(ks), (fout, fin), -s, s)   # torch layout (out, in)
        p[f"{name}_b"] = _uniform(next(ks), (fout,), -s, s)

    lin("spec1", L1, L2)
    lin("spec2", L1, L2)
    lin("pred1", L2, 1)
    lin("pred2", L2, 1)
    lin("dom1", L1, L2)
    lin("dom3", L2, 3)
    return p


def pack_params(p):
    """One-time host-side packing: transpose, pad, fuse gates/heads, fold BN into convs."""
    H, D = HIDDEN, INPUT_SIZE

    # ---- GRU: both directions, gates fused along lanes, 384-lane aligned blocks ----
    gw = np.zeros((DP, 6 * HP), np.float32)
    gb = np.zeros((1, 6 * HP), np.float32)
    gbhn = np.zeros((1, 2 * HP), np.float32)
    for di, d in enumerate(("fwd", "rev")):
        w_ih = np.asarray(p[f"gru_wih_{d}"])      # (3H, D), gate order r, z, n
        b_ih = np.asarray(p[f"gru_bih_{d}"])
        b_hh = np.asarray(p[f"gru_bhh_{d}"])
        base = di * 3 * HP
        for gi in range(3):
            gw[:D, base + gi * HP: base + gi * HP + H] = w_ih[gi * H:(gi + 1) * H, :].T
        gb[0, base + 0 * HP: base + 0 * HP + H] = b_ih[:H] + b_hh[:H]            # r
        gb[0, base + 1 * HP: base + 1 * HP + H] = b_ih[H:2 * H] + b_hh[H:2 * H]  # z
        gb[0, base + 2 * HP: base + 2 * HP + H] = b_ih[2 * H:]                   # n (input bias)
        gbhn[0, di * HP: di * HP + H] = b_hh[2 * H:]                             # n (hidden bias)

    # ---- Conv1d + BN folded into dense matmuls, column layout = [even | pad | odd | pad] ----
    def conv_dense(name, lin_len, rows_pad):
        W = np.asarray(p[f"{name}_W"])            # (Cout, Cin, K)
        b = np.asarray(p[f"{name}_b"])
        gamma = np.asarray(p[f"{name}_bn_gamma"])
        beta = np.asarray(p[f"{name}_bn_beta"])
        mean = np.asarray(p[f"{name}_bn_mean"])
        var = np.asarray(p[f"{name}_bn_var"])
        Cout, Cin, K = W.shape
        Lout = (lin_len - K) // 2 + 1             # stride 2, valid padding
        Lh = Lout // 2                            # after MaxPool1d(2)
        scale = gamma / np.sqrt(var + BN_EPS)
        shift = scale * (b - mean) + beta
        M = np.zeros((rows_pad, CONV_COLS), np.float32)
        bias = np.zeros((1, CONV_COLS), np.float32)
        for cout in range(Cout):
            for parity in range(2):               # even / odd output positions
                for i in range(Lh):
                    l = 2 * i + parity
                    col = parity * CONV_HALF + cout * Lh + i
                    bias[0, col] = shift[cout]
                    for cin in range(Cin):
                        for k in range(K):
                            M[cin * lin_len + 2 * l + k, col] = W[cout, cin, k] * scale[cout]
        return M, bias, Lh

    wc1, bc1, lh1 = conv_dense("c1", D, DP)       # input rows 0..89 of 96; 88 real cols per half
    wc2, bc2, lh2 = conv_dense("c2", lh1, CONV_HALF)   # (128, 256); 40 real cols per half
    wc3, bc3, _ = conv_dense("c3", lh2, CONV_HALF)     # (128, 256); 16 real cols per half

    # ---- heads layer 1: spec1 | spec2 | domain_fc1 fused, rows in the padded 896 layout ----
    wh1_640 = np.zeros((L1, HEAD1_N), np.float32)
    bh1 = np.zeros((1, HEAD1_N), np.float32)
    wh1_640[:, 0:L2] = np.asarray(p["spec1_W"]).T
    wh1_640[:, L2:2 * L2] = np.asarray(p["spec2_W"]).T
    wh1_640[:, 2 * L2:3 * L2] = np.asarray(p["dom1_W"]).T
    bh1[0, 0:L2] = np.asarray(p["spec1_b"])
    bh1[0, L2:2 * L2] = np.asarray(p["spec2_b"])
    bh1[0, 2 * L2:3 * L2] = np.asarray(p["dom1_b"])

    wh1 = np.zeros((FEAT_PAD, HEAD1_N), np.float32)          # zero rows at padded positions
    wh1[0:H] = wh1_640[0:H]                                  # h_fwd block
    wh1[HP:HP + H] = wh1_640[H:2 * H]                        # h_rev block
    wh1[2 * HP:2 * HP + CNN_FEAT] = wh1_640[2 * H:2 * H + CNN_FEAT]   # CNN block

    # ---- heads layer 2: pred1.spec1 | pred2.spec1 | pred2.spec2 | domain_fc3 fused ----
    wh2 = np.zeros((HEAD1_N, 128), np.float32)
    bh2 = np.zeros((1, 128), np.float32)
    wp1 = np.asarray(p["pred1_W"]).reshape(-1)
    wp2 = np.asarray(p["pred2_W"]).reshape(-1)
    wh2[0:L2, 0] = wp1                                       # predictor1 on spec1 block
    wh2[0:L2, 1] = wp2                                       # predictor2 on spec1 block (for xt)
    wh2[L2:2 * L2, 2] = wp2                                  # predictor2 on spec2 block
    wh2[2 * L2:3 * L2, 4:7] = np.asarray(p["dom3_W"]).T      # domain_fc3 on dom1 block
    bh2[0, 0] = float(np.asarray(p["pred1_b"])[0])
    bh2[0, 1] = float(np.asarray(p["pred2_b"])[0])
    bh2[0, 2] = float(np.asarray(p["pred2_b"])[0])
    bh2[0, 4:7] = np.asarray(p["dom3_b"])

    return dict(
        gw=jnp.asarray(gw, jnp.bfloat16), gb=jnp.asarray(gb), gbhn=jnp.asarray(gbhn),
        wc1=jnp.asarray(wc1, jnp.bfloat16), bc1=jnp.asarray(bc1),
        wc2=jnp.asarray(wc2, jnp.bfloat16), bc2=jnp.asarray(bc2),
        wc3=jnp.asarray(wc3, jnp.bfloat16), bc3=jnp.asarray(bc3),
        wh1=jnp.asarray(wh1, jnp.bfloat16), bh1=jnp.asarray(bh1),
        wh2=jnp.asarray(wh2, jnp.bfloat16), bh2=jnp.asarray(bh2),
    )


# --------------------------------- forward ------------------------------------
def _pack_rows(x1, x2, xt, rows_pad):
    xs = jnp.concatenate([x1[:, 0, :], x2[:, 0, :], xt[:, 0, :]], axis=0).astype(jnp.float32)
    return jnp.pad(xs, ((0, rows_pad - xs.shape[0]), (0, DP - INPUT_SIZE)))


def forward(packed, x1, x2, xt):
    B = x1.shape[0]
    M = 3 * B

    weight_args = (packed["gw"], packed["gb"], packed["gbhn"],
                   packed["wc1"], packed["bc1"], packed["wc2"], packed["bc2"],
                   packed["wc3"], packed["bc3"],
                   packed["wh1"], packed["bh1"], packed["wh2"], packed["bh2"])

    vmem = pl.BlockSpec(memory_space=pltpu.MemorySpace.VMEM)
    any_spec = pl.BlockSpec(memory_space=pl.ANY)

    if M <= ROW_TILE:
        # ---- small-batch path: one invocation, head-weight DMA overlapped with compute ----
        Mp = ((M + 7) // 8) * 8
        xs = _pack_rows(x1, x2, xt, Mp)
        feat, head2 = pl.pallas_call(
            _kernel_overlap,
            out_shape=(jax.ShapeDtypeStruct((Mp, FEAT_PAD), jnp.float32),
                       jax.ShapeDtypeStruct((Mp, 128), jnp.float32)),
            in_specs=[vmem] * 10 + [any_spec, vmem, any_spec, vmem],
            out_specs=(vmem, vmem),
            scratch_shapes=[pltpu.VMEM((FEAT_PAD, HEAD1_N), jnp.bfloat16),
                            pltpu.VMEM((HEAD1_N, 128), jnp.bfloat16),
                            pltpu.SemaphoreType.DMA((2,))],
        )(xs, *weight_args)
    else:
        # ---- batched path: 256-row grid, weights resident (constant index_map) ----
        num_tiles = -(-M // ROW_TILE)
        Mp = num_tiles * ROW_TILE
        xs = _pack_rows(x1, x2, xt, Mp)
        in_specs = ([pl.BlockSpec((ROW_TILE, DP), lambda i: (i, 0))]
                    + [pl.BlockSpec(w.shape, lambda i: (0, 0)) for w in weight_args])
        feat, head2 = pl.pallas_call(
            _kernel_resident,
            out_shape=(jax.ShapeDtypeStruct((Mp, FEAT_PAD), jnp.float32),
                       jax.ShapeDtypeStruct((Mp, 128), jnp.float32)),
            grid=(num_tiles,),
            in_specs=in_specs,
            out_specs=(pl.BlockSpec((ROW_TILE, FEAT_PAD), lambda i: (i, 0)),
                       pl.BlockSpec((ROW_TILE, 128), lambda i: (i, 0))),
            compiler_params=pltpu.CompilerParams(dimension_semantics=("parallel",)),
        )(xs, *weight_args)

    # Rows >= M were computed from zero-padded inputs; slice them away before any reuse.
    feat = feat[:M]
    head2 = head2[:M]

    # Compact the padded 896-lane feature layout to the module's 640 features (XLA side).
    feats640 = jnp.concatenate([feat[:, 0:HIDDEN],
                                feat[:, HP:HP + HIDDEN],
                                feat[:, 2 * HP:2 * HP + CNN_FEAT]], axis=-1)

    f1 = feats640[0:B][:, None, :]                                # (B, 1, 640)
    f2 = feats640[B:2 * B][:, None, :]
    ft = feats640[2 * B:3 * B][:, None, :]

    pre_f1 = head2[0:B, 0].reshape(B, 1, 1)                       # predictor1(specific1(f1))
    pre_f2 = head2[B:2 * B, 2].reshape(B, 1, 1)                   # predictor2(specific2(f2))
    pre_t1 = head2[2 * B:3 * B, 0]                                # predictor1(specific1(ft))
    pre_t2 = head2[2 * B:3 * B, 1]                                # predictor2(specific1(ft))
    pre_t = ((pre_t1 + pre_t2) * 0.5).reshape(B, 1, 1)

    d1 = head2[0:B, 4:7][None, :, :]                              # (1, B, 3) like torch.stack(dim=1)
    d2 = head2[B:2 * B, 4:7][None, :, :]
    d3 = head2[2 * B:3 * B, 4:7][None, :, :]

    return pre_f1, pre_f2, pre_t, f1, f2, ft, d1, d2, d3


# ------------------------- pure-JAX f32 reference ------------------------------
def reference_forward(p, x1, x2, xt):
    H = HIDDEN

    def gru_dir(x, w_ih, b_ih, b_hh):
        gi = x @ w_ih.T + b_ih
        r = jax.nn.sigmoid(gi[:, :H] + b_hh[:H])
        z = jax.nn.sigmoid(gi[:, H:2 * H] + b_hh[H:2 * H])
        n = jnp.tanh(gi[:, 2 * H:] + r * b_hh[2 * H:])
        return (1.0 - z) * n

    def conv_bn_pool_relu(a, name):
        W = p[f"{name}_W"]; b = p[f"{name}_b"]
        Cout, Cin, K = W.shape
        Lin = a.shape[-1]
        Lout = (Lin - K) // 2 + 1
        cols = jnp.arange(Lout) * 2
        patches = jnp.stack([a[:, :, cols + k] for k in range(K)], axis=-1)  # (B,Cin,Lout,K)
        y = jnp.einsum("bclk,ock->bol", patches, W) + b[None, :, None]
        scale = p[f"{name}_bn_gamma"] / jnp.sqrt(p[f"{name}_bn_var"] + BN_EPS)
        y = scale[None, :, None] * (y - p[f"{name}_bn_mean"][None, :, None]) \
            + p[f"{name}_bn_beta"][None, :, None]
        Bq, C, L = y.shape
        y = y[:, :, :(L // 2) * 2].reshape(Bq, C, L // 2, 2).max(-1)
        return jnp.maximum(y, 0.0)

    def features(x):
        xg = x[:, 0, :]
        hf = gru_dir(xg, p["gru_wih_fwd"], p["gru_bih_fwd"], p["gru_bhh_fwd"])
        hb = gru_dir(xg, p["gru_wih_rev"], p["gru_bih_rev"], p["gru_bhh_rev"])
        c = conv_bn_pool_relu(conv_bn_pool_relu(conv_bn_pool_relu(x, "c1"), "c2"), "c3")
        return jnp.concatenate([hf, hb, c.reshape(x.shape[0], -1)], axis=-1)

    F1, F2, Ft = features(x1), features(x2), features(xt)

    def lin(name, a):
        return a @ p[f"{name}_W"].T + p[f"{name}_b"]

    s1_f1 = jnp.maximum(lin("spec1", F1), 0.0)
    s2_f2 = jnp.maximum(lin("spec2", F2), 0.0)
    s1_ft = jnp.maximum(lin("spec1", Ft), 0.0)
    pre_f1 = jax.nn.sigmoid(lin("pred1", s1_f1)).reshape(-1, 1, 1)
    pre_f2 = jax.nn.sigmoid(lin("pred2", s2_f2)).reshape(-1, 1, 1)
    pre_t = ((jax.nn.sigmoid(lin("pred1", s1_ft)) + jax.nn.sigmoid(lin("pred2", s1_ft)))
             * 0.5).reshape(-1, 1, 1)

    def dom(Fm):
        return lin("dom3", jnp.maximum(lin("dom1", Fm), 0.0))

    return (pre_f1, pre_f2, pre_t,
            F1[:, None, :], F2[:, None, :], Ft[:, None, :],
            dom(F1)[None], dom(F2)[None], dom(Ft)[None])


# ----------------------------------- main --------------------------------------
def _check(outs, refs):
    for got, want in zip(outs, refs):
        np.testing.assert_allclose(np.asarray(got), np.asarray(want), atol=5e-2, rtol=5e-2)


if __name__ == "__main__":
    params = init_params(jax.random.PRNGKey(42))
    packed = pack_params(params)

    fwd = jax.jit(forward)
    ref = jax.jit(reference_forward)

    # ---- small batch (overlap path) ----
    k1, k2, k3, k4, k5, k6 = jax.random.split(jax.random.PRNGKey(0), 6)
    x1 = jax.random.normal(k1, (BATCH, IN_CH, INPUT_SIZE), jnp.float32)
    x2 = jax.random.normal(k2, (BATCH, IN_CH, INPUT_SIZE), jnp.float32)
    xt = jax.random.normal(k3, (BATCH, IN_CH, INPUT_SIZE), jnp.float32)

    outs = jax.block_until_ready(fwd(packed, x1, x2, xt))
    pre_f1, pre_f2, pre_t, f1, f2, ft, d1, d2, d3 = outs
    assert pre_f1.shape == (BATCH, 1, 1) and pre_f2.shape == (BATCH, 1, 1)
    assert pre_t.shape == (BATCH, 1, 1)
    assert f1.shape == (BATCH, 1, L1) and f2.shape == (BATCH, 1, L1) and ft.shape == (BATCH, 1, L1)
    assert d1.shape == (1, BATCH, 3) and d2.shape == (1, BATCH, 3) and d3.shape == (1, BATCH, 3)
    _check(outs, jax.block_until_ready(ref(params, x1, x2, xt)))

    # ---- larger batch (grid / resident-weight path, parallel row tiles) ----
    xb1 = jax.random.normal(k4, (BATCH_BIG, IN_CH, INPUT_SIZE), jnp.float32)
    xb2 = jax.random.normal(k5, (BATCH_BIG, IN_CH, INPUT_SIZE), jnp.float32)
    xbt = jax.random.normal(k6, (BATCH_BIG, IN_CH, INPUT_SIZE), jnp.float32)

    outs_b = jax.block_until_ready(fwd(packed, xb1, xb2, xbt))
    assert outs_b[0].shape == (BATCH_BIG, 1, 1)
    assert outs_b[3].shape == (BATCH_BIG, 1, L1)
    assert outs_b[6].shape == (1, BATCH_BIG, 3)
    _check(outs_b, jax.block_until_ready(ref(params, xb1, xb2, xbt)))

    print("KERNEL_OK")
</pallas_src>

<mosaic_0001>
module attributes {stable_mosaic.version = 11 : i64} {
  func.func @_kernel_overlap(%arg0: memref<8x96xf32, #tpu.memory_space<vmem>>, %arg1: memref<96x2304xbf16, #tpu.memory_space<vmem>>, %arg2: memref<1x2304xf32, #tpu.memory_space<vmem>>, %arg3: memref<1x768xf32, #tpu.memory_space<vmem>>, %arg4: memref<96x256xbf16, #tpu.memory_space<vmem>>, %arg5: memref<1x256xf32, #tpu.memory_space<vmem>>, %arg6: memref<128x256xbf16, #tpu.memory_space<vmem>>, %arg7: memref<1x256xf32, #tpu.memory_space<vmem>>, %arg8: memref<128x256xbf16, #tpu.memory_space<vmem>>, %arg9: memref<1x256xf32, #tpu.memory_space<vmem>>, %arg10: memref<896x1024xbf16, #tpu.memory_space<any>>, %arg11: memref<1x1024xf32, #tpu.memory_space<vmem>>, %arg12: memref<1024x128xbf16, #tpu.memory_space<any>>, %arg13: memref<1x128xf32, #tpu.memory_space<vmem>>, %arg14: memref<8x896xf32, #tpu.memory_space<vmem>>, %arg15: memref<8x128xf32, #tpu.memory_space<vmem>>, %arg16: memref<896x1024xbf16, #tpu.memory_space<vmem>>, %arg17: memref<1024x128xbf16, #tpu.memory_space<vmem>>, %arg18: memref<2x!tpu.dma_semaphore, #tpu.memory_space<semaphore_mem>>) attributes {dimension_semantics = [], scalar_prefetch = 0 : i64, scratch_operands = 3 : i64, tpu.core_type = #tpu.core_type<tc>} {
    %c0_i32 = arith.constant 0 : i32
    %0 = tpu.memref_slice %arg18[%c0_i32] : memref<2x!tpu.dma_semaphore, #tpu.memory_space<semaphore_mem>> -> memref<1x!tpu.dma_semaphore, #tpu.memory_space<semaphore_mem>>
    %1 = tpu.memref_squeeze %0 : memref<1x!tpu.dma_semaphore, #tpu.memory_space<semaphore_mem>> -> memref<!tpu.dma_semaphore, #tpu.memory_space<semaphore_mem>>
    tpu.enqueue_dma source(%arg10 : memref<896x1024xbf16, #tpu.memory_space<any>>) target(%arg16 : memref<896x1024xbf16, #tpu.memory_space<vmem>>) target_semaphore(%1 : memref<!tpu.dma_semaphore, #tpu.memory_space<semaphore_mem>>)
    %c1_i32 = arith.constant 1 : i32
    %2 = tpu.memref_slice %arg18[%c1_i32] : memref<2x!tpu.dma_semaphore, #tpu.memory_space<semaphore_mem>> -> memref<1x!tpu.dma_semaphore, #tpu.memory_space<semaphore_mem>>
    %3 = tpu.memref_squeeze %2 : memref<1x!tpu.dma_semaphore, #tpu.memory_space<semaphore_mem>> -> memref<!tpu.dma_semaphore, #tpu.memory_space<semaphore_mem>>
    tpu.enqueue_dma source(%arg12 : memref<1024x128xbf16, #tpu.memory_space<any>>) target(%arg17 : memref<1024x128xbf16, #tpu.memory_space<vmem>>) target_semaphore(%3 : memref<!tpu.dma_semaphore, #tpu.memory_space<semaphore_mem>>)
    %c0 = arith.constant 0 : index
    %c0_0 = arith.constant 0 : index
    %4 = vector.load %arg0[%c0, %c0_0] : memref<8x96xf32, #tpu.memory_space<vmem>>, vector<8x96xf32>
    %5 = arith.truncf %4 : vector<8x96xf32> to vector<8x96xbf16>
    %c0_1 = arith.constant 0 : index
    %c0_2 = arith.constant 0 : index
    %6 = vector.load %arg1[%c0_1, %c0_2] : memref<96x2304xbf16, #tpu.memory_space<vmem>>, vector<96x2304xbf16>
    %cst = arith.constant dense<0.000000e+00> : vector<8x2304xf32>
    %7 = tpu.matmul %5, %6, %cst {dimension_numbers = #tpu.dot_dimension_numbers<[1], [0], [0], [1], [0, 0, 1, 1], [], []>} : vector<8x96xbf16>, vector<96x2304xbf16>, vector<8x2304xf32> -> vector<8x2304xf32>
    %c0_3 = arith.constant 0 : index
    %c0_4 = arith.constant 0 : index
    %8 = vector.load %arg2[%c0_3, %c0_4] : memref<1x2304xf32, #tpu.memory_space<vmem>>, vector<1x2304xf32>
    %9 = vector.broadcast %8 : vector<1x2304xf32> to vector<8x2304xf32>
    %10 = arith.addf %7, %9 : vector<8x2304xf32>
    %11 = vector.extract_strided_slice %10 {offsets = [0, 0], sizes = [8, 384], strides = [1, 1]} : vector<8x2304xf32> to vector<8x384xf32>
    %12 = arith.negf %11 : vector<8x384xf32>
    %13 = math.exp %12 : vector<8x384xf32>
    %cst_5 = arith.constant 1.000000e+00 : f32
    %14 = vector.broadcast %cst_5 : f32 to vector<8x384xf32>
    %15 = arith.addf %14, %13 : vector<8x384xf32>
    %16 = arith.divf %14, %15 : vector<8x384xf32>
    %17 = vector.extract_strided_slice %10 {offsets = [0, 384], sizes = [8, 384], strides = [1, 1]} : vector<8x2304xf32> to vector<8x384xf32>
    %18 = arith.negf %17 : vector<8x384xf32>
    %19 = math.exp %18 : vector<8x384xf32>
    %cst_6 = arith.constant 1.000000e+00 : f32
    %20 = vector.broadcast %cst_6 : f32 to vector<8x384xf32>
    %21 = arith.addf %20, %19 : vector<8x384xf32>
    %22 = arith.divf %20, %21 : vector<8x384xf32>
    %23 = vector.extract_strided_slice %10 {offsets = [0, 768], sizes = [8, 384], strides = [1, 1]} : vector<8x2304xf32> to vector<8x384xf32>
    %c0_7 = arith.constant 0 : index
    %c0_8 = arith.constant 0 : index
    %24 = vector.load %arg3[%c0_7, %c0_8] : memref<1x768xf32, #tpu.memory_space<vmem>>, vector<1x384xf32>
    %25 = vector.broadcast %24 : vector<1x384xf32> to vector<8x384xf32>
    %26 = arith.mulf %16, %25 : vector<8x384xf32>
    %27 = arith.addf %23, %26 : vector<8x384xf32>
    %28 = math.tanh %27 : vector<8x384xf32>
    %cst_9 = arith.constant 1.000000e+00 : f32
    %29 = vector.broadcast %cst_9 : f32 to vector<8x384xf32>
    %30 = arith.subf %29, %22 : vector<8x384xf32>
    %31 = arith.mulf %30, %28 : vector<8x384xf32>
    %32 = vector.extract_strided_slice %10 {offsets = [0, 1152], sizes = [8, 384], strides = [1, 1]} : vector<8x2304xf32> to vector<8x384xf32>
    %33 = arith.negf %32 : vector<8x384xf32>
    %34 = math.exp %33 : vector<8x384xf32>
    %cst_10 = arith.constant 1.000000e+00 : f32
    %35 = vector.broadcast %cst_10 : f32 to vector<8x384xf32>
    %36 = arith.addf %35, %34 : vector<8x384xf32>
    %37 = arith.divf %35, %36 : vector<8x384xf32>
    %38 = vector.extract_strided_slice %10 {offsets = [0, 1536], sizes = [8, 384], strides = [1, 1]} : vector<8x2304xf32> to vector<8x384xf32>
    %39 = arith.negf %38 : vector<8x384xf32>
    %40 = math.exp %39 : vector<8x384xf32>
    %cst_11 = arith.constant 1.000000e+00 : f32
    %41 = vector.broadcast %cst_11 : f32 to vector<8x384xf32>
    %42 = arith.addf %41, %40 : vector<8x384xf32>
    %43 = arith.divf %41, %42 : vector<8x384xf32>
    %44 = vector.extract_strided_slice %10 {offsets = [0, 1920], sizes = [8, 384], strides = [1, 1]} : vector<8x2304xf32> to vector<8x384xf32>
    %c0_12 = arith.constant 0 : index
    %c384 = arith.constant 384 : index
    %45 = vector.load %arg3[%c0_12, %c384] : memref<1x768xf32, #tpu.memory_space<vmem>>, vector<1x384xf32>
    %46 = vector.broadcast %45 : vector<1x384xf32> to vector<8x384xf32>
    %47 = arith.mulf %37, %46 : vector<8x384xf32>
    %48 = arith.addf %44, %47 : vector<8x384xf32>
    %49 = math.tanh %48 : vector<8x384xf32>
    %cst_13 = arith.constant 1.000000e+00 : f32
    %50 = vector.broadcast %cst_13 : f32 to vector<8x384xf32>
    %51 = arith.subf %50, %43 : vector<8x384xf32>
    %52 = arith.mulf %51, %49 : vector<8x384xf32>
    %c0_14 = arith.constant 0 : index
    %c0_15 = arith.constant 0 : index
    %53 = vector.load %arg4[%c0_14, %c0_15] : memref<96x256xbf16, #tpu.memory_space<vmem>>, vector<96x256xbf16>
    %cst_16 = arith.constant dense<0.000000e+00> : vector<8x256xf32>
    %54 = tpu.matmul %5, %53, %cst_16 {dimension_numbers = #tpu.dot_dimension_numbers<[1], [0], [0], [1], [0, 0, 1, 1], [], []>} : vector<8x96xbf16>, vector<96x256xbf16>, vector<8x256xf32> -> vector<8x256xf32>
    %c0_17 = arith.constant 0 : index
    %c0_18 = arith.constant 0 : index
    %55 = vector.load %arg5[%c0_17, %c0_18] : memref<1x256xf32, #tpu.memory_space<vmem>>, vector<1x256xf32>
    %56 = vector.broadcast %55 : vector<1x256xf32> to vector<8x256xf32>
    %57 = arith.addf %54, %56 : vector<8x256xf32>
    %58 = vector.extract_strided_slice %57 {offsets = [0, 0], sizes = [8, 128], strides = [1, 1]} : vector<8x256xf32> to vector<8x128xf32>
    %59 = vector.extract_strided_slice %57 {offsets = [0, 128], sizes = [8, 128], strides = [1, 1]} : vector<8x256xf32> to vector<8x128xf32>
    %60 = arith.maximumf %58, %59 : vector<8x128xf32>
    %cst_19 = arith.constant 0.000000e+00 : f32
    %61 = vector.broadcast %cst_19 : f32 to vector<8x128xf32>
    %62 = arith.maximumf %60, %61 : vector<8x128xf32>
    %63 = arith.truncf %62 : vector<8x128xf32> to vector<8x128xbf16>
    %c0_20 = arith.constant 0 : index
    %c0_21 = arith.constant 0 : index
    %64 = vector.load %arg6[%c0_20, %c0_21] : memref<128x256xbf16, #tpu.memory_space<vmem>>, vector<128x256xbf16>
    %cst_22 = arith.constant dense<0.000000e+00> : vector<8x256xf32>
    %65 = tpu.matmul %63, %64, %cst_22 {dimension_numbers = #tpu.dot_dimension_numbers<[1], [0], [0], [1], [0, 0, 1, 1], [], []>} : vector<8x128xbf16>, vector<128x256xbf16>, vector<8x256xf32> -> vector<8x256xf32>
    %c0_23 = arith.constant 0 : index
    %c0_24 = arith.constant 0 : index
    %66 = vector.load %arg7[%c0_23, %c0_24] : memref<1x256xf32, #tpu.memory_space<vmem>>, vector<1x256xf32>
    %67 = vector.broadcast %66 : vector<1x256xf32> to vector<8x256xf32>
    %68 = arith.addf %65, %67 : vector<8x256xf32>
    %69 = vector.extract_strided_slice %68 {offsets = [0, 0], sizes = [8, 128], strides = [1, 1]} : vector<8x256xf32> to vector<8x128xf32>
    %70 = vector.extract_strided_slice %68 {offsets = [0, 128], sizes = [8, 128], strides = [1, 1]} : vector<8x256xf32> to vector<8x128xf32>
    %71 = arith.maximumf %69, %70 : vector<8x128xf32>
    %cst_25 = arith.constant 0.000000e+00 : f32
    %72 = vector.broadcast %cst_25 : f32 to vector<8x128xf32>
    %73 = arith.maximumf %71, %72 : vector<8x128xf32>
    %74 = arith.truncf %73 : vector<8x128xf32> to vector<8x128xbf16>
    %c0_26 = arith.constant 0 : index
    %c0_27 = arith.constant 0 : index
    %75 = vector.load %arg8[%c0_26, %c0_27] : memref<128x256xbf16, #tpu.memory_space<vmem>>, vector<128x256xbf16>
    %cst_28 = arith.constant dense<0.000000e+00> : vector<8x256xf32>
    %76 = tpu.matmul %74, %75, %cst_28 {dimension_numbers = #tpu.dot_dimension_numbers<[1], [0], [0], [1], [0, 0, 1, 1], [], []>} : vector<8x128xbf16>, vector<128x256xbf16>, vector<8x256xf32> -> vector<8x256xf32>
    %c0_29 = arith.constant 0 : index
    %c0_30 = arith.constant 0 : index
    %77 = vector.load %arg9[%c0_29, %c0_30] : memref<1x256xf32, #tpu.memory_space<vmem>>, vector<1x256xf32>
    %78 = vector.broadcast %77 : vector<1x256xf32> to vector<8x256xf32>
    %79 = arith.addf %76, %78 : vector<8x256xf32>
    %80 = vector.extract_strided_slice %79 {offsets = [0, 0], sizes = [8, 128], strides = [1, 1]} : vector<8x256xf32> to vector<8x128xf32>
    %81 = vector.extract_strided_slice %79 {offsets = [0, 128], sizes = [8, 128], strides = [1, 1]} : vector<8x256xf32> to vector<8x128xf32>
    %82 = arith.maximumf %80, %81 : vector<8x128xf32>
    %cst_31 = arith.constant 0.000000e+00 : f32
    %83 = vector.broadcast %cst_31 : f32 to vector<8x128xf32>
    %84 = arith.maximumf %82, %83 : vector<8x128xf32>
    %85 = tpu.concatenate %31, %52, %84 in 1 : vector<8x384xf32>, vector<8x384xf32>, vector<8x128xf32> -> vector<8x896xf32>
    %c0_32 = arith.constant 0 : index
    %c0_33 = arith.constant 0 : index
    %86 = vector.load %arg14[%c0_32, %c0_33] : memref<8x896xf32, #tpu.memory_space<vmem>>, vector<8x896xf32>
    tpu.vector_store %arg14[%c0_32, %c0_33], %85 {strides = array<i32>} : memref<8x896xf32, #tpu.memory_space<vmem>>, vector<8x896xf32>,
    %c0_i32_34 = arith.constant 0 : i32
    %87 = tpu.memref_slice %arg18[%c0_i32_34] : memref<2x!tpu.dma_semaphore, #tpu.memory_space<semaphore_mem>> -> memref<1x!tpu.dma_semaphore, #tpu.memory_space<semaphore_mem>>
    %88 = tpu.memref_squeeze %87 : memref<1x!tpu.dma_semaphore, #tpu.memory_space<semaphore_mem>> -> memref<!tpu.dma_semaphore, #tpu.memory_space<semaphore_mem>>
    tpu.wait_dma2 semaphore(%88 : memref<!tpu.dma_semaphore, #tpu.memory_space<semaphore_mem>>) src(%arg10 : memref<896x1024xbf16, #tpu.memory_space<any>>) dst(%arg16 : memref<896x1024xbf16, #tpu.memory_space<vmem>>)
    %c1_i32_35 = arith.constant 1 : i32
    %89 = tpu.memref_slice %arg18[%c1_i32_35] : memref<2x!tpu.dma_semaphore, #tpu.memory_space<semaphore_mem>> -> memref<1x!tpu.dma_semaphore, #tpu.memory_space<semaphore_mem>>
    %90 = tpu.memref_squeeze %89 : memref<1x!tpu.dma_semaphore, #tpu.memory_space<semaphore_mem>> -> memref<!tpu.dma_semaphore, #tpu.memory_space<semaphore_mem>>
    tpu.wait_dma2 semaphore(%90 : memref<!tpu.dma_semaphore, #tpu.memory_space<semaphore_mem>>) src(%arg12 : memref<1024x128xbf16, #tpu.memory_space<any>>) dst(%arg17 : memref<1024x128xbf16, #tpu.memory_space<vmem>>)
    %c0_36 = arith.constant 0 : index
    %c0_37 = arith.constant 0 : index
    %91 = vector.load %arg16[%c0_36, %c0_37] : memref<896x1024xbf16, #tpu.memory_space<vmem>>, vector<896x1024xbf16>
    %c0_38 = arith.constant 0 : index
    %c0_39 = arith.constant 0 : index
    %92 = vector.load %arg17[%c0_38, %c0_39] : memref<1024x128xbf16, #tpu.memory_space<vmem>>, vector<1024x128xbf16>
    %93 = arith.truncf %85 : vector<8x896xf32> to vector<8x896xbf16>
    %cst_40 = arith.constant dense<0.000000e+00> : vector<8x1024xf32>
    %94 = tpu.matmul %93, %91, %cst_40 {dimension_numbers = #tpu.dot_dimension_numbers<[1], [0], [0], [1], [0, 0, 1, 1], [], []>} : vector<8x896xbf16>, vector<896x1024xbf16>, vector<8x1024xf32> -> vector<8x1024xf32>
    %c0_41 = arith.constant 0 : index
    %c0_42 = arith.constant 0 : index
    %95 = vector.load %arg11[%c0_41, %c0_42] : memref<1x1024xf32, #tpu.memory_space<vmem>>, vector<1x1024xf32>
    %96 = vector.broadcast %95 : vector<1x1024xf32> to vector<8x1024xf32>
    %97 = arith.addf %94, %96 : vector<8x1024xf32>
    %cst_43 = arith.constant 0.000000e+00 : f32
    %98 = vector.broadcast %cst_43 : f32 to vector<8x1024xf32>
    %99 = arith.maximumf %97, %98 : vector<8x1024xf32>
    %100 = arith.truncf %99 : vector<8x1024xf32> to vector<8x1024xbf16>
    %cst_44 = arith.constant dense<0.000000e+00> : vector<8x128xf32>
    %101 = tpu.matmul %100, %92, %cst_44 {dimension_numbers = #tpu.dot_dimension_numbers<[1], [0], [0], [1], [0, 0, 1, 1], [], []>} : vector<8x1024xbf16>, vector<1024x128xbf16>, vector<8x128xf32> -> vector<8x128xf32>
    %c0_45 = arith.constant 0 : index
    %c0_46 = arith.constant 0 : index
    %102 = vector.load %arg13[%c0_45, %c0_46] : memref<1x128xf32, #tpu.memory_space<vmem>>, vector<1x128xf32>
    %103 = vector.broadcast %102 : vector<1x128xf32> to vector<8x128xf32>
    %104 = arith.addf %101, %103 : vector<8x128xf32>
    %105 = tpu.iota {dimensions = array<i32: 1>} : vector<8x128xi32>
    %c4_i32 = arith.constant 4 : i32
    %106 = vector.broadcast %c4_i32 : i32 to vector<8x128xi32>
    %107 = arith.cmpi slt, %105, %106 : vector<8x128xi32>
    %108 = arith.negf %104 : vector<8x128xf32>
    %109 = math.exp %108 : vector<8x128xf32>
    %cst_47 = arith.constant 1.000000e+00 : f32
    %110 = vector.broadcast %cst_47 : f32 to vector<8x128xf32>
    %111 = arith.addf %110, %109 : vector<8x128xf32>
    %112 = arith.divf %110, %111 : vector<8x128xf32>
    %113 = arith.select %107, %112, %104 : vector<8x128xi1>, vector<8x128xf32>
    %c0_48 = arith.constant 0 : index
    %c0_49 = arith.constant 0 : index
    %114 = vector.load %arg15[%c0_48, %c0_49] : memref<8x128xf32, #tpu.memory_space<vmem>>, vector<8x128xf32>
    tpu.vector_store %arg15[%c0_48, %c0_49], %113 {strides = array<i32>} : memref<8x128xf32, #tpu.memory_space<vmem>>, vector<8x128xf32>,
    return
  }
}

</mosaic_0001>

<llo_original>
// kernel: forward.1
$region0: #{forward.1}
  #allocation0 [shape = 'u32[]', space=smem, size = 0x4, offset = 0x4, fixed_abs, tag = 'smem constant byte address 0x4 - core index']
  #allocation1 [shape = 'u32[144,128]{1,0:T(1,128)}', space=vmem, size = 0x12000, scoped, tag = 'internal scratch']
  #allocation2 [shape = 'bf16[896,1024]{1,0:T(16,128)(2,1)}', space=vmem, size = 0x1c0000, scoped, tag = 'scratch operand']
  #allocation3 [shape = 'bf16[1024,128]{1,0:T(16,128)(2,1)}', space=vmem, size = 0x40000, scoped, tag = 'scratch operand']
  #allocation4 [shape = 's32[2]{0}', space=sflag, size = 0x8, scoped, tag = 'scratch operand']
  #allocation22 [shape = 's32[]', space=sflag, size = 0x4, offset = 0, fixed_abs, tag = 'sflag constant byte address 0x0 - dummy sync flag']
  #allocation24 [shape = 's32[]', space=sflag, size = 0x4, offset = 0, fixed_abs, tag = 'sflag constant byte address 0x0 - dummy sync flag']
  #allocation25 [shape = 's32[]', space=sflag, size = 0x4, offset = 0, fixed_abs, tag = 'sflag constant byte address 0x0 - dummy sync flag']
  #allocation26 [shape = 'u32[]', space=smem, size = 0x4, offset = 0x44, fixed_abs, tag = 'smem constant byte address 0x44 - assertion arg 0']
  #allocation27 [shape = 'u32[]', space=smem, size = 0x4, offset = 0x48, fixed_abs, tag = 'smem constant byte address 0x48 - assertion arg 1']
  %s0 = inlined_call_operand.vmem [shape: f32[8,96], index: 0, kind: input, shape index: {}]
  %s1 = inlined_call_operand.hbm [shape: bf16[96,2304], index: 1, kind: input, shape index: {}]
  %s2 = inlined_call_operand.hbm [shape: f32[1,2304], index: 2, kind: input, shape index: {}]
  %s3 = inlined_call_operand.hbm [shape: f32[1,768], index: 3, kind: input, shape index: {}]
  %s4 = inlined_call_operand.hbm [shape: bf16[96,256], index: 4, kind: input, shape index: {}]
  %s5 = inlined_call_operand.hbm [shape: f32[1,256], index: 5, kind: input, shape index: {}]
  %s6 = inlined_call_operand.hbm [shape: bf16[128,256], index: 6, kind: input, shape index: {}]
  %s7 = inlined_call_operand.hbm [shape: f32[1,256], index: 7, kind: input, shape index: {}]
  %s8 = inlined_call_operand.hbm [shape: bf16[128,256], index: 8, kind: input, shape index: {}]
  %s9 = inlined_call_operand.hbm [shape: f32[1,256], index: 9, kind: input, shape index: {}]
  %s10 = inlined_call_operand.hbm [shape: bf16[896,1024], index: 10, kind: input, shape index: {}]
  %s11 = inlined_call_operand.hbm [shape: f32[1,1024], index: 11, kind: input, shape index: {}]
  %s12 = inlined_call_operand.hbm [shape: bf16[1024,128], index: 12, kind: input, shape index: {}]
  %s13 = inlined_call_operand.hbm [shape: f32[1,128], index: 13, kind: input, shape index: {}]
  %s14 = inlined_call_operand.vmem [shape: f32[8,896], index: 14, kind: output, shape index: {0}]
  %s15 = inlined_call_operand.vmem [shape: f32[8,128], index: 15, kind: output, shape index: {1}]
  %16 = xla_tuple %s14, %s15
  %s17 = sld [smem:[#allocation0]]
  $region114: #{forward.1} parent=0
    _
  %s19 = ssub.s32 1, %s17
  %s20 = scalar_select 0, %s19, %s17
  $region1: #{forward.1} parent=0
    #allocation5 [shape = 'u8[442368]{0}', space=vmem, size = 0x6c000, scoped, tag = 'input window, operand 1, single buffered']
    #allocation6 [shape = 's32[1]{0}', space=sflag, size = 0x4, scoped, tag = 'scoped memory for forward.1']
    #allocation7 [shape = 'u8[9216]{0}', space=vmem, size = 0x2400, scoped, tag = 'input window, operand 2, single buffered']
    #allocation8 [shape = 's32[1]{0}', space=sflag, size = 0x4, scoped, tag = 'scoped memory for forward.1']
    #allocation9 [shape = 'u8[3072]{0}', space=vmem, size = 0xc00, scoped, tag = 'input window, operand 3, single buffered']
    #allocation10 [shape = 'u8[49152]{0}', space=vmem, size = 0xc000, scoped, tag = 'input window, operand 4, single buffered']
    #allocation11 [shape = 's32[1]{0}', space=sflag, size = 0x4, scoped, tag = 'scoped memory for forward.1']
    #allocation12 [shape = 'u8[1024]{0}', space=vmem, size = 0x400, scoped, tag = 'input window, operand 5, single buffered']
    #allocation13 [shape = 'u8[65536]{0}', space=vmem, size = 0x10000, scoped, tag = 'input window, operand 6, single buffered']
    #allocation14 [shape = 's32[1]{0}', space=sflag, size = 0x4, scoped, tag = 'scoped memory for forward.1']
    #allocation15 [shape = 'u8[1024]{0}', space=vmem, size = 0x400, scoped, tag = 'input window, operand 7, single buffered']
    #allocation16 [shape = 'u8[65536]{0}', space=vmem, size = 0x10000, scoped, tag = 'input window, operand 8, single buffered']
    #allocation17 [shape = 's32[1]{0}', space=sflag, size = 0x4, scoped, tag = 'scoped memory for forward.1']
    #allocation18 [shape = 'u8[1024]{0}', space=vmem, size = 0x400, scoped, tag = 'input window, operand 9, single buffered']
    #allocation19 [shape = 'u8[4096]{0}', space=vmem, size = 0x1000, scoped, tag = 'input window, operand 11, single buffered']
    #allocation20 [shape = 's32[1]{0}', space=sflag, size = 0x4, scoped, tag = 'scoped memory for forward.1']
    #allocation21 [shape = 'u8[512]{0}', space=vmem, size = 0x400, scoped, tag = 'input window, operand 13, single buffered']
    #allocation23 [shape = 'u32[9]{0}', space=smem, size = 0x24, scoped, tag = 'DMA stride descriptor']
    %21 = vsyncpa [#allocation6], 0
    %22 = vsyncpa [#allocation8], 0
    %23 = vsyncpa [#allocation11], 0
    %24 = vsyncpa [#allocation14], 0
    %25 = vsyncpa [#allocation17], 0
    %26 = vsyncpa [#allocation20], 0
    // Predicated region
    $region2: #{forward.1} parent=1 // pred_check
      _
    $region3: #{forward.1} parent=1 // pred_check_branch
      %28 = sbr.rel (0) target = $region5
    $region4: #{forward.1} parent=1 // pred_region
      _
    $region5: #{forward.1} parent=1 // pred_fallthru
      _
    // Predicated region
    $region6: #{forward.1} parent=1 // pred_check
      _
    $region7: #{forward.1} parent=1 // pred_check_branch
      %30 = sbr.rel (0) target = $region9
    $region8: #{forward.1} parent=1 // pred_region
      %s32 = ssub.s32 13824, 13824
      %33 = vsyncadd [#allocation6], %s32
      %s34 = sshll.u32 [#allocation5], 4
      %s35 = int_to_ptr.vmem [resolvable:$true] %s34
      %40 = dma.hbm_to_vmem [thread:$0]  %s1, 13824, %s35, [#allocation6], 1152, 1152, 72
    $region9: #{forward.1} parent=1 // pred_fallthru
      _
    // Predicated region
    $region10: #{forward.1} parent=1 // pred_check
      _
    $region11: #{forward.1} parent=1 // pred_check_branch
      %42 = sbr.rel (0) target = $region13
    $region12: #{forward.1} parent=1 // pred_region
      %s44 = ssub.s32 288, 288
      %45 = vsyncadd [#allocation8], %s44
      %s47 = sshll.u32 [#allocation7], 4
      %s48 = int_to_ptr.vmem [resolvable:$true] %s47
      %50 = dma.hbm_to_vmem [thread:$0]  %s2, 288, %s48, [#allocation8]
    $region13: #{forward.1} parent=1 // pred_fallthru
      _
    // Predicated region
    $region14: #{forward.1} parent=1 // pred_check
      _
    $region15: #{forward.1} parent=1 // pred_check_branch
      %52 = sbr.rel (0) target = $region17
    $region16: #{forward.1} parent=1 // pred_region
      %s54 = ssub.s32 96, 96
      %55 = vsyncadd [#allocation8], %s54
      %s57 = sshll.u32 [#allocation9], 4
      %s58 = int_to_ptr.vmem [resolvable:$true] %s57
      %60 = dma.hbm_to_vmem [thread:$0]  %s3, 96, %s58, [#allocation8]
    $region17: #{forward.1} parent=1 // pred_fallthru
      _
    // Predicated region
    $region18: #{forward.1} parent=1 // pred_check
      _
    $region19: #{forward.1} parent=1 // pred_check_branch
      %62 = sbr.rel (0) target = $region21
    $region20: #{forward.1} parent=1 // pred_region
      %s64 = ssub.s32 1536, 1536
      %65 = vsyncadd [#allocation11], %s64
      %s66 = sshll.u32 [#allocation10], 4
      %s67 = int_to_ptr.vmem [resolvable:$true] %s66
      %72 = dma.hbm_to_vmem [thread:$0]  %s4, 1536, %s67, [#allocation11], 128, 128, 8
    $region21: #{forward.1} parent=1 // pred_fallthru
      _
    // Predicated region
    $region22: #{forward.1} parent=1 // pred_check
      _
    $region23: #{forward.1} parent=1 // pred_check_branch
      %74 = sbr.rel (0) target = $region25
    $region24: #{forward.1} parent=1 // pred_region
      %s76 = ssub.s32 32, 32
      %77 = vsyncadd [#allocation11], %s76
      %s79 = sshll.u32 [#allocation12], 4
      %s80 = int_to_ptr.vmem [resolvable:$true] %s79
      %82 = dma.hbm_to_vmem [thread:$0]  %s5, 32, %s80, [#allocation11]
    $region25: #{forward.1} parent=1 // pred_fallthru
      _
    // Predicated region
    $region26: #{forward.1} parent=1 // pred_check
      _
    $region27: #{forward.1} parent=1 // pred_check_branch
      %84 = sbr.rel (0) target = $region29
    $region28: #{forward.1} parent=1 // pred_region
      %s86 = ssub.s32 2048, 2048
      %87 = vsyncadd [#allocation14], %s86
      %s88 = sshll.u32 [#allocation13], 4
      %s89 = int_to_ptr.vmem [resolvable:$true] %s88
      %94 = dma.hbm_to_vmem [thread:$0]  %s6, 2048, %s89, [#allocation14], 128, 128, 8
    $region29: #{forward.1} parent=1 // pred_fallthru
      _
    // Predicated region
    $region30: #{forward.1} parent=1 // pred_check
      _
    $region31: #{forward.1} parent=1 // pred_check_branch
      %96 = sbr.rel (0) target = $region33
    $region32: #{forward.1} parent=1 // pred_region
      %s98 = ssub.s32 32, 32
      %99 = vsyncadd [#allocation14], %s98
      %s101 = sshll.u32 [#allocation15], 4
      %s102 = int_to_ptr.vmem [resolvable:$true] %s101
      %104 = dma.hbm_to_vmem [thread:$0]  %s7, 32, %s102, [#allocation14]
    $region33: #{forward.1} parent=1 // pred_fallthru
      _
    // Predicated region
    $region34: #{forward.1} parent=1 // pred_check
      _
    $region35: #{forward.1} parent=1 // pred_check_branch
      %106 = sbr.rel (0) target = $region37
    $region36: #{forward.1} parent=1 // pred_region
      %s108 = ssub.s32 2048, 2048
      %109 = vsyncadd [#allocation17], %s108
      %s110 = sshll.u32 [#allocation16], 4
      %s111 = int_to_ptr.vmem [resolvable:$true] %s110
      %116 = dma.hbm_to_vmem [thread:$0]  %s8, 2048, %s111, [#allocation17], 128, 128, 8
    $region37: #{forward.1} parent=1 // pred_fallthru
      _
    // Predicated region
    $region38: #{forward.1} parent=1 // pred_check
      _
    $region39: #{forward.1} parent=1 // pred_check_branch
      %118 = sbr.rel (0) target = $region41
    $region40: #{forward.1} parent=1 // pred_region
      %s120 = ssub.s32 32, 32
      %121 = vsyncadd [#allocation17], %s120
      %s123 = sshll.u32 [#allocation18], 4
      %s124 = int_to_ptr.vmem [resolvable:$true] %s123
      %126 = dma.hbm_to_vmem [thread:$0]  %s9, 32, %s124, [#allocation17]
    $region41: #{forward.1} parent=1 // pred_fallthru
      _
    // Predicated region
    $region42: #{forward.1} parent=1 // pred_check
      _
    $region43: #{forward.1} parent=1 // pred_check_branch
      %128 = sbr.rel (0) target = $region45
    $region44: #{forward.1} parent=1 // pred_region
      %s130 = ssub.s32 128, 128
      %131 = vsyncadd [#allocation20], %s130
      %s133 = sshll.u32 [#allocation19], 4
      %s134 = int_to_ptr.vmem [resolvable:$true] %s133
      %136 = dma.hbm_to_vmem [thread:$0]  %s11, 128, %s134, [#allocation20]
    $region45: #{forward.1} parent=1 // pred_fallthru
      _
    // Predicated region
    $region46: #{forward.1} parent=1 // pred_check
      _
    $region47: #{forward.1} parent=1 // pred_check_branch
      %138 = sbr.rel (0) target = $region49
    $region48: #{forward.1} parent=1 // pred_region
      %s140 = ssub.s32 16, 16
      %141 = vsyncadd [#allocation20], %s140
      %s143 = sshll.u32 [#allocation21], 4
      %s144 = int_to_ptr.vmem [resolvable:$true] %s143
      %146 = dma.hbm_to_vmem [thread:$0]  %s13, 16, %s144, [#allocation20]
    $region49: #{forward.1} parent=1 // pred_fallthru
      _
    // Predicated region
    $region50: #{forward.1} parent=1 // pred_check
      _
    $region51: #{forward.1} parent=1 // pred_check_branch
      %148 = sbr.rel (0) target = $region53
    $region52: #{forward.1} parent=1 // pred_region
      %149 = dma.done [#allocation6], 13824
    $region53: #{forward.1} parent=1 // pred_fallthru
      _
    // Predicated region
    $region54: #{forward.1} parent=1 // pred_check
      _
    $region55: #{forward.1} parent=1 // pred_check_branch
      %151 = sbr.rel (0) target = $region57
    $region56: #{forward.1} parent=1 // pred_region
      %152 = dma.done [#allocation8], 288
    $region57: #{forward.1} parent=1 // pred_fallthru
      _
    // Predicated region
    $region58: #{forward.1} parent=1 // pred_check
      _
    $region59: #{forward.1} parent=1 // pred_check_branch
      %154 = sbr.rel (0) target = $region61
    $region60: #{forward.1} parent=1 // pred_region
      %155 = dma.done [#allocation8], 96
    $region61: #{forward.1} parent=1 // pred_fallthru
      _
    // Predicated region
    $region62: #{forward.1} parent=1 // pred_check
      _
    $region63: #{forward.1} parent=1 // pred_check_branch
      %157 = sbr.rel (0) target = $region65
    $region64: #{forward.1} parent=1 // pred_region
      %158 = dma.done [#allocation11], 1536
    $region65: #{forward.1} parent=1 // pred_fallthru
      _
    // Predicated region
    $region66: #{forward.1} parent=1 // pred_check
      _
    $region67: #{forward.1} parent=1 // pred_check_branch
      %160 = sbr.rel (0) target = $region69
    $region68: #{forward.1} parent=1 // pred_region
      %161 = dma.done [#allocation11], 32
    $region69: #{forward.1} parent=1 // pred_fallthru
      _
    // Predicated region
    $region70: #{forward.1} parent=1 // pred_check
      _
    $region71: #{forward.1} parent=1 // pred_check_branch
      %163 = sbr.rel (0) target = $region73
    $region72: #{forward.1} parent=1 // pred_region
      %164 = dma.done [#allocation14], 2048
    $region73: #{forward.1} parent=1 // pred_fallthru
      _
    // Predicated region
    $region74: #{forward.1} parent=1 // pred_check
      _
    $region75: #{forward.1} parent=1 // pred_check_branch
      %166 = sbr.rel (0) target = $region77
    $region76: #{forward.1} parent=1 // pred_region
      %167 = dma.done [#allocation14], 32
    $region77: #{forward.1} parent=1 // pred_fallthru
      _
    // Predicated region
    $region78: #{forward.1} parent=1 // pred_check
      _
    $region79: #{forward.1} parent=1 // pred_check_branch
      %169 = sbr.rel (0) target = $region81
    $region80: #{forward.1} parent=1 // pred_region
      %170 = dma.done [#allocation17], 2048
    $region81: #{forward.1} parent=1 // pred_fallthru
      _
    // Predicated region
    $region82: #{forward.1} parent=1 // pred_check
      _
    $region83: #{forward.1} parent=1 // pred_check_branch
      %172 = sbr.rel (0) target = $region85
    $region84: #{forward.1} parent=1 // pred_region
      %173 = dma.done [#allocation17], 32
    $region85: #{forward.1} parent=1 // pred_fallthru
      _
    // Predicated region
    $region86: #{forward.1} parent=1 // pred_check
      _
    $region87: #{forward.1} parent=1 // pred_check_branch
      %175 = sbr.rel (0) target = $region89
    $region88: #{forward.1} parent=1 // pred_region
      %176 = dma.done [#allocation20], 128
    $region89: #{forward.1} parent=1 // pred_fallthru
      _
    // Predicated region
    $region90: #{forward.1} parent=1 // pred_check
      _
    $region91: #{forward.1} parent=1 // pred_check_branch
      %178 = sbr.rel (0) target = $region93
    $region92: #{forward.1} parent=1 // pred_region
      %179 = dma.done [#allocation20], 16
    $region93: #{forward.1} parent=1 // pred_fallthru
      _
    %s182 = sshll.u32 1, 14
    %s183 = sxor.u32 4294967295, %s182
    %s185 = sld [smem:[#allocation0]]
    %s186 = sadd.s32 2, %s185
    %s188 = sshll.u32 7, 26
    %s189 = sxor.u32 4294967295, %s188
    %s190 = sand.u32 0, %s189
    %s191 = sshll.u32 %s186, 26
    %s192 = sor.u32 %s190, %s191
    %s193 = sshll.u32 [#allocation2], 4
    %s194 = int_to_ptr.vmem [resolvable:$true] %s193
    %197 = sst [smem:[#allocation23]] 1024
    %s198 = scalar_lea.smem [#allocation23], 1
    %199 = sst [smem:[%s198]] 1024
    %s200 = scalar_lea.smem [#allocation23], 2
    %201 = sst [smem:[%s200]] 8
    %s202 = scalar_lea.smem [#allocation23], 3
    %203 = sst [smem:[%s202]] 64
    %s204 = scalar_lea.smem [#allocation23], 4
    %205 = sst [smem:[%s204]] 128
    %s206 = scalar_lea.smem [#allocation23], 5
    %207 = sst [smem:[%s206]] 2
    %s208 = scalar_lea.smem [#allocation23], 6
    %209 = sst [smem:[%s208]] 512
    %s210 = scalar_lea.smem [#allocation23], 7
    %211 = sst [smem:[%s210]] 64
    %s212 = scalar_lea.smem [#allocation23], 8
    %213 = sst [smem:[%s212]] 4
    %215 = dma.general %s10, 57344, %s194, [#allocation4], [#allocation22], [#allocation23], %s192, 0
    %s216 = scalar_lea.sflag [#allocation4], 1
    // Predicated region
    $region94: #{forward.1} parent=1 // pred_check
      _
    $region95: #{forward.1} parent=1 // pred_check_branch
      %218 = sbr.rel target = $region97
    $region96: #{forward.1} parent=1 // pred_region
      %219 = sst [smem:[#allocation26]] [#allocation25]
      %220 = sst [smem:[#allocation27]] [#allocation24]
    $region97: #{forward.1} parent=1 // pred_fallthru
      _
    %222 = shalt.err (0)
    %s224 = sshll.u32 [#allocation3], 4
    %s225 = int_to_ptr.vmem [resolvable:$true] %s224
    %227 = dma.hbm_to_vmem [thread:$0]  %s12, 8192, %s225, %s216
    %v228 = vld [vmem:[%s0] sm:$0xff]
    %v229 = vpack.c.bf16 %v228, %v228
    %v230 = vld [vmem:[#allocation5] sm:$0xff]
    %v231 = vld [vmem:[#allocation5 + $0x8] sm:$0xff]
    %v232 = vld [vmem:[#allocation5 + $0x10] sm:$0xff]
    %v233 = vld [vmem:[#allocation5 + $0x18] sm:$0xff]
    %v234 = vld [vmem:[#allocation5 + $0x20] sm:$0xff]
    %v235 = vld [vmem:[#allocation5 + $0x28] sm:$0xff]
    %v236 = vld [vmem:[#allocation5 + $0x30] sm:$0xff]
    %v237 = vld [vmem:[#allocation5 + $0x38] sm:$0xff]
    %v238 = vld [vmem:[#allocation5 + $0x40] sm:$0xff]
    %v239 = vld [vmem:[#allocation5 + $0x48] sm:$0xff]
    %v240 = vld [vmem:[#allocation5 + $0x50] sm:$0xff]
    %v241 = vld [vmem:[#allocation5 + $0x58] sm:$0xff]
    %v242 = vld [vmem:[#allocation5 + $0x60] sm:$0xff]
    %v243 = vld [vmem:[#allocation5 + $0x68] sm:$0xff]
    %v244 = vld [vmem:[#allocation5 + $0x70] sm:$0xff]
    %v245 = vld [vmem:[#allocation5 + $0x78] sm:$0xff]
    %v246 = vld [vmem:[#allocation5 + $0x80] sm:$0xff]
    %v247 = vld [vmem:[#allocation5 + $0x88] sm:$0xff]
    %v248 = vld [vmem:[#allocation5 + $0x90] sm:$0xff]
    %v249 = vld [vmem:[#allocation5 + $0x98] sm:$0xff]
    %v250 = vld [vmem:[#allocation5 + $0xa0] sm:$0xff]
    %v251 = vld [vmem:[#allocation5 + $0xa8] sm:$0xff]
    %v252 = vld [vmem:[#allocation5 + $0xb0] sm:$0xff]
    %v253 = vld [vmem:[#allocation5 + $0xb8] sm:$0xff]
    %v254 = vld [vmem:[#allocation5 + $0xc0] sm:$0xff]
    %v255 = vld [vmem:[#allocation5 + $0xc8] sm:$0xff]
    %v256 = vld [vmem:[#allocation5 + $0xd0] sm:$0xff]
    %v257 = vld [vmem:[#allocation5 + $0xd8] sm:$0xff]
    %v258 = vld [vmem:[#allocation5 + $0xe0] sm:$0xff]
    %v259 = vld [vmem:[#allocation5 + $0xe8] sm:$0xff]
    %v260 = vld [vmem:[#allocation5 + $0xf0] sm:$0xff]
    %v261 = vld [vmem:[#allocation5 + $0xf8] sm:$0xff]
    %v262 = vld [vmem:[#allocation5 + $0x100] sm:$0xff]
    %v263 = vld [vmem:[#allocation5 + $0x108] sm:$0xff]
    %v264 = vld [vmem:[#allocation5 + $0x110] sm:$0xff]
    %v265 = vld [vmem:[#allocation5 + $0x118] sm:$0xff]
    %v266 = vld [vmem:[#allocation5 + $0x120] sm:$0xff]
    %v267 = vld [vmem:[#allocation5 + $0x128] sm:$0xff]
    %v268 = vld [vmem:[#allocation5 + $0x130] sm:$0xff]
    %v269 = vld [vmem:[#allocation5 + $0x138] sm:$0xff]
    %v270 = vld [vmem:[#allocation5 + $0x140] sm:$0xff]
    %v271 = vld [vmem:[#allocation5 + $0x148] sm:$0xff]
    %v272 = vld [vmem:[#allocation5 + $0x150] sm:$0xff]
    %v273 = vld [vmem:[#allocation5 + $0x158] sm:$0xff]
    %v274 = vld [vmem:[#allocation5 + $0x160] sm:$0xff]
    %v275 = vld [vmem:[#allocation5 + $0x168] sm:$0xff]
    %v276 = vld [vmem:[#allocation5 + $0x170] sm:$0xff]
    %v277 = vld [vmem:[#allocation5 + $0x178] sm:$0xff]
    %v278 = vld [vmem:[#allocation5 + $0x180] sm:$0xff]
    %v279 = vld [vmem:[#allocation5 + $0x188] sm:$0xff]
    %v280 = vld [vmem:[#allocation5 + $0x190] sm:$0xff]
    %v281 = vld [vmem:[#allocation5 + $0x198] sm:$0xff]
    %v282 = vld [vmem:[#allocation5 + $0x1a0] sm:$0xff]
    %v283 = vld [vmem:[#allocation5 + $0x1a8] sm:$0xff]
    %v284 = vld [vmem:[#allocation5 + $0x1b0] sm:$0xff]
    %v285 = vld [vmem:[#allocation5 + $0x1b8] sm:$0xff]
    %v286 = vld [vmem:[#allocation5 + $0x1c0] sm:$0xff]
    %v287 = vld [vmem:[#allocation5 + $0x1c8] sm:$0xff]
    %v288 = vld [vmem:[#allocation5 + $0x1d0] sm:$0xff]
    %v289 = vld [vmem:[#allocation5 + $0x1d8] sm:$0xff]
    %v290 = vld [vmem:[#allocation5 + $0x1e0] sm:$0xff]
    %v291 = vld [vmem:[#allocation5 + $0x1e8] sm:$0xff]
    %v292 = vld [vmem:[#allocation5 + $0x1f0] sm:$0xff]
    %v293 = vld [vmem:[#allocation5 + $0x1f8] sm:$0xff]
    %v294 = vld [vmem:[#allocation5 + $0x200] sm:$0xff]
    %v295 = vld [vmem:[#allocation5 + $0x208] sm:$0xff]
    %v296 = vld [vmem:[#allocation5 + $0x210] sm:$0xff]
    %v297 = vld [vmem:[#allocation5 + $0x218] sm:$0xff]
    %v298 = vld [vmem:[#allocation5 + $0x220] sm:$0xff]
    %v299 = vld [vmem:[#allocation5 + $0x228] sm:$0xff]
    %v300 = vld [vmem:[#allocation5 + $0x230] sm:$0xff]
    %v301 = vld [vmem:[#allocation5 + $0x238] sm:$0xff]
    %v302 = vld [vmem:[#allocation5 + $0x240] sm:$0xff]
    %v303 = vld [vmem:[#allocation5 + $0x248] sm:$0xff]
    %v304 = vld [vmem:[#allocation5 + $0x250] sm:$0xff]
    %v305 = vld [vmem:[#allocation5 + $0x258] sm:$0xff]
    %v306 = vld [vmem:[#allocation5 + $0x260] sm:$0xff]
    %v307 = vld [vmem:[#allocation5 + $0x268] sm:$0xff]
    %v308 = vld [vmem:[#allocation5 + $0x270] sm:$0xff]
    %v309 = vld [vmem:[#allocation5 + $0x278] sm:$0xff]
    %v310 = vld [vmem:[#allocation5 + $0x280] sm:$0xff]
    %v311 = vld [vmem:[#allocation5 + $0x288] sm:$0xff]
    %v312 = vld [vmem:[#allocation5 + $0x290] sm:$0xff]
    %v313 = vld [vmem:[#allocation5 + $0x298] sm:$0xff]
    %v314 = vld [vmem:[#allocation5 + $0x2a0] sm:$0xff]
    %v315 = vld [vmem:[#allocation5 + $0x2a8] sm:$0xff]
    %v316 = vld [vmem:[#allocation5 + $0x2b0] sm:$0xff]
    %v317 = vld [vmem:[#allocation5 + $0x2b8] sm:$0xff]
    %v318 = vld [vmem:[#allocation5 + $0x2c0] sm:$0xff]
    %v319 = vld [vmem:[#allocation5 + $0x2c8] sm:$0xff]
    %v320 = vld [vmem:[#allocation5 + $0x2d0] sm:$0xff]
    %v321 = vld [vmem:[#allocation5 + $0x2d8] sm:$0xff]
    %v322 = vld [vmem:[#allocation5 + $0x2e0] sm:$0xff]
    %v323 = vld [vmem:[#allocation5 + $0x2e8] sm:$0xff]
    %v324 = vld [vmem:[#allocation5 + $0x2f0] sm:$0xff]
    %v325 = vld [vmem:[#allocation5 + $0x2f8] sm:$0xff]
    %v326 = vld [vmem:[#allocation5 + $0x300] sm:$0xff]
    %v327 = vld [vmem:[#allocation5 + $0x308] sm:$0xff]
    %v328 = vld [vmem:[#allocation5 + $0x310] sm:$0xff]
    %v329 = vld [vmem:[#allocation5 + $0x318] sm:$0xff]
    %v330 = vld [vmem:[#allocation5 + $0x320] sm:$0xff]
    %v331 = vld [vmem:[#allocation5 + $0x328] sm:$0xff]
    %v332 = vld [vmem:[#allocation5 + $0x330] sm:$0xff]
    %v333 = vld [vmem:[#allocation5 + $0x338] sm:$0xff]
    %v334 = vld [vmem:[#allocation5 + $0x340] sm:$0xff]
    %v335 = vld [vmem:[#allocation5 + $0x348] sm:$0xff]
    %v336 = vld [vmem:[#allocation5 + $0x350] sm:$0xff]
    %v337 = vld [vmem:[#allocation5 + $0x358] sm:$0xff]
    %v338 = vld [vmem:[#allocation7] sm:$0xff]
    %v339 = vld [vmem:[#allocation7 + $0x8] sm:$0xff]
    %v340 = vld [vmem:[#allocation7 + $0x10] sm:$0x3]
    %v344 = vlaneseq
    %v345 = vshrl.u32 %v344, 7
    %v346 = vsub.s32 0, %v345
    %v347 = vrot.slane %v338, %v346
    %v348 = vlaneseq
    %v349 = vshrl.u32 %v348, 7
    %v350 = vsub.s32 1, %v349
    %v351 = vrot.slane %v338, %v350
    %v352 = vlaneseq
    %v353 = vshrl.u32 %v352, 7
    %v354 = vsub.s32 2, %v353
    %v355 = vrot.slane %v338, %v354
    %v356 = vlaneseq
    %v357 = vshrl.u32 %v356, 7
    %v358 = vsub.s32 3, %v357
    %v359 = vrot.slane %v338, %v358
    %v360 = vlaneseq
    %v361 = vshrl.u32 %v360, 7
    %v362 = vsub.s32 4, %v361
    %v363 = vrot.slane %v338, %v362
    %v364 = vlaneseq
    %v365 = vshrl.u32 %v364, 7
    %v366 = vsub.s32 5, %v365
    %v367 = vrot.slane %v338, %v366
    %v368 = vlaneseq
    %v369 = vshrl.u32 %v368, 7
    %v370 = vsub.s32 6, %v369
    %v371 = vrot.slane %v338, %v370
    %v372 = vlaneseq
    %v373 = vshrl.u32 %v372, 7
    %v374 = vsub.s32 7, %v373
    %v375 = vrot.slane %v338, %v374
    %v376 = vlaneseq
    %v377 = vshrl.u32 %v376, 7
    %v378 = vsub.s32 0, %v377
    %v379 = vrot.slane %v339, %v378
    %v380 = vlaneseq
    %v381 = vshrl.u32 %v380, 7
    %v382 = vsub.s32 1, %v381
    %v383 = vrot.slane %v339, %v382
    %v384 = vlaneseq
    %v385 = vshrl.u32 %v384, 7
    %v386 = vsub.s32 2, %v385
    %v387 = vrot.slane %v339, %v386
    %v388 = vlaneseq
    %v389 = vshrl.u32 %v388, 7
    %v390 = vsub.s32 3, %v389
    %v391 = vrot.slane %v339, %v390
    %v392 = vlaneseq
    %v393 = vshrl.u32 %v392, 7
    %v394 = vsub.s32 4, %v393
    %v395 = vrot.slane %v339, %v394
    %v396 = vlaneseq
    %v397 = vshrl.u32 %v396, 7
    %v398 = vsub.s32 5, %v397
    %v399 = vrot.slane %v339, %v398
    %v400 = vlaneseq
    %v401 = vshrl.u32 %v400, 7
    %v402 = vsub.s32 6, %v401
    %v403 = vrot.slane %v339, %v402
    %v404 = vlaneseq
    %v405 = vshrl.u32 %v404, 7
    %v406 = vsub.s32 7, %v405
    %v407 = vrot.slane %v339, %v406
    %v408 = vlaneseq
    %v409 = vshrl.u32 %v408, 7
    %v410 = vsub.s32 0, %v409
    %v411 = vrot.slane %v340, %v410
    %v412 = vlaneseq
    %v413 = vshrl.u32 %v412, 7
    %v414 = vsub.s32 1, %v413
    %v415 = vrot.slane %v340, %v414
    %v542 = vunpack.c.l.b16 %v230
    %v543 = vunpack.c.h.b16 %v230
    %v544 = vunpack.c.l.b16 %v231
    %v545 = vunpack.c.h.b16 %v231
    %v546 = vunpack.c.l.b16 %v232
    %v547 = vunpack.c.h.b16 %v232
    %v548 = vunpack.c.l.b16 %v233
    %v549 = vunpack.c.h.b16 %v233
    %v550 = vunpack.c.l.b16 %v234
    %v551 = vunpack.c.h.b16 %v234
    %v552 = vunpack.c.l.b16 %v235
    %v553 = vunpack.c.h.b16 %v235
    %v554 = vunpack.c.l.b16 %v236
    %v555 = vunpack.c.h.b16 %v236
    %v556 = vunpack.c.l.b16 %v237
    %v557 = vunpack.c.h.b16 %v237
    %v558 = vunpack.c.l.b16 %v238
    %v559 = vunpack.c.h.b16 %v238
    %v560 = vunpack.c.l.b16 %v239
    %v561 = vunpack.c.h.b16 %v239
    %v562 = vunpack.c.l.b16 %v240
    %v563 = vunpack.c.h.b16 %v240
    %v564 = vunpack.c.l.b16 %v241
    %v565 = vunpack.c.h.b16 %v241
    %v566 = vunpack.c.l.b16 %v242
    %v567 = vunpack.c.h.b16 %v242
    %v568 = vunpack.c.l.b16 %v243
    %v569 = vunpack.c.h.b16 %v243
    %v570 = vunpack.c.l.b16 %v244
    %v571 = vunpack.c.h.b16 %v244
    %v572 = vunpack.c.l.b16 %v245
    %v573 = vunpack.c.h.b16 %v245
    %v574 = vunpack.c.l.b16 %v246
    %v575 = vunpack.c.h.b16 %v246
    %v576 = vunpack.c.l.b16 %v247
    %v577 = vunpack.c.h.b16 %v247
    %v578 = vunpack.c.l.b16 %v248
    %v579 = vunpack.c.h.b16 %v248
    %v580 = vunpack.c.l.b16 %v249
    %v581 = vunpack.c.h.b16 %v249
    %v582 = vunpack.c.l.b16 %v250
    %v583 = vunpack.c.h.b16 %v250
    %v584 = vunpack.c.l.b16 %v251
    %v585 = vunpack.c.h.b16 %v251
    %v586 = vunpack.c.l.b16 %v252
    %v587 = vunpack.c.h.b16 %v252
    %v588 = vunpack.c.l.b16 %v253
    %v589 = vunpack.c.h.b16 %v253
    %v590 = vunpack.c.l.b16 %v254
    %v591 = vunpack.c.h.b16 %v254
    %v592 = vunpack.c.l.b16 %v255
    %v593 = vunpack.c.h.b16 %v255
    %v594 = vunpack.c.l.b16 %v256
    %v595 = vunpack.c.h.b16 %v256
    %v596 = vunpack.c.l.b16 %v257
    %v597 = vunpack.c.h.b16 %v257
    %v598 = vunpack.c.l.b16 %v258
    %v599 = vunpack.c.h.b16 %v258
    %v600 = vunpack.c.l.b16 %v259
    %v601 = vunpack.c.h.b16 %v259
    %v602 = vunpack.c.l.b16 %v260
    %v603 = vunpack.c.h.b16 %v260
    %v604 = vunpack.c.l.b16 %v261
    %v605 = vunpack.c.h.b16 %v261
    %v606 = vunpack.c.l.b16 %v262
    %v607 = vunpack.c.h.b16 %v262
    %v608 = vunpack.c.l.b16 %v263
    %v609 = vunpack.c.h.b16 %v263
    %v610 = vunpack.c.l.b16 %v264
    %v611 = vunpack.c.h.b16 %v264
    %v612 = vunpack.c.l.b16 %v265
    %v613 = vunpack.c.h.b16 %v265
    %v614 = vunpack.c.l.b16 %v266
    %v615 = vunpack.c.h.b16 %v266
    %v616 = vunpack.c.l.b16 %v267
    %v617 = vunpack.c.h.b16 %v267
    %v618 = vunpack.c.l.b16 %v268
    %v619 = vunpack.c.h.b16 %v268
    %v620 = vunpack.c.l.b16 %v269
    %v621 = vunpack.c.h.b16 %v269
    %v622 = vunpack.c.l.b16 %v270
    %v623 = vunpack.c.h.b16 %v270
    %v624 = vunpack.c.l.b16 %v271
    %v625 = vunpack.c.h.b16 %v271
    %v626 = vunpack.c.l.b16 %v272
    %v627 = vunpack.c.h.b16 %v272
    %v628 = vunpack.c.l.b16 %v273
    %v629 = vunpack.c.h.b16 %v273
    %v630 = vunpack.c.l.b16 %v274
    %v631 = vunpack.c.h.b16 %v274
    %v632 = vunpack.c.l.b16 %v275
    %v633 = vunpack.c.h.b16 %v275
    %v634 = vunpack.c.l.b16 %v276
    %v635 = vunpack.c.h.b16 %v276
    %v636 = vunpack.c.l.b16 %v277
    %v637 = vunpack.c.h.b16 %v277
    %v638 = vunpack.c.l.b16 %v278
    %v639 = vunpack.c.h.b16 %v278
    %v640 = vunpack.c.l.b16 %v279
    %v641 = vunpack.c.h.b16 %v279
    %v642 = vunpack.c.l.b16 %v280
    %v643 = vunpack.c.h.b16 %v280
    %v644 = vunpack.c.l.b16 %v281
    %v645 = vunpack.c.h.b16 %v281
    %v646 = vunpack.c.l.b16 %v282
    %v647 = vunpack.c.h.b16 %v282
    %v648 = vunpack.c.l.b16 %v283
    %v649 = vunpack.c.h.b16 %v283
    %v650 = vunpack.c.l.b16 %v284
    %v651 = vunpack.c.h.b16 %v284
    %v652 = vunpack.c.l.b16 %v285
    %v653 = vunpack.c.h.b16 %v285
    %v654 = vunpack.c.l.b16 %v286
    %v655 = vunpack.c.h.b16 %v286
    %v656 = vunpack.c.l.b16 %v287
    %v657 = vunpack.c.h.b16 %v287
    %v658 = vunpack.c.l.b16 %v288
    %v659 = vunpack.c.h.b16 %v288
    %v660 = vunpack.c.l.b16 %v289
    %v661 = vunpack.c.h.b16 %v289
    %v662 = vunpack.c.l.b16 %v290
    %v663 = vunpack.c.h.b16 %v290
    %v664 = vunpack.c.l.b16 %v291
    %v665 = vunpack.c.h.b16 %v291
    %v666 = vunpack.c.l.b16 %v292
    %v667 = vunpack.c.h.b16 %v292
    %v668 = vunpack.c.l.b16 %v293
    %v669 = vunpack.c.h.b16 %v293
    %v670 = vunpack.c.l.b16 %v294
    %v671 = vunpack.c.h.b16 %v294
    %v672 = vunpack.c.l.b16 %v295
    %v673 = vunpack.c.h.b16 %v295
    %v674 = vunpack.c.l.b16 %v296
    %v675 = vunpack.c.h.b16 %v296
    %v676 = vunpack.c.l.b16 %v297
    %v677 = vunpack.c.h.b16 %v297
    %v678 = vunpack.c.l.b16 %v298
    %v679 = vunpack.c.h.b16 %v298
    %v680 = vunpack.c.l.b16 %v299
    %v681 = vunpack.c.h.b16 %v299
    %v682 = vunpack.c.l.b16 %v300
    %v683 = vunpack.c.h.b16 %v300
    %v684 = vunpack.c.l.b16 %v301
    %v685 = vunpack.c.h.b16 %v301
    %v686 = vunpack.c.l.b16 %v302
    %v687 = vunpack.c.h.b16 %v302
    %v688 = vunpack.c.l.b16 %v303
    %v689 = vunpack.c.h.b16 %v303
    %v690 = vunpack.c.l.b16 %v304
    %v691 = vunpack.c.h.b16 %v304
    %v692 = vunpack.c.l.b16 %v305
    %v693 = vunpack.c.h.b16 %v305
    %v694 = vunpack.c.l.b16 %v306
    %v695 = vunpack.c.h.b16 %v306
    %v696 = vunpack.c.l.b16 %v307
    %v697 = vunpack.c.h.b16 %v307
    %v698 = vunpack.c.l.b16 %v308
    %v699 = vunpack.c.h.b16 %v308
    %v700 = vunpack.c.l.b16 %v309
    %v701 = vunpack.c.h.b16 %v309
    %v702 = vunpack.c.l.b16 %v310
    %v703 = vunpack.c.h.b16 %v310
    %v704 = vunpack.c.l.b16 %v311
    %v705 = vunpack.c.h.b16 %v311
    %v706 = vunpack.c.l.b16 %v312
    %v707 = vunpack.c.h.b16 %v312
    %v708 = vunpack.c.l.b16 %v313
    %v709 = vunpack.c.h.b16 %v313
    %v710 = vunpack.c.l.b16 %v314
    %v711 = vunpack.c.h.b16 %v314
    %v712 = vunpack.c.l.b16 %v315
    %v713 = vunpack.c.h.b16 %v315
    %v714 = vunpack.c.l.b16 %v316
    %v715 = vunpack.c.h.b16 %v316
    %v716 = vunpack.c.l.b16 %v317
    %v717 = vunpack.c.h.b16 %v317
    %v718 = vunpack.c.l.b16 %v318
    %v719 = vunpack.c.h.b16 %v318
    %v720 = vunpack.c.l.b16 %v319
    %v721 = vunpack.c.h.b16 %v319
    %v722 = vunpack.c.l.b16 %v320
    %v723 = vunpack.c.h.b16 %v320
    %v724 = vunpack.c.l.b16 %v321
    %v725 = vunpack.c.h.b16 %v321
    %v726 = vunpack.c.l.b16 %v322
    %v727 = vunpack.c.h.b16 %v322
    %v728 = vunpack.c.l.b16 %v323
    %v729 = vunpack.c.h.b16 %v323
    %v730 = vunpack.c.l.b16 %v324
    %v731 = vunpack.c.h.b16 %v324
    %v732 = vunpack.c.l.b16 %v325
    %v733 = vunpack.c.h.b16 %v325
    %v734 = vunpack.c.l.b16 %v326
    %v735 = vunpack.c.h.b16 %v326
    %v736 = vunpack.c.l.b16 %v327
    %v737 = vunpack.c.h.b16 %v327
    %v738 = vunpack.c.l.b16 %v328
    %v739 = vunpack.c.h.b16 %v328
    %v740 = vunpack.c.l.b16 %v329
    %v741 = vunpack.c.h.b16 %v329
    %v742 = vunpack.c.l.b16 %v330
    %v743 = vunpack.c.h.b16 %v330
    %v744 = vunpack.c.l.b16 %v331
    %v745 = vunpack.c.h.b16 %v331
    %v746 = vunpack.c.l.b16 %v332
    %v747 = vunpack.c.h.b16 %v332
    %v748 = vunpack.c.l.b16 %v333
    %v749 = vunpack.c.h.b16 %v333
    %v750 = vunpack.c.l.b16 %v334
    %v751 = vunpack.c.h.b16 %v334
    %v752 = vunpack.c.l.b16 %v335
    %v753 = vunpack.c.h.b16 %v335
    %v754 = vunpack.c.l.b16 %v336
    %v755 = vunpack.c.h.b16 %v336
    %v756 = vunpack.c.l.b16 %v337
    %v757 = vunpack.c.h.b16 %v337
    %v758 = vpack.c.b16 %v560, %v542
    %v759 = vpack.c.b16 %v561, %v543
    %v760 = vpack.c.b16 %v562, %v544
    %v761 = vpack.c.b16 %v563, %v545
    %v762 = vpack.c.b16 %v564, %v546
    %v763 = vpack.c.b16 %v565, %v547
    %v764 = vpack.c.b16 %v566, %v548
    %v765 = vpack.c.b16 %v567, %v549
    %v766 = vpack.c.b16 %v568, %v550
    %v767 = vpack.c.b16 %v569, %v551
    %v768 = vpack.c.b16 %v570, %v552
    %v769 = vpack.c.b16 %v571, %v553
    %v770 = vpack.c.b16 %v572, %v554
    %v771 = vpack.c.b16 %v573, %v555
    %v772 = vpack.c.b16 %v574, %v556
    %v773 = vpack.c.b16 %v575, %v557
    %v774 = vpack.c.b16 %v576, %v558
    %v775 = vpack.c.b16 %v577, %v559
    %v776 = vpack.c.b16 %v596, %v578
    %v777 = vpack.c.b16 %v597, %v579
    %v778 = vpack.c.b16 %v598, %v580
    %v779 = vpack.c.b16 %v599, %v581
    %v780 = vpack.c.b16 %v600, %v582
    %v781 = vpack.c.b16 %v601, %v583
    %v782 = vpack.c.b16 %v602, %v584
    %v783 = vpack.c.b16 %v603, %v585
    %v784 = vpack.c.b16 %v604, %v586
    %v785 = vpack.c.b16 %v605, %v587
    %v786 = vpack.c.b16 %v606, %v588
    %v787 = vpack.c.b16 %v607, %v589
    %v788 = vpack.c.b16 %v608, %v590
    %v789 = vpack.c.b16 %v609, %v591
    %v790 = vpack.c.b16 %v610, %v592
    %v791 = vpack.c.b16 %v611, %v593
    %v792 = vpack.c.b16 %v612, %v594
    %v793 = vpack.c.b16 %v613, %v595
    %v794 = vpack.c.b16 %v632, %v614
    %v795 = vpack.c.b16 %v633, %v615
    %v796 = vpack.c.b16 %v634, %v616
    %v797 = vpack.c.b16 %v635, %v617
    %v798 = vpack.c.b16 %v636, %v618
    %v799 = vpack.c.b16 %v637, %v619
    %v800 = vpack.c.b16 %v638, %v620
    %v801 = vpack.c.b16 %v639, %v621
    %v802 = vpack.c.b16 %v640, %v622
    %v803 = vpack.c.b16 %v641, %v623
    %v804 = vpack.c.b16 %v642, %v624
    %v805 = vpack.c.b16 %v643, %v625
    %v806 = vpack.c.b16 %v644, %v626
    %v807 = vpack.c.b16 %v645, %v627
    %v808 = vpack.c.b16 %v646, %v628
    %v809 = vpack.c.b16 %v647, %v629
    %v810 = vpack.c.b16 %v648, %v630
    %v811 = vpack.c.b16 %v649, %v631
    %v812 = vpack.c.b16 %v668, %v650
    %v813 = vpack.c.b16 %v669, %v651
    %v814 = vpack.c.b16 %v670, %v652
    %v815 = vpack.c.b16 %v671, %v653
    %v816 = vpack.c.b16 %v672, %v654
    %v817 = vpack.c.b16 %v673, %v655
    %v818 = vpack.c.b16 %v674, %v656
    %v819 = vpack.c.b16 %v675, %v657
    %v820 = vpack.c.b16 %v676, %v658
    %v821 = vpack.c.b16 %v677, %v659
    %v822 = vpack.c.b16 %v678, %v660
    %v823 = vpack.c.b16 %v679, %v661
    %v824 = vpack.c.b16 %v680, %v662
    %v825 = vpack.c.b16 %v681, %v663
    %v826 = vpack.c.b16 %v682, %v664
    %v827 = vpack.c.b16 %v683, %v665
    %v828 = vpack.c.b16 %v684, %v666
    %v829 = vpack.c.b16 %v685, %v667
    %v830 = vpack.c.b16 %v704, %v686
    %v831 = vpack.c.b16 %v705, %v687
    %v832 = vpack.c.b16 %v706, %v688
    %v833 = vpack.c.b16 %v707, %v689
    %v834 = vpack.c.b16 %v708, %v690
    %v835 = vpack.c.b16 %v709, %v691
    %v836 = vpack.c.b16 %v710, %v692
    %v837 = vpack.c.b16 %v711, %v693
    %v838 = vpack.c.b16 %v712, %v694
    %v839 = vpack.c.b16 %v713, %v695
    %v840 = vpack.c.b16 %v714, %v696
    %v841 = vpack.c.b16 %v715, %v697
    %v842 = vpack.c.b16 %v716, %v698
    %v843 = vpack.c.b16 %v717, %v699
    %v844 = vpack.c.b16 %v718, %v700
    %v845 = vpack.c.b16 %v719, %v701
    %v846 = vpack.c.b16 %v720, %v702
    %v847 = vpack.c.b16 %v721, %v703
    %v848 = vpack.c.b16 %v740, %v722
    %v849 = vpack.c.b16 %v741, %v723
    %v850 = vpack.c.b16 %v742, %v724
    %v851 = vpack.c.b16 %v743, %v725
    %v852 = vpack.c.b16 %v744, %v726
    %v853 = vpack.c.b16 %v745, %v727
    %v854 = vpack.c.b16 %v746, %v728
    %v855 = vpack.c.b16 %v747, %v729
    %v856 = vpack.c.b16 %v748, %v730
    %v857 = vpack.c.b16 %v749, %v731
    %v858 = vpack.c.b16 %v750, %v732
    %v859 = vpack.c.b16 %v751, %v733
    %v860 = vpack.c.b16 %v752, %v734
    %v861 = vpack.c.b16 %v753, %v735
    %v862 = vpack.c.b16 %v754, %v736
    %v863 = vpack.c.b16 %v755, %v737
    %v864 = vpack.c.b16 %v756, %v738
    %v865 = vpack.c.b16 %v757, %v739
    %vm974 = vcmask 785408
    %v976 = vsel %vm974, %v229, 0
    %978 = vmatprep.subr.bf16.mxu0 %v759
    %979 = vmatpush1.bf16.msra.mxu0 %v758
    %980 = vmatprep.subr.bf16.mxu0 %v777
    %981 = vmatpush1.bf16.msra.mxu0 %v776
    %982 = vmatprep.subr.bf16.mxu0 %v795
    %983 = vmatpush1.bf16.msra.mxu0 %v794
    %984 = vmatprep.subr.bf16.mxu0 %v813
    %985 = vmatpush1.bf16.msra.mxu0 %v812
    %986 = vmatprep.subr.bf16.mxu0 %v831
    %987 = vmatpush1.bf16.msra.mxu0 %v830
    %988 = vmatprep.subr.bf16.mxu0 %v849
    %989 = vmatpush1.bf16.msra.mxu0 %v848
    %990 = vmatprep.subr.bf16.mxu0 0
    %991 = vmatpush1.bf16.msra.mxu0 0
    %992 = vmatprep.subr.bf16.mxu0 0
    %993 = vmatpush1.bf16.msra.mxu0 0
    %994 = vmatprep.subr.bf16.mxu0 0
    %995 = vmatpush1.bf16.msra.mxu0 0
    %996 = vmatprep.subr.bf16.mxu0 0
    %997 = vmatpush1.bf16.msra.mxu0 0
    %998 = vmatprep.subr.bf16.mxu0 0
    %999 = vmatpush1.bf16.msra.mxu0 0
    %1000 = vmatprep.subr.bf16.mxu0 0
    %1001 = vmatpush1.bf16.msra.mxu0 0
    %1002 = vmatprep.subr.bf16.mxu0 0
    %1003 = vmatpush1.bf16.msra.mxu0 0
    %1004 = vmatprep.subr.bf16.mxu0 0
    %1005 = vmatpush1.bf16.msra.mxu0 0
    %1006 = vmatprep.subr.bf16.mxu0 0
    %1007 = vmatpush1.bf16.msra.mxu0 0
    %1008 = vmatprep.subr.bf16.mxu0 0
    %1009 = vmatpush1.bf16.msra.mxu0 0
    %1010 = vmatprep.mubr.bf16.mxu0 0
    %1011 = vmatmul.mubr.bf16.gmra.mrb[0].mxu0 %v976
    %v1012 = vpop.f32.mrb[0].mxu0
    %v1013 = vadd.f32 %v347, %v1012
    %v1014 = vpop.f32.mrb[0].mxu0
    %v1015 = vadd.f32 %v351, %v1014
    %v1016 = vpop.f32.mrb[0].mxu0
    %v1017 = vpop.f32.mrb[0].mxu0
    %1018 = vdwg.mxu0
    %1019 = vmatprep.subr.bf16.mxu0 %v761
    %1020 = vmatpush1.bf16.msra.mxu0 %v760
    %1021 = vmatprep.subr.bf16.mxu0 %v779
    %1022 = vmatpush1.bf16.msra.mxu0 %v778
    %1023 = vmatprep.subr.bf16.mxu0 %v797
    %1024 = vmatpush1.bf16.msra.mxu0 %v796
    %1025 = vmatprep.subr.bf16.mxu0 %v815
    %1026 = vmatpush1.bf16.msra.mxu0 %v814
    %1027 = vmatprep.subr.bf16.mxu0 %v833
    %1028 = vmatpush1.bf16.msra.mxu0 %v832
    %1029 = vmatprep.subr.bf16.mxu0 %v851
    %1030 = vmatpush1.bf16.msra.mxu0 %v850
    %1031 = vmatprep.subr.bf16.mxu0 0
    %1032 = vmatpush1.bf16.msra.mxu0 0
    %1033 = vmatprep.subr.bf16.mxu0 0
    %1034 = vmatpush1.bf16.msra.mxu0 0
    %1035 = vmatprep.subr.bf16.mxu0 0
    %1036 = vmatpush1.bf16.msra.mxu0 0
    %1037 = vmatprep.subr.bf16.mxu0 0
    %1038 = vmatpush1.bf16.msra.mxu0 0
    %1039 = vmatprep.subr.bf16.mxu0 0
    %1040 = vmatpush1.bf16.msra.mxu0 0
    %1041 = vmatprep.subr.bf16.mxu0 0
    %1042 = vmatpush1.bf16.msra.mxu0 0
    %1043 = vmatprep.subr.bf16.mxu0 0
    %1044 = vmatpush1.bf16.msra.mxu0 0
    %1045 = vmatprep.subr.bf16.mxu0 0
    %1046 = vmatpush1.bf16.msra.mxu0 0
    %1047 = vmatprep.subr.bf16.mxu0 0
    %1048 = vmatpush1.bf16.msra.mxu0 0
    %1049 = vmatprep.subr.bf16.mxu0 0
    %1050 = vmatpush1.bf16.msra.mxu0 0
    %1051 = vmatprep.mubr.bf16.mxu0 0
    %1052 = vmatmul.mubr.bf16.gmra.mrb[0].mxu0 %v976
    %v1053 = vpop.f32.mrb[0].mxu0
    %v1054 = vadd.f32 %v355, %v1053
    %v1055 = vpop.f32.mrb[0].mxu0
    %v1056 = vadd.f32 %v359, %v1055
    %v1057 = vpop.f32.mrb[0].mxu0
    %v1058 = vpop.f32.mrb[0].mxu0
    %1059 = vdwg.mxu0
    %1060 = vmatprep.subr.bf16.mxu0 %v763
    %1061 = vmatpush1.bf16.msra.mxu0 %v762
    %1062 = vmatprep.subr.bf16.mxu0 %v781
    %1063 = vmatpush1.bf16.msra.mxu0 %v780
    %1064 = vmatprep.subr.bf16.mxu0 %v799
    %1065 = vmatpush1.bf16.msra.mxu0 %v798
    %1066 = vmatprep.subr.bf16.mxu0 %v817
    %1067 = vmatpush1.bf16.msra.mxu0 %v816
    %1068 = vmatprep.subr.bf16.mxu0 %v835
    %1069 = vmatpush1.bf16.msra.mxu0 %v834
    %1070 = vmatprep.subr.bf16.mxu0 %v853
    %1071 = vmatpush1.bf16.msra.mxu0 %v852
    %1072 = vmatprep.subr.bf16.mxu0 0
    %1073 = vmatpush1.bf16.msra.mxu0 0
    %1074 = vmatprep.subr.bf16.mxu0 0
    %1075 = vmatpush1.bf16.msra.mxu0 0
    %1076 = vmatprep.subr.bf16.mxu0 0
    %1077 = vmatpush1.bf16.msra.mxu0 0
    %1078 = vmatprep.subr.bf16.mxu0 0
    %1079 = vmatpush1.bf16.msra.mxu0 0
    %1080 = vmatprep.subr.bf16.mxu0 0
    %1081 = vmatpush1.bf16.msra.mxu0 0
    %1082 = vmatprep.subr.bf16.mxu0 0
    %1083 = vmatpush1.bf16.msra.mxu0 0
    %1084 = vmatprep.subr.bf16.mxu0 0
    %1085 = vmatpush1.bf16.msra.mxu0 0
    %1086 = vmatprep.subr.bf16.mxu0 0
    %1087 = vmatpush1.bf16.msra.mxu0 0
    %1088 = vmatprep.subr.bf16.mxu0 0
    %1089 = vmatpush1.bf16.msra.mxu0 0
    %1090 = vmatprep.subr.bf16.mxu0 0
    %1091 = vmatpush1.bf16.msra.mxu0 0
    %1092 = vmatprep.mubr.bf16.mxu0 0
    %1093 = vmatmul.mubr.bf16.gmra.mrb[0].mxu0 %v976
    %v1094 = vpop.f32.mrb[0].mxu0
    %v1095 = vadd.f32 %v363, %v1094
    %v1096 = vpop.f32.mrb[0].mxu0
    %v1097 = vadd.f32 %v367, %v1096
    %v1098 = vpop.f32.mrb[0].mxu0
    %v1099 = vpop.f32.mrb[0].mxu0
    %1100 = vdwg.mxu0
    %1101 = vmatprep.subr.bf16.mxu0 %v765
    %1102 = vmatpush1.bf16.msra.mxu0 %v764
    %1103 = vmatprep.subr.bf16.mxu0 %v783
    %1104 = vmatpush1.bf16.msra.mxu0 %v782
    %1105 = vmatprep.subr.bf16.mxu0 %v801
    %1106 = vmatpush1.bf16.msra.mxu0 %v800
    %1107 = vmatprep.subr.bf16.mxu0 %v819
    %1108 = vmatpush1.bf16.msra.mxu0 %v818
    %1109 = vmatprep.subr.bf16.mxu0 %v837
    %1110 = vmatpush1.bf16.msra.mxu0 %v836
    %1111 = vmatprep.subr.bf16.mxu0 %v855
    %1112 = vmatpush1.bf16.msra.mxu0 %v854
    %1113 = vmatprep.subr.bf16.mxu0 0
    %1114 = vmatpush1.bf16.msra.mxu0 0
    %1115 = vmatprep.subr.bf16.mxu0 0
    %1116 = vmatpush1.bf16.msra.mxu0 0
    %1117 = vmatprep.subr.bf16.mxu0 0
    %1118 = vmatpush1.bf16.msra.mxu0 0
    %1119 = vmatprep.subr.bf16.mxu0 0
    %1120 = vmatpush1.bf16.msra.mxu0 0
    %1121 = vmatprep.subr.bf16.mxu0 0
    %1122 = vmatpush1.bf16.msra.mxu0 0
    %1123 = vmatprep.subr.bf16.mxu0 0
    %1124 = vmatpush1.bf16.msra.mxu0 0
    %1125 = vmatprep.subr.bf16.mxu0 0
    %1126 = vmatpush1.bf16.msra.mxu0 0
    %1127 = vmatprep.subr.bf16.mxu0 0
    %1128 = vmatpush1.bf16.msra.mxu0 0
    %1129 = vmatprep.subr.bf16.mxu0 0
    %1130 = vmatpush1.bf16.msra.mxu0 0
    %1131 = vmatprep.subr.bf16.mxu0 0
    %1132 = vmatpush1.bf16.msra.mxu0 0
    %1133 = vmatprep.mubr.bf16.mxu0 0
    %1134 = vmatmul.mubr.bf16.gmra.mrb[0].mxu0 %v976
    %v1135 = vpop.f32.mrb[0].mxu0
    %v1136 = vadd.f32 %v371, %v1135
    %v1137 = vpop.f32.mrb[0].mxu0
    %v1138 = vadd.f32 %v375, %v1137
    %v1139 = vpop.f32.mrb[0].mxu0
    %v1140 = vpop.f32.mrb[0].mxu0
    %1141 = vdwg.mxu0
    %1142 = vmatprep.subr.bf16.mxu0 %v767
    %1143 = vmatpush1.bf16.msra.mxu0 %v766
    %1144 = vmatprep.subr.bf16.mxu0 %v785
    %1145 = vmatpush1.bf16.msra.mxu0 %v784
    %1146 = vmatprep.subr.bf16.mxu0 %v803
    %1147 = vmatpush1.bf16.msra.mxu0 %v802
    %1148 = vmatprep.subr.bf16.mxu0 %v821
    %1149 = vmatpush1.bf16.msra.mxu0 %v820
    %1150 = vmatprep.subr.bf16.mxu0 %v839
    %1151 = vmatpush1.bf16.msra.mxu0 %v838
    %1152 = vmatprep.subr.bf16.mxu0 %v857
    %1153 = vmatpush1.bf16.msra.mxu0 %v856
    %1154 = vmatprep.subr.bf16.mxu0 0
    %1155 = vmatpush1.bf16.msra.mxu0 0
    %1156 = vmatprep.subr.bf16.mxu0 0
    %1157 = vmatpush1.bf16.msra.mxu0 0
    %1158 = vmatprep.subr.bf16.mxu0 0
    %1159 = vmatpush1.bf16.msra.mxu0 0
    %1160 = vmatprep.subr.bf16.mxu0 0
    %1161 = vmatpush1.bf16.msra.mxu0 0
    %1162 = vmatprep.subr.bf16.mxu0 0
    %1163 = vmatpush1.bf16.msra.mxu0 0
    %1164 = vmatprep.subr.bf16.mxu0 0
    %1165 = vmatpush1.bf16.msra.mxu0 0
    %1166 = vmatprep.subr.bf16.mxu0 0
    %1167 = vmatpush1.bf16.msra.mxu0 0
    %1168 = vmatprep.subr.bf16.mxu0 0
    %1169 = vmatpush1.bf16.msra.mxu0 0
    %1170 = vmatprep.subr.bf16.mxu0 0
    %1171 = vmatpush1.bf16.msra.mxu0 0
    %1172 = vmatprep.subr.bf16.mxu0 0
    %1173 = vmatpush1.bf16.msra.mxu0 0
    %1174 = vmatprep.mubr.bf16.mxu0 0
    %1175 = vmatmul.mubr.bf16.gmra.mrb[0].mxu0 %v976
    %v1176 = vpop.f32.mrb[0].mxu0
    %v1177 = vadd.f32 %v379, %v1176
    %v1178 = vpop.f32.mrb[0].mxu0
    %v1179 = vadd.f32 %v383, %v1178
    %v1180 = vpop.f32.mrb[0].mxu0
    %v1181 = vpop.f32.mrb[0].mxu0
    %1182 = vdwg.mxu0
    %1183 = vmatprep.subr.bf16.mxu0 %v769
    %1184 = vmatpush1.bf16.msra.mxu0 %v768
    %1185 = vmatprep.subr.bf16.mxu0 %v787
    %1186 = vmatpush1.bf16.msra.mxu0 %v786
    %1187 = vmatprep.subr.bf16.mxu0 %v805
    %1188 = vmatpush1.bf16.msra.mxu0 %v804
    %1189 = vmatprep.subr.bf16.mxu0 %v823
    %1190 = vmatpush1.bf16.msra.mxu0 %v822
    %1191 = vmatprep.subr.bf16.mxu0 %v841
    %1192 = vmatpush1.bf16.msra.mxu0 %v840
    %1193 = vmatprep.subr.bf16.mxu0 %v859
    %1194 = vmatpush1.bf16.msra.mxu0 %v858
    %1195 = vmatprep.subr.bf16.mxu0 0
    %1196 = vmatpush1.bf16.msra.mxu0 0
    %1197 = vmatprep.subr.bf16.mxu0 0
    %1198 = vmatpush1.bf16.msra.mxu0 0
    %1199 = vmatprep.subr.bf16.mxu0 0
    %1200 = vmatpush1.bf16.msra.mxu0 0
    %1201 = vmatprep.subr.bf16.mxu0 0
    %1202 = vmatpush1.bf16.msra.mxu0 0
    %1203 = vmatprep.subr.bf16.mxu0 0
    %1204 = vmatpush1.bf16.msra.mxu0 0
    %1205 = vmatprep.subr.bf16.mxu0 0
    %1206 = vmatpush1.bf16.msra.mxu0 0
    %1207 = vmatprep.subr.bf16.mxu0 0
    %1208 = vmatpush1.bf16.msra.mxu0 0
    %1209 = vmatprep.subr.bf16.mxu0 0
    %1210 = vmatpush1.bf16.msra.mxu0 0
    %1211 = vmatprep.subr.bf16.mxu0 0
    %1212 = vmatpush1.bf16.msra.mxu0 0
    %1213 = vmatprep.subr.bf16.mxu0 0
    %1214 = vmatpush1.bf16.msra.mxu0 0
    %1215 = vmatprep.mubr.bf16.mxu0 0
    %1216 = vmatmul.mubr.bf16.gmra.mrb[0].mxu0 %v976
    %v1217 = vpop.f32.mrb[0].mxu0
    %v1218 = vadd.f32 %v387, %v1217
    %v1219 = vpop.f32.mrb[0].mxu0
    %v1220 = vadd.f32 %v391, %v1219
    %v1221 = vpop.f32.mrb[0].mxu0
    %v1222 = vpop.f32.mrb[0].mxu0
    %1223 = vdwg.mxu0
    %1224 = vmatprep.subr.bf16.mxu0 %v771
    %1225 = vmatpush1.bf16.msra.mxu0 %v770
    %1226 = vmatprep.subr.bf16.mxu0 %v789
    %1227 = vmatpush1.bf16.msra.mxu0 %v788
    %1228 = vmatprep.subr.bf16.mxu0 %v807
    %1229 = vmatpush1.bf16.msra.mxu0 %v806
    %1230 = vmatprep.subr.bf16.mxu0 %v825
    %1231 = vmatpush1.bf16.msra.mxu0 %v824
    %1232 = vmatprep.subr.bf16.mxu0 %v843
    %1233 = vmatpush1.bf16.msra.mxu0 %v842
    %1234 = vmatprep.subr.bf16.mxu0 %v861
    %1235 = vmatpush1.bf16.msra.mxu0 %v860
    %1236 = vmatprep.subr.bf16.mxu0 0
    %1237 = vmatpush1.bf16.msra.mxu0 0
    %1238 = vmatprep.subr.bf16.mxu0 0
    %1239 = vmatpush1.bf16.msra.mxu0 0
    %1240 = vmatprep.subr.bf16.mxu0 0
    %1241 = vmatpush1.bf16.msra.mxu0 0
    %1242 = vmatprep.subr.bf16.mxu0 0
    %1243 = vmatpush1.bf16.msra.mxu0 0
    %1244 = vmatprep.subr.bf16.mxu0 0
    %1245 = vmatpush1.bf16.msra.mxu0 0
    %1246 = vmatprep.subr.bf16.mxu0 0
    %1247 = vmatpush1.bf16.msra.mxu0 0
    %1248 = vmatprep.subr.bf16.mxu0 0
    %1249 = vmatpush1.bf16.msra.mxu0 0
    %1250 = vmatprep.subr.bf16.mxu0 0
    %1251 = vmatpush1.bf16.msra.mxu0 0
    %1252 = vmatprep.subr.bf16.mxu0 0
    %1253 = vmatpush1.bf16.msra.mxu0 0
    %1254 = vmatprep.subr.bf16.mxu0 0
    %1255 = vmatpush1.bf16.msra.mxu0 0
    %1256 = vmatprep.mubr.bf16.mxu0 0
    %1257 = vmatmul.mubr.bf16.gmra.mrb[0].mxu0 %v976
    %v1258 = vpop.f32.mrb[0].mxu0
    %v1259 = vadd.f32 %v395, %v1258
    %v1260 = vpop.f32.mrb[0].mxu0
    %v1261 = vadd.f32 %v399, %v1260
    %v1262 = vpop.f32.mrb[0].mxu0
    %v1263 = vpop.f32.mrb[0].mxu0
    %1264 = vdwg.mxu0
    %1265 = vmatprep.subr.bf16.mxu0 %v773
    %1266 = vmatpush1.bf16.msra.mxu0 %v772
    %1267 = vmatprep.subr.bf16.mxu0 %v791
    %1268 = vmatpush1.bf16.msra.mxu0 %v790
    %1269 = vmatprep.subr.bf16.mxu0 %v809
    %1270 = vmatpush1.bf16.msra.mxu0 %v808
    %1271 = vmatprep.subr.bf16.mxu0 %v827
    %1272 = vmatpush1.bf16.msra.mxu0 %v826
    %1273 = vmatprep.subr.bf16.mxu0 %v845
    %1274 = vmatpush1.bf16.msra.mxu0 %v844
    %1275 = vmatprep.subr.bf16.mxu0 %v863
    %1276 = vmatpush1.bf16.msra.mxu0 %v862
    %1277 = vmatprep.subr.bf16.mxu0 0
    %1278 = vmatpush1.bf16.msra.mxu0 0
    %1279 = vmatprep.subr.bf16.mxu0 0
    %1280 = vmatpush1.bf16.msra.mxu0 0
    %1281 = vmatprep.subr.bf16.mxu0 0
    %1282 = vmatpush1.bf16.msra.mxu0 0
    %1283 = vmatprep.subr.bf16.mxu0 0
    %1284 = vmatpush1.bf16.msra.mxu0 0
    %1285 = vmatprep.subr.bf16.mxu0 0
    %1286 = vmatpush1.bf16.msra.mxu0 0
    %1287 = vmatprep.subr.bf16.mxu0 0
    %1288 = vmatpush1.bf16.msra.mxu0 0
    %1289 = vmatprep.subr.bf16.mxu0 0
    %1290 = vmatpush1.bf16.msra.mxu0 0
    %1291 = vmatprep.subr.bf16.mxu0 0
    %1292 = vmatpush1.bf16.msra.mxu0 0
    %1293 = vmatprep.subr.bf16.mxu0 0
    %1294 = vmatpush1.bf16.msra.mxu0 0
    %1295 = vmatprep.subr.bf16.mxu0 0
    %1296 = vmatpush1.bf16.msra.mxu0 0
    %1297 = vmatprep.mubr.bf16.mxu0 0
    %1298 = vmatmul.mubr.bf16.gmra.mrb[0].mxu0 %v976
    %v1299 = vpop.f32.mrb[0].mxu0
    %v1300 = vadd.f32 %v403, %v1299
    %v1301 = vpop.f32.mrb[0].mxu0
    %v1302 = vadd.f32 %v407, %v1301
    %v1303 = vpop.f32.mrb[0].mxu0
    %v1304 = vpop.f32.mrb[0].mxu0
    %1305 = vdwg.mxu0
    %1306 = vmatprep.subr.bf16.mxu0 %v775
    %1307 = vmatpush1.bf16.msra.mxu0 %v774
    %1308 = vmatprep.subr.bf16.mxu0 %v793
    %1309 = vmatpush1.bf16.msra.mxu0 %v792
    %1310 = vmatprep.subr.bf16.mxu0 %v811
    %1311 = vmatpush1.bf16.msra.mxu0 %v810
    %1312 = vmatprep.subr.bf16.mxu0 %v829
    %1313 = vmatpush1.bf16.msra.mxu0 %v828
    %1314 = vmatprep.subr.bf16.mxu0 %v847
    %1315 = vmatpush1.bf16.msra.mxu0 %v846
    %1316 = vmatprep.subr.bf16.mxu0 %v865
    %1317 = vmatpush1.bf16.msra.mxu0 %v864
    %1318 = vmatprep.subr.bf16.mxu0 0
    %1319 = vmatpush1.bf16.msra.mxu0 0
    %1320 = vmatprep.subr.bf16.mxu0 0
    %1321 = vmatpush1.bf16.msra.mxu0 0
    %1322 = vmatprep.subr.bf16.mxu0 0
    %1323 = vmatpush1.bf16.msra.mxu0 0
    %1324 = vmatprep.subr.bf16.mxu0 0
    %1325 = vmatpush1.bf16.msra.mxu0 0
    %1326 = vmatprep.subr.bf16.mxu0 0
    %1327 = vmatpush1.bf16.msra.mxu0 0
    %1328 = vmatprep.subr.bf16.mxu0 0
    %1329 = vmatpush1.bf16.msra.mxu0 0
    %1330 = vmatprep.subr.bf16.mxu0 0
    %1331 = vmatpush1.bf16.msra.mxu0 0
    %1332 = vmatprep.subr.bf16.mxu0 0
    %1333 = vmatpush1.bf16.msra.mxu0 0
    %1334 = vmatprep.subr.bf16.mxu0 0
    %1335 = vmatpush1.bf16.msra.mxu0 0
    %1336 = vmatprep.subr.bf16.mxu0 0
    %1337 = vmatpush1.bf16.msra.mxu0 0
    %1338 = vmatprep.mubr.bf16.mxu0 0
    %1339 = vmatmul.mubr.bf16.gmra.mrb[0].mxu0 %v976
    %v1340 = vpop.f32.mrb[0].mxu0
    %v1341 = vadd.f32 %v411, %v1340
    %v1342 = vpop.f32.mrb[0].mxu0
    %v1343 = vadd.f32 %v415, %v1342
    %v1344 = vpop.f32.mrb[0].mxu0
    %v1345 = vpop.f32.mrb[0].mxu0
    %1346 = vdwg.mxu0
    %v1347 = vxor.u32 %v1013, 2147483648
    %v1348 = vxor.u32 %v1015, 2147483648
    %v1349 = vxor.u32 %v1054, 2147483648
    %v1350 = vmul.f32 %v1347, 1.442695
    %v1351 = vpow.pop %v1350
    %v1352 = vmul.f32 %v1348, 1.442695
    %v1353 = vpow.pop %v1352
    %v1354 = vmul.f32 %v1349, 1.442695
    %v1355 = vpow.pop %v1354
    %v1356 = vadd.f32 %v1351, 1.0
    %v1357 = vadd.f32 %v1353, 1.0
    %v1358 = vadd.f32 %v1355, 1.0
    %v1359 = vrcp.pop %v1356
    %v1360 = vmul.f32 1.0, %v1359
    %v1361 = vrcp.pop %v1357
    %v1362 = vmul.f32 1.0, %v1361
    %v1363 = vrcp.pop %v1358
    %v1364 = vmul.f32 1.0, %v1363
    %v1365 = vxor.u32 %v1056, 2147483648
    %v1366 = vxor.u32 %v1095, 2147483648
    %v1367 = vxor.u32 %v1097, 2147483648
    %v1368 = vmul.f32 %v1365, 1.442695
    %v1369 = vpow.pop %v1368
    %v1370 = vmul.f32 %v1366, 1.442695
    %v1371 = vpow.pop %v1370
    %v1372 = vmul.f32 %v1367, 1.442695
    %v1373 = vpow.pop %v1372
    %v1374 = vadd.f32 %v1369, 1.0
    %v1375 = vadd.f32 %v1371, 1.0
    %v1376 = vadd.f32 %v1373, 1.0
    %v1377 = vrcp.pop %v1374
    %v1378 = vmul.f32 1.0, %v1377
    %v1379 = vrcp.pop %v1375
    %v1380 = vmul.f32 1.0, %v1379
    %v1381 = vrcp.pop %v1376
    %v1382 = vmul.f32 1.0, %v1381
    %v1383 = vld [vmem:[#allocation9] sm:$0x7]
    %v1385 = vlaneseq
    %v1386 = vshrl.u32 %v1385, 7
    %v1387 = vsub.s32 0, %v1386
    %v1388 = vrot.slane %v1383, %v1387
    %v1389 = vlaneseq
    %v1390 = vshrl.u32 %v1389, 7
    %v1391 = vsub.s32 1, %v1390
    %v1392 = vrot.slane %v1383, %v1391
    %v1393 = vlaneseq
    %v1394 = vshrl.u32 %v1393, 7
    %v1395 = vsub.s32 2, %v1394
    %v1396 = vrot.slane %v1383, %v1395
    %v1400 = vmul.f32 %v1360, %v1388
    %v1401 = vmul.f32 %v1362, %v1392
    %v1402 = vmul.f32 %v1364, %v1396
    %v1403 = vadd.f32 %v1136, %v1400
    %v1404 = vadd.f32 %v1138, %v1401
    %v1405 = vadd.f32 %v1177, %v1402
    %v1406 = vtanh.pop %v1403
    %v1407 = vtanh.pop %v1404
    %v1408 = vtanh.pop %v1405
    %v1409 = vsub.f32 1.0, %v1378
    %v1410 = vsub.f32 1.0, %v1380
    %v1411 = vsub.f32 1.0, %v1382
    %v1412 = vmul.f32 %v1409, %v1406
    %v1413 = vmul.f32 %v1410, %v1407
    %v1414 = vmul.f32 %v1411, %v1408
    %v1415 = vxor.u32 %v1179, 2147483648
    %v1416 = vxor.u32 %v1218, 2147483648
    %v1417 = vxor.u32 %v1220, 2147483648
    %v1418 = vmul.f32 %v1415, 1.442695
    %v1419 = vpow.pop %v1418
    %v1420 = vmul.f32 %v1416, 1.442695
    %v1421 = vpow.pop %v1420
    %v1422 = vmul.f32 %v1417, 1.442695
    %v1423 = vpow.pop %v1422
    %v1424 = vadd.f32 %v1419, 1.0
    %v1425 = vadd.f32 %v1421, 1.0
    %v1426 = vadd.f32 %v1423, 1.0
    %v1427 = vrcp.pop %v1424
    %v1428 = vmul.f32 1.0, %v1427
    %v1429 = vrcp.pop %v1425
    %v1430 = vmul.f32 1.0, %v1429
    %v1431 = vrcp.pop %v1426
    %v1432 = vmul.f32 1.0, %v1431
    %v1433 = vxor.u32 %v1259, 2147483648
    %v1434 = vxor.u32 %v1261, 2147483648
    %v1435 = vxor.u32 %v1300, 2147483648
    %v1436 = vmul.f32 %v1433, 1.442695
    %v1437 = vpow.pop %v1436
    %v1438 = vmul.f32 %v1434, 1.442695
    %v1439 = vpow.pop %v1438
    %v1440 = vmul.f32 %v1435, 1.442695
    %v1441 = vpow.pop %v1440
    %v1442 = vadd.f32 %v1437, 1.0
    %v1443 = vadd.f32 %v1439, 1.0
    %v1444 = vadd.f32 %v1441, 1.0
    %v1445 = vrcp.pop %v1442
    %v1446 = vmul.f32 1.0, %v1445
    %v1447 = vrcp.pop %v1443
    %v1448 = vmul.f32 1.0, %v1447
    %v1449 = vrcp.pop %v1444
    %v1450 = vmul.f32 1.0, %v1449
    %v1451 = vld [vmem:[#allocation9 + $0x3] sm:$0x7]
    %v1453 = vlaneseq
    %v1454 = vshrl.u32 %v1453, 7
    %v1455 = vsub.s32 0, %v1454
    %v1456 = vrot.slane %v1451, %v1455
    %v1457 = vlaneseq
    %v1458 = vshrl.u32 %v1457, 7
    %v1459 = vsub.s32 1, %v1458
    %v1460 = vrot.slane %v1451, %v1459
    %v1461 = vlaneseq
    %v1462 = vshrl.u32 %v1461, 7
    %v1463 = vsub.s32 2, %v1462
    %v1464 = vrot.slane %v1451, %v1463
    %v1468 = vmul.f32 %v1428, %v1456
    %v1469 = vmul.f32 %v1430, %v1460
    %v1470 = vmul.f32 %v1432, %v1464
    %v1471 = vadd.f32 %v1302, %v1468
    %v1472 = vadd.f32 %v1341, %v1469
    %v1473 = vadd.f32 %v1343, %v1470
    %v1474 = vtanh.pop %v1471
    %v1475 = vtanh.pop %v1472
    %v1476 = vtanh.pop %v1473
    %v1477 = vsub.f32 1.0, %v1446
    %v1478 = vsub.f32 1.0, %v1448
    %v1479 = vsub.f32 1.0, %v1450
    %v1480 = vmul.f32 %v1477, %v1474
    %v1481 = vmul.f32 %v1478, %v1475
    %v1482 = vmul.f32 %v1479, %v1476
    %v1483 = vld [vmem:[#allocation10] sm:$0xff]
    %v1484 = vld [vmem:[#allocation10 + $0x8] sm:$0xff]
    %v1485 = vld [vmem:[#allocation10 + $0x10] sm:$0xff]
    %v1486 = vld [vmem:[#allocation10 + $0x18] sm:$0xff]
    %v1487 = vld [vmem:[#allocation10 + $0x20] sm:$0xff]
    %v1488 = vld [vmem:[#allocation10 + $0x28] sm:$0xff]
    %v1489 = vld [vmem:[#allocation10 + $0x30] sm:$0xff]
    %v1490 = vld [vmem:[#allocation10 + $0x38] sm:$0xff]
    %v1491 = vld [vmem:[#allocation10 + $0x40] sm:$0xff]
    %v1492 = vld [vmem:[#allocation10 + $0x48] sm:$0xff]
    %v1493 = vld [vmem:[#allocation10 + $0x50] sm:$0xff]
    %v1494 = vld [vmem:[#allocation10 + $0x58] sm:$0xff]
    %v1495 = vld [vmem:[#allocation12] sm:$0x3]
    %v1497 = vlaneseq
    %v1498 = vshrl.u32 %v1497, 7
    %v1499 = vsub.s32 0, %v1498
    %v1500 = vrot.slane %v1495, %v1499
    %v1501 = vlaneseq
    %v1502 = vshrl.u32 %v1501, 7
    %v1503 = vsub.s32 1, %v1502
    %v1504 = vrot.slane %v1495, %v1503
    %v1519 = vunpack.c.l.b16 %v1483
    %v1520 = vunpack.c.h.b16 %v1483
    %v1521 = vunpack.c.l.b16 %v1484
    %v1522 = vunpack.c.h.b16 %v1484
    %v1523 = vunpack.c.l.b16 %v1485
    %v1524 = vunpack.c.h.b16 %v1485
    %v1525 = vunpack.c.l.b16 %v1486
    %v1526 = vunpack.c.h.b16 %v1486
    %v1527 = vunpack.c.l.b16 %v1487
    %v1528 = vunpack.c.h.b16 %v1487
    %v1529 = vunpack.c.l.b16 %v1488
    %v1530 = vunpack.c.h.b16 %v1488
    %v1531 = vunpack.c.l.b16 %v1489
    %v1532 = vunpack.c.h.b16 %v1489
    %v1533 = vunpack.c.l.b16 %v1490
    %v1534 = vunpack.c.h.b16 %v1490
    %v1535 = vunpack.c.l.b16 %v1491
    %v1536 = vunpack.c.h.b16 %v1491
    %v1537 = vunpack.c.l.b16 %v1492
    %v1538 = vunpack.c.h.b16 %v1492
    %v1539 = vunpack.c.l.b16 %v1493
    %v1540 = vunpack.c.h.b16 %v1493
    %v1541 = vunpack.c.l.b16 %v1494
    %v1542 = vunpack.c.h.b16 %v1494
    %v1543 = vpack.c.b16 %v1521, %v1519
    %v1544 = vpack.c.b16 %v1522, %v1520
    %v1545 = vpack.c.b16 %v1525, %v1523
    %v1546 = vpack.c.b16 %v1526, %v1524
    %v1547 = vpack.c.b16 %v1529, %v1527
    %v1548 = vpack.c.b16 %v1530, %v1528
    %v1549 = vpack.c.b16 %v1533, %v1531
    %v1550 = vpack.c.b16 %v1534, %v1532
    %v1551 = vpack.c.b16 %v1537, %v1535
    %v1552 = vpack.c.b16 %v1538, %v1536
    %v1553 = vpack.c.b16 %v1541, %v1539
    %v1554 = vpack.c.b16 %v1542, %v1540
    %1567 = vmatprep.subr.bf16.mxu0 %v1544
    %1568 = vmatpush1.bf16.msra.mxu0 %v1543
    %1569 = vmatprep.subr.bf16.mxu0 %v1546
    %1570 = vmatpush1.bf16.msra.mxu0 %v1545
    %1571 = vmatprep.subr.bf16.mxu0 %v1548
    %1572 = vmatpush1.bf16.msra.mxu0 %v1547
    %1573 = vmatprep.subr.bf16.mxu0 %v1550
    %1574 = vmatpush1.bf16.msra.mxu0 %v1549
    %1575 = vmatprep.subr.bf16.mxu0 %v1552
    %1576 = vmatpush1.bf16.msra.mxu0 %v1551
    %1577 = vmatprep.subr.bf16.mxu0 %v1554
    %1578 = vmatpush1.bf16.msra.mxu0 %v1553
    %1579 = vmatprep.subr.bf16.mxu0 0
    %1580 = vmatpush1.bf16.msra.mxu0 0
    %1581 = vmatprep.subr.bf16.mxu0 0
    %1582 = vmatpush1.bf16.msra.mxu0 0
    %1583 = vmatprep.subr.bf16.mxu0 0
    %1584 = vmatpush1.bf16.msra.mxu0 0
    %1585 = vmatprep.subr.bf16.mxu0 0
    %1586 = vmatpush1.bf16.msra.mxu0 0
    %1587 = vmatprep.subr.bf16.mxu0 0
    %1588 = vmatpush1.bf16.msra.mxu0 0
    %1589 = vmatprep.subr.bf16.mxu0 0
    %1590 = vmatpush1.bf16.msra.mxu0 0
    %1591 = vmatprep.subr.bf16.mxu0 0
    %1592 = vmatpush1.bf16.msra.mxu0 0
    %1593 = vmatprep.subr.bf16.mxu0 0
    %1594 = vmatpush1.bf16.msra.mxu0 0
    %1595 = vmatprep.subr.bf16.mxu0 0
    %1596 = vmatpush1.bf16.msra.mxu0 0
    %1597 = vmatprep.subr.bf16.mxu0 0
    %1598 = vmatpush1.bf16.msra.mxu0 0
    %1599 = vmatprep.mubr.bf16.mxu0 0
    %1600 = vmatmul.mubr.bf16.gmra.mrb[0].mxu0 %v976
    %v1601 = vpop.f32.mrb[0].mxu0
    %v1602 = vadd.f32 %v1500, %v1601
    %v1603 = vpop.f32.mrb[0].mxu0
    %v1604 = vadd.f32 %v1504, %v1603
    %v1605 = vpop.f32.mrb[0].mxu0
    %v1606 = vpop.f32.mrb[0].mxu0
    %1607 = vdwg.mxu0
    %v1608 = vmax.f32 %v1602, %v1604
    %v1609 = vmax.f32 %v1608, 0.0
    %v1610 = vpack.c.bf16 %v1609, %v1609
    %v1611 = vld [vmem:[#allocation13] sm:$0xff]
    %v1612 = vld [vmem:[#allocation13 + $0x8] sm:$0xff]
    %v1613 = vld [vmem:[#allocation13 + $0x10] sm:$0xff]
    %v1614 = vld [vmem:[#allocation13 + $0x18] sm:$0xff]
    %v1615 = vld [vmem:[#allocation13 + $0x20] sm:$0xff]
    %v1616 = vld [vmem:[#allocation13 + $0x28] sm:$0xff]
    %v1617 = vld [vmem:[#allocation13 + $0x30] sm:$0xff]
    %v1618 = vld [vmem:[#allocation13 + $0x38] sm:$0xff]
    %v1619 = vld [vmem:[#allocation13 + $0x40] sm:$0xff]
    %v1620 = vld [vmem:[#allocation13 + $0x48] sm:$0xff]
    %v1621 = vld [vmem:[#allocation13 + $0x50] sm:$0xff]
    %v1622 = vld [vmem:[#allocation13 + $0x58] sm:$0xff]
    %v1623 = vld [vmem:[#allocation13 + $0x60] sm:$0xff]
    %v1624 = vld [vmem:[#allocation13 + $0x68] sm:$0xff]
    %v1625 = vld [vmem:[#allocation13 + $0x70] sm:$0xff]
    %v1626 = vld [vmem:[#allocation13 + $0x78] sm:$0xff]
    %v1627 = vld [vmem:[#allocation15] sm:$0x3]
    %v1629 = vlaneseq
    %v1630 = vshrl.u32 %v1629, 7
    %v1631 = vsub.s32 0, %v1630
    %v1632 = vrot.slane %v1627, %v1631
    %v1633 = vlaneseq
    %v1634 = vshrl.u32 %v1633, 7
    %v1635 = vsub.s32 1, %v1634
    %v1636 = vrot.slane %v1627, %v1635
    %v1655 = vunpack.c.l.b16 %v1611
    %v1656 = vunpack.c.h.b16 %v1611
    %v1657 = vunpack.c.l.b16 %v1612
    %v1658 = vunpack.c.h.b16 %v1612
    %v1659 = vunpack.c.l.b16 %v1613
    %v1660 = vunpack.c.h.b16 %v1613
    %v1661 = vunpack.c.l.b16 %v1614
    %v1662 = vunpack.c.h.b16 %v1614
    %v1663 = vunpack.c.l.b16 %v1615
    %v1664 = vunpack.c.h.b16 %v1615
    %v1665 = vunpack.c.l.b16 %v1616
    %v1666 = vunpack.c.h.b16 %v1616
    %v1667 = vunpack.c.l.b16 %v1617
    %v1668 = vunpack.c.h.b16 %v1617
    %v1669 = vunpack.c.l.b16 %v1618
    %v1670 = vunpack.c.h.b16 %v1618
    %v1671 = vunpack.c.l.b16 %v1619
    %v1672 = vunpack.c.h.b16 %v1619
    %v1673 = vunpack.c.l.b16 %v1620
    %v1674 = vunpack.c.h.b16 %v1620
    %v1675 = vunpack.c.l.b16 %v1621
    %v1676 = vunpack.c.h.b16 %v1621
    %v1677 = vunpack.c.l.b16 %v1622
    %v1678 = vunpack.c.h.b16 %v1622
    %v1679 = vunpack.c.l.b16 %v1623
    %v1680 = vunpack.c.h.b16 %v1623
    %v1681 = vunpack.c.l.b16 %v1624
    %v1682 = vunpack.c.h.b16 %v1624
    %v1683 = vunpack.c.l.b16 %v1625
    %v1684 = vunpack.c.h.b16 %v1625
    %v1685 = vunpack.c.l.b16 %v1626
    %v1686 = vunpack.c.h.b16 %v1626
    %v1687 = vpack.c.b16 %v1657, %v1655
    %v1688 = vpack.c.b16 %v1658, %v1656
    %v1689 = vpack.c.b16 %v1661, %v1659
    %v1690 = vpack.c.b16 %v1662, %v1660
    %v1691 = vpack.c.b16 %v1665, %v1663
    %v1692 = vpack.c.b16 %v1666, %v1664
    %v1693 = vpack.c.b16 %v1669, %v1667
    %v1694 = vpack.c.b16 %v1670, %v1668
    %v1695 = vpack.c.b16 %v1673, %v1671
    %v1696 = vpack.c.b16 %v1674, %v1672
    %v1697 = vpack.c.b16 %v1677, %v1675
    %v1698 = vpack.c.b16 %v1678, %v1676
    %v1699 = vpack.c.b16 %v1681, %v1679
    %v1700 = vpack.c.b16 %v1682, %v1680
    %v1701 = vpack.c.b16 %v1685, %v1683
    %v1702 = vpack.c.b16 %v1686, %v1684
    %1719 = vmatprep.subr.bf16.mxu0 %v1688
    %1720 = vmatpush1.bf16.msra.mxu0 %v1687
    %1721 = vmatprep.subr.bf16.mxu0 %v1690
    %1722 = vmatpush1.bf16.msra.mxu0 %v1689
    %1723 = vmatprep.subr.bf16.mxu0 %v1692
    %1724 = vmatpush1.bf16.msra.mxu0 %v1691
    %1725 = vmatprep.subr.bf16.mxu0 %v1694
    %1726 = vmatpush1.bf16.msra.mxu0 %v1693
    %1727 = vmatprep.subr.bf16.mxu0 %v1696
    %1728 = vmatpush1.bf16.msra.mxu0 %v1695
    %1729 = vmatprep.subr.bf16.mxu0 %v1698
    %1730 = vmatpush1.bf16.msra.mxu0 %v1697
    %1731 = vmatprep.subr.bf16.mxu0 %v1700
    %1732 = vmatpush1.bf16.msra.mxu0 %v1699
    %1733 = vmatprep.subr.bf16.mxu0 %v1702
    %1734 = vmatpush1.bf16.msra.mxu0 %v1701
    %1735 = vmatprep.subr.bf16.mxu0 0
    %1736 = vmatpush1.bf16.msra.mxu0 0
    %1737 = vmatprep.subr.bf16.mxu0 0
    %1738 = vmatpush1.bf16.msra.mxu0 0
    %1739 = vmatprep.subr.bf16.mxu0 0
    %1740 = vmatpush1.bf16.msra.mxu0 0
    %1741 = vmatprep.subr.bf16.mxu0 0
    %1742 = vmatpush1.bf16.msra.mxu0 0
    %1743 = vmatprep.subr.bf16.mxu0 0
    %1744 = vmatpush1.bf16.msra.mxu0 0
    %1745 = vmatprep.subr.bf16.mxu0 0
    %1746 = vmatpush1.bf16.msra.mxu0 0
    %1747 = vmatprep.subr.bf16.mxu0 0
    %1748 = vmatpush1.bf16.msra.mxu0 0
    %1749 = vmatprep.subr.bf16.mxu0 0
    %1750 = vmatpush1.bf16.msra.mxu0 0
    %1751 = vmatprep.mubr.bf16.mxu0 0
    %1752 = vmatmul.mubr.bf16.gmra.mrb[0].mxu0 %v1610
    %v1753 = vpop.f32.mrb[0].mxu0
    %v1754 = vadd.f32 %v1632, %v1753
    %v1755 = vpop.f32.mrb[0].mxu0
    %v1756 = vadd.f32 %v1636, %v1755
    %v1757 = vpop.f32.mrb[0].mxu0
    %v1758 = vpop.f32.mrb[0].mxu0
    %1759 = vdwg.mxu0
    %v1760 = vmax.f32 %v1754, %v1756
    %v1761 = vmax.f32 %v1760, 0.0
    %v1762 = vpack.c.bf16 %v1761, %v1761
    %v1763 = vld [vmem:[#allocation16] sm:$0xff]
    %v1764 = vld [vmem:[#allocation16 + $0x8] sm:$0xff]
    %v1765 = vld [vmem:[#allocation16 + $0x10] sm:$0xff]
    %v1766 = vld [vmem:[#allocation16 + $0x18] sm:$0xff]
    %v1767 = vld [vmem:[#allocation16 + $0x20] sm:$0xff]
    %v1768 = vld [vmem:[#allocation16 + $0x28] sm:$0xff]
    %v1769 = vld [vmem:[#allocation16 + $0x30] sm:$0xff]
    %v1770 = vld [vmem:[#allocation16 + $0x38] sm:$0xff]
    %v1771 = vld [vmem:[#allocation16 + $0x40] sm:$0xff]
    %v1772 = vld [vmem:[#allocation16 + $0x48] sm:$0xff]
    %v1773 = vld [vmem:[#allocation16 + $0x50] sm:$0xff]
    %v1774 = vld [vmem:[#allocation16 + $0x58] sm:$0xff]
    %v1775 = vld [vmem:[#allocation16 + $0x60] sm:$0xff]
    %v1776 = vld [vmem:[#allocation16 + $0x68] sm:$0xff]
    %v1777 = vld [vmem:[#allocation16 + $0x70] sm:$0xff]
    %v1778 = vld [vmem:[#allocation16 + $0x78] sm:$0xff]
    %v1779 = vld [vmem:[#allocation18] sm:$0x3]
    %v1781 = vlaneseq
    %v1782 = vshrl.u32 %v1781, 7
    %v1783 = vsub.s32 0, %v1782
    %v1784 = vrot.slane %v1779, %v1783
    %v1785 = vlaneseq
    %v1786 = vshrl.u32 %v1785, 7
    %v1787 = vsub.s32 1, %v1786
    %v1788 = vrot.slane %v1779, %v1787
    %v1807 = vunpack.c.l.b16 %v1763
    %v1808 = vunpack.c.h.b16 %v1763
    %v1809 = vunpack.c.l.b16 %v1764
    %v1810 = vunpack.c.h.b16 %v1764
    %v1811 = vunpack.c.l.b16 %v1765
    %v1812 = vunpack.c.h.b16 %v1765
    %v1813 = vunpack.c.l.b16 %v1766
    %v1814 = vunpack.c.h.b16 %v1766
    %v1815 = vunpack.c.l.b16 %v1767
    %v1816 = vunpack.c.h.b16 %v1767
    %v1817 = vunpack.c.l.b16 %v1768
    %v1818 = vunpack.c.h.b16 %v1768
    %v1819 = vunpack.c.l.b16 %v1769
    %v1820 = vunpack.c.h.b16 %v1769
    %v1821 = vunpack.c.l.b16 %v1770
    %v1822 = vunpack.c.h.b16 %v1770
    %v1823 = vunpack.c.l.b16 %v1771
    %v1824 = vunpack.c.h.b16 %v1771
    %v1825 = vunpack.c.l.b16 %v1772
    %v1826 = vunpack.c.h.b16 %v1772
    %v1827 = vunpack.c.l.b16 %v1773
    %v1828 = vunpack.c.h.b16 %v1773
    %v1829 = vunpack.c.l.b16 %v1774
    %v1830 = vunpack.c.h.b16 %v1774
    %v1831 = vunpack.c.l.b16 %v1775
    %v1832 = vunpack.c.h.b16 %v1775
    %v1833 = vunpack.c.l.b16 %v1776
    %v1834 = vunpack.c.h.b16 %v1776
    %v1835 = vunpack.c.l.b16 %v1777
    %v1836 = vunpack.c.h.b16 %v1777
    %v1837 = vunpack.c.l.b16 %v1778
    %v1838 = vunpack.c.h.b16 %v1778
    %v1839 = vpack.c.b16 %v1809, %v1807
    %v1840 = vpack.c.b16 %v1810, %v1808
    %v1841 = vpack.c.b16 %v1813, %v1811
    %v1842 = vpack.c.b16 %v1814, %v1812
    %v1843 = vpack.c.b16 %v1817, %v1815
    %v1844 = vpack.c.b16 %v1818, %v1816
    %v1845 = vpack.c.b16 %v1821, %v1819
    %v1846 = vpack.c.b16 %v1822, %v1820
    %v1847 = vpack.c.b16 %v1825, %v1823
    %v1848 = vpack.c.b16 %v1826, %v1824
    %v1849 = vpack.c.b16 %v1829, %v1827
    %v1850 = vpack.c.b16 %v1830, %v1828
    %v1851 = vpack.c.b16 %v1833, %v1831
    %v1852 = vpack.c.b16 %v1834, %v1832
    %v1853 = vpack.c.b16 %v1837, %v1835
    %v1854 = vpack.c.b16 %v1838, %v1836
    %1871 = vmatprep.subr.bf16.mxu0 %v1840
    %1872 = vmatpush1.bf16.msra.mxu0 %v1839
    %1873 = vmatprep.subr.bf16.mxu0 %v1842
    %1874 = vmatpush1.bf16.msra.mxu0 %v1841
    %1875 = vmatprep.subr.bf16.mxu0 %v1844
    %1876 = vmatpush1.bf16.msra.mxu0 %v1843
    %1877 = vmatprep.subr.bf16.mxu0 %v1846
    %1878 = vmatpush1.bf16.msra.mxu0 %v1845
    %1879 = vmatprep.subr.bf16.mxu0 %v1848
    %1880 = vmatpush1.bf16.msra.mxu0 %v1847
    %1881 = vmatprep.subr.bf16.mxu0 %v1850
    %1882 = vmatpush1.bf16.msra.mxu0 %v1849
    %1883 = vmatprep.subr.bf16.mxu0 %v1852
    %1884 = vmatpush1.bf16.msra.mxu0 %v1851
    %1885 = vmatprep.subr.bf16.mxu0 %v1854
    %1886 = vmatpush1.bf16.msra.mxu0 %v1853
    %1887 = vmatprep.subr.bf16.mxu0 0
    %1888 = vmatpush1.bf16.msra.mxu0 0
    %1889 = vmatprep.subr.bf16.mxu0 0
    %1890 = vmatpush1.bf16.msra.mxu0 0
    %1891 = vmatprep.subr.bf16.mxu0 0
    %1892 = vmatpush1.bf16.msra.mxu0 0
    %1893 = vmatprep.subr.bf16.mxu0 0
    %1894 = vmatpush1.bf16.msra.mxu0 0
    %1895 = vmatprep.subr.bf16.mxu0 0
    %1896 = vmatpush1.bf16.msra.mxu0 0
    %1897 = vmatprep.subr.bf16.mxu0 0
    %1898 = vmatpush1.bf16.msra.mxu0 0
    %1899 = vmatprep.subr.bf16.mxu0 0
    %1900 = vmatpush1.bf16.msra.mxu0 0
    %1901 = vmatprep.subr.bf16.mxu0 0
    %1902 = vmatpush1.bf16.msra.mxu0 0
    %1903 = vmatprep.mubr.bf16.mxu0 0
    %1904 = vmatmul.mubr.bf16.gmra.mrb[0].mxu0 %v1762
    %v1905 = vpop.f32.mrb[0].mxu0
    %v1906 = vadd.f32 %v1784, %v1905
    %v1907 = vpop.f32.mrb[0].mxu0
    %v1908 = vadd.f32 %v1788, %v1907
    %v1909 = vpop.f32.mrb[0].mxu0
    %v1910 = vpop.f32.mrb[0].mxu0
    %1911 = vdwg.mxu0
    %v1912 = vmax.f32 %v1906, %v1908
    %v1913 = vmax.f32 %v1912, 0.0
    %1914 = vst [vmem:[%s14] sm:$0xff] %v1412
    %1915 = vst [vmem:[%s14 + $0x8] sm:$0xff] %v1413
    %1916 = vst [vmem:[%s14 + $0x10] sm:$0xff] %v1414
    %1917 = vst [vmem:[%s14 + $0x18] sm:$0xff] %v1480
    %1918 = vst [vmem:[%s14 + $0x20] sm:$0xff] %v1481
    %1919 = vst [vmem:[%s14 + $0x28] sm:$0xff] %v1482
    %1920 = vst [vmem:[%s14 + $0x30] sm:$0xff] %v1913
    %s1921 = smul.u32 4, 112
    %s1922 = smul.u32 %s1921, 8
    %s1923 = sshll.u32 %s1922, 4
    %1924 = dma.done [#allocation4], %s1923
    %s1925 = smul.u32 4, 128
    %s1926 = smul.u32 %s1925, 1
    %s1927 = sshll.u32 %s1926, 4
    %1928 = dma.done %s216, %s1927
    %v1929 = vld [vmem:[#allocation2] sm:$0xff]
    %v1930 = vld [vmem:[#allocation2 + $0x8] sm:$0xff]
    %v1931 = vld [vmem:[#allocation2 + $0x10] sm:$0xff]
    %v1932 = vld [vmem:[#allocation2 + $0x18] sm:$0xff]
    %v1933 = vld [vmem:[#allocation2 + $0x20] sm:$0xff]
    %v1934 = vld [vmem:[#allocation2 + $0x28] sm:$0xff]
    %v1935 = vld [vmem:[#allocation2 + $0x30] sm:$0xff]
    %v1936 = vld [vmem:[#allocation2 + $0x38] sm:$0xff]
    %v1937 = vld [vmem:[#allocation2 + $0x40] sm:$0xff]
    %v1938 = vld [vmem:[#allocation2 + $0x48] sm:$0xff]
    %v1939 = vld [vmem:[#allocation2 + $0x50] sm:$0xff]
    %v1940 = vld [vmem:[#allocation2 + $0x58] sm:$0xff]
    %v1941 = vld [vmem:[#allocation2 + $0x60] sm:$0xff]
    %v1942 = vld [vmem:[#allocation2 + $0x68] sm:$0xff]
    %v1943 = vld [vmem:[#allocation2 + $0x70] sm:$0xff]
    %v1944 = vld [vmem:[#allocation2 + $0x78] sm:$0xff]
    %v1945 = vld [vmem:[#allocation2 + $0x80] sm:$0xff]
    %v1946 = vld [vmem:[#allocation2 + $0x88] sm:$0xff]
    %v1947 = vld [vmem:[#allocation2 + $0x90] sm:$0xff]
    %v1948 = vld [vmem:[#allocation2 + $0x98] sm:$0xff]
    %v1949 = vld [vmem:[#allocation2 + $0xa0] sm:$0xff]
    %v1950 = vld [vmem:[#allocation2 + $0xa8] sm:$0xff]
    %v1951 = vld [vmem:[#allocation2 + $0xb0] sm:$0xff]
    %v1952 = vld [vmem:[#allocation2 + $0xb8] sm:$0xff]
    %v1953 = vld [vmem:[#allocation2 + $0xc0] sm:$0xff]
    %v1954 = vld [vmem:[#allocation2 + $0xc8] sm:$0xff]
    %v1955 = vld [vmem:[#allocation2 + $0xd0] sm:$0xff]
    %v1956 = vld [vmem:[#allocation2 + $0xd8] sm:$0xff]
    %v1957 = vld [vmem:[#allocation2 + $0xe0] sm:$0xff]
    %v1958 = vld [vmem:[#allocation2 + $0xe8] sm:$0xff]
    %v1959 = vld [vmem:[#allocation2 + $0xf0] sm:$0xff]
    %v1960 = vld [vmem:[#allocation2 + $0xf8] sm:$0xff]
    %v1961 = vld [vmem:[#allocation2 + $0x100] sm:$0xff]
    %v1962 = vld [vmem:[#allocation2 + $0x108] sm:$0xff]
    %v1963 = vld [vmem:[#allocation2 + $0x110] sm:$0xff]
    %v1964 = vld [vmem:[#allocation2 + $0x118] sm:$0xff]
    %v1965 = vld [vmem:[#allocation2 + $0x120] sm:$0xff]
    %v1966 = vld [vmem:[#allocation2 + $0x128] sm:$0xff]
    %v1967 = vld [vmem:[#allocation2 + $0x130] sm:$0xff]
    %v1968 = vld [vmem:[#allocation2 + $0x138] sm:$0xff]
    %v1969 = vld [vmem:[#allocation2 + $0x140] sm:$0xff]
    %v1970 = vld [vmem:[#allocation2 + $0x148] sm:$0xff]
    %v1971 = vld [vmem:[#allocation2 + $0x150] sm:$0xff]
    %v1972 = vld [vmem:[#allocation2 + $0x158] sm:$0xff]
    %v1973 = vld [vmem:[#allocation2 + $0x160] sm:$0xff]
    %v1974 = vld [vmem:[#allocation2 + $0x168] sm:$0xff]
    %v1975 = vld [vmem:[#allocation2 + $0x170] sm:$0xff]
    %v1976 = vld [vmem:[#allocation2 + $0x178] sm:$0xff]
    %v1977 = vld [vmem:[#allocation2 + $0x180] sm:$0xff]
    %v1978 = vld [vmem:[#allocation2 + $0x188] sm:$0xff]
    %v1979 = vld [vmem:[#allocation2 + $0x190] sm:$0xff]
    %v1980 = vld [vmem:[#allocation2 + $0x198] sm:$0xff]
    %v1981 = vld [vmem:[#allocation2 + $0x1a0] sm:$0xff]
    %v1982 = vld [vmem:[#allocation2 + $0x1a8] sm:$0xff]
    %v1983 = vld [vmem:[#allocation2 + $0x1b0] sm:$0xff]
    %v1984 = vld [vmem:[#allocation2 + $0x1b8] sm:$0xff]
    %v1985 = vld [vmem:[#allocation2 + $0x1c0] sm:$0xff]
    %v1986 = vld [vmem:[#allocation2 + $0x1c8] sm:$0xff]
    %v1987 = vld [vmem:[#allocation2 + $0x1d0] sm:$0xff]
    %v1988 = vld [vmem:[#allocation2 + $0x1d8] sm:$0xff]
    %v1989 = vld [vmem:[#allocation2 + $0x1e0] sm:$0xff]
    %v1990 = vld [vmem:[#allocation2 + $0x1e8] sm:$0xff]
    %v1991 = vld [vmem:[#allocation2 + $0x1f0] sm:$0xff]
    %v1992 = vld [vmem:[#allocation2 + $0x1f8] sm:$0xff]
    %v1993 = vld [vmem:[#allocation2 + $0x200] sm:$0xff]
    %v1994 = vld [vmem:[#allocation2 + $0x208] sm:$0xff]
    %v1995 = vld [vmem:[#allocation2 + $0x210] sm:$0xff]
    %v1996 = vld [vmem:[#allocation2 + $0x218] sm:$0xff]
    %v1997 = vld [vmem:[#allocation2 + $0x220] sm:$0xff]
    %v1998 = vld [vmem:[#allocation2 + $0x228] sm:$0xff]
    %v1999 = vld [vmem:[#allocation2 + $0x230] sm:$0xff]
    %v2000 = vld [vmem:[#allocation2 + $0x238] sm:$0xff]
    %v2001 = vld [vmem:[#allocation2 + $0x240] sm:$0xff]
    %v2002 = vld [vmem:[#allocation2 + $0x248] sm:$0xff]
    %v2003 = vld [vmem:[#allocation2 + $0x250] sm:$0xff]
    %v2004 = vld [vmem:[#allocation2 + $0x258] sm:$0xff]
    %v2005 = vld [vmem:[#allocation2 + $0x260] sm:$0xff]
    %v2006 = vld [vmem:[#allocation2 + $0x268] sm:$0xff]
    %v2007 = vld [vmem:[#allocation2 + $0x270] sm:$0xff]
    %v2008 = vld [vmem:[#allocation2 + $0x278] sm:$0xff]
    %v2009 = vld [vmem:[#allocation2 + $0x280] sm:$0xff]
    %v2010 = vld [vmem:[#allocation2 + $0x288] sm:$0xff]
    %v2011 = vld [vmem:[#allocation2 + $0x290] sm:$0xff]
    %v2012 = vld [vmem:[#allocation2 + $0x298] sm:$0xff]
    %v2013 = vld [vmem:[#allocation2 + $0x2a0] sm:$0xff]
    %v2014 = vld [vmem:[#allocation2 + $0x2a8] sm:$0xff]
    %v2015 = vld [vmem:[#allocation2 + $0x2b0] sm:$0xff]
    %v2016 = vld [vmem:[#allocation2 + $0x2b8] sm:$0xff]
    %v2017 = vld [vmem:[#allocation2 + $0x2c0] sm:$0xff]
    %v2018 = vld [vmem:[#allocation2 + $0x2c8] sm:$0xff]
    %v2019 = vld [vmem:[#allocation2 + $0x2d0] sm:$0xff]
    %v2020 = vld [vmem:[#allocation2 + $0x2d8] sm:$0xff]
    %v2021 = vld [vmem:[#allocation2 + $0x2e0] sm:$0xff]
    %v2022 = vld [vmem:[#allocation2 + $0x2e8] sm:$0xff]
    %v2023 = vld [vmem:[#allocation2 + $0x2f0] sm:$0xff]
    %v2024 = vld [vmem:[#allocation2 + $0x2f8] sm:$0xff]
    %v2025 = vld [vmem:[#allocation2 + $0x300] sm:$0xff]
    %v2026 = vld [vmem:[#allocation2 + $0x308] sm:$0xff]
    %v2027 = vld [vmem:[#allocation2 + $0x310] sm:$0xff]
    %v2028 = vld [vmem:[#allocation2 + $0x318] sm:$0xff]
    %v2029 = vld [vmem:[#allocation2 + $0x320] sm:$0xff]
    %v2030 = vld [vmem:[#allocation2 + $0x328] sm:$0xff]
    %v2031 = vld [vmem:[#allocation2 + $0x330] sm:$0xff]
    %v2032 = vld [vmem:[#allocation2 + $0x338] sm:$0xff]
    %v2033 = vld [vmem:[#allocation2 + $0x340] sm:$0xff]
    %v2034 = vld [vmem:[#allocation2 + $0x348] sm:$0xff]
    %v2035 = vld [vmem:[#allocation2 + $0x350] sm:$0xff]
    %v2036 = vld [vmem:[#allocation2 + $0x358] sm:$0xff]
    %v2037 = vld [vmem:[#allocation2 + $0x360] sm:$0xff]
    %v2038 = vld [vmem:[#allocation2 + $0x368] sm:$0xff]
    %v2039 = vld [vmem:[#allocation2 + $0x370] sm:$0xff]
    %v2040 = vld [vmem:[#allocation2 + $0x378] sm:$0xff]
    %v2041 = vld [vmem:[#allocation2 + $0x380] sm:$0xff]
    %v2042 = vld [vmem:[#allocation2 + $0x388] sm:$0xff]
    %v2043 = vld [vmem:[#allocation2 + $0x390] sm:$0xff]
    %v2044 = vld [vmem:[#allocation2 + $0x398] sm:$0xff]
    %v2045 = vld [vmem:[#allocation2 + $0x3a0] sm:$0xff]
    %v2046 = vld [vmem:[#allocation2 + $0x3a8] sm:$0xff]
    %v2047 = vld [vmem:[#allocation2 + $0x3b0] sm:$0xff]
    %v2048 = vld [vmem:[#allocation2 + $0x3b8] sm:$0xff]
    %v2049 = vld [vmem:[#allocation2 + $0x3c0] sm:$0xff]
    %v2050 = vld [vmem:[#allocation2 + $0x3c8] sm:$0xff]
    %v2051 = vld [vmem:[#allocation2 + $0x3d0] sm:$0xff]
    %v2052 = vld [vmem:[#allocation2 + $0x3d8] sm:$0xff]
    %v2053 = vld [vmem:[#allocation2 + $0x3e0] sm:$0xff]
    %v2054 = vld [vmem:[#allocation2 + $0x3e8] sm:$0xff]
    %v2055 = vld [vmem:[#allocation2 + $0x3f0] sm:$0xff]
    %v2056 = vld [vmem:[#allocation2 + $0x3f8] sm:$0xff]
    %v2057 = vld [vmem:[#allocation2 + $0x400] sm:$0xff]
    %v2058 = vld [vmem:[#allocation2 + $0x408] sm:$0xff]
    %v2059 = vld [vmem:[#allocation2 + $0x410] sm:$0xff]
    %v2060 = vld [vmem:[#allocation2 + $0x418] sm:$0xff]
    %v2061 = vld [vmem:[#allocation2 + $0x420] sm:$0xff]
    %v2062 = vld [vmem:[#allocation2 + $0x428] sm:$0xff]
    %v2063 = vld [vmem:[#allocation2 + $0x430] sm:$0xff]
    %v2064 = vld [vmem:[#allocation2 + $0x438] sm:$0xff]
    %v2065 = vld [vmem:[#allocation2 + $0x440] sm:$0xff]
    %v2066 = vld [vmem:[#allocation2 + $0x448] sm:$0xff]
    %v2067 = vld [vmem:[#allocation2 + $0x450] sm:$0xff]
    %v2068 = vld [vmem:[#allocation2 + $0x458] sm:$0xff]
    %v2069 = vld [vmem:[#allocation2 + $0x460] sm:$0xff]
    %v2070 = vld [vmem:[#allocation2 + $0x468] sm:$0xff]
    %v2071 = vld [vmem:[#allocation2 + $0x470] sm:$0xff]
    %v2072 = vld [vmem:[#allocation2 + $0x478] sm:$0xff]
    %v2073 = vld [vmem:[#allocation2 + $0x480] sm:$0xff]
    %v2074 = vld [vmem:[#allocation2 + $0x488] sm:$0xff]
    %v2075 = vld [vmem:[#allocation2 + $0x490] sm:$0xff]
    %v2076 = vld [vmem:[#allocation2 + $0x498] sm:$0xff]
    %v2077 = vld [vmem:[#allocation2 + $0x4a0] sm:$0xff]
    %v2078 = vld [vmem:[#allocation2 + $0x4a8] sm:$0xff]
    %v2079 = vld [vmem:[#allocation2 + $0x4b0] sm:$0xff]
    %v2080 = vld [vmem:[#allocation2 + $0x4b8] sm:$0xff]
    %v2081 = vld [vmem:[#allocation2 + $0x4c0] sm:$0xff]
    %v2082 = vld [vmem:[#allocation2 + $0x4c8] sm:$0xff]
    %v2083 = vld [vmem:[#allocation2 + $0x4d0] sm:$0xff]
    %v2084 = vld [vmem:[#allocation2 + $0x4d8] sm:$0xff]
    %v2085 = vld [vmem:[#allocation2 + $0x4e0] sm:$0xff]
    %v2086 = vld [vmem:[#allocation2 + $0x4e8] sm:$0xff]
    %v2087 = vld [vmem:[#allocation2 + $0x4f0] sm:$0xff]
    %v2088 = vld [vmem:[#allocation2 + $0x4f8] sm:$0xff]
    %v2089 = vld [vmem:[#allocation2 + $0x500] sm:$0xff]
    %v2090 = vld [vmem:[#allocation2 + $0x508] sm:$0xff]
    %v2091 = vld [vmem:[#allocation2 + $0x510] sm:$0xff]
    %v2092 = vld [vmem:[#allocation2 + $0x518] sm:$0xff]
    %v2093 = vld [vmem:[#allocation2 + $0x520] sm:$0xff]
    %v2094 = vld [vmem:[#allocation2 + $0x528] sm:$0xff]
    %v2095 = vld [vmem:[#allocation2 + $0x530] sm:$0xff]
    %v2096 = vld [vmem:[#allocation2 + $0x538] sm:$0xff]
    %v2097 = vld [vmem:[#allocation2 + $0x540] sm:$0xff]
    %v2098 = vld [vmem:[#allocation2 + $0x548] sm:$0xff]
    %v2099 = vld [vmem:[#allocation2 + $0x550] sm:$0xff]
    %v2100 = vld [vmem:[#allocation2 + $0x558] sm:$0xff]
    %v2101 = vld [vmem:[#allocation2 + $0x560] sm:$0xff]
    %v2102 = vld [vmem:[#allocation2 + $0x568] sm:$0xff]
    %v2103 = vld [vmem:[#allocation2 + $0x570] sm:$0xff]
    %v2104 = vld [vmem:[#allocation2 + $0x578] sm:$0xff]
    %v2105 = vld [vmem:[#allocation2 + $0x580] sm:$0xff]
    %v2106 = vld [vmem:[#allocation2 + $0x588] sm:$0xff]
    %v2107 = vld [vmem:[#allocation2 + $0x590] sm:$0xff]
    %v2108 = vld [vmem:[#allocation2 + $0x598] sm:$0xff]
    %v2109 = vld [vmem:[#allocation2 + $0x5a0] sm:$0xff]
    %v2110 = vld [vmem:[#allocation2 + $0x5a8] sm:$0xff]
    %v2111 = vld [vmem:[#allocation2 + $0x5b0] sm:$0xff]
    %v2112 = vld [vmem:[#allocation2 + $0x5b8] sm:$0xff]
    %v2113 = vld [vmem:[#allocation2 + $0x5c0] sm:$0xff]
    %v2114 = vld [vmem:[#allocation2 + $0x5c8] sm:$0xff]
    %v2115 = vld [vmem:[#allocation2 + $0x5d0] sm:$0xff]
    %v2116 = vld [vmem:[#allocation2 + $0x5d8] sm:$0xff]
    %v2117 = vld [vmem:[#allocation2 + $0x5e0] sm:$0xff]
    %v2118 = vld [vmem:[#allocation2 + $0x5e8] sm:$0xff]
    %v2119 = vld [vmem:[#allocation2 + $0x5f0] sm:$0xff]
    %v2120 = vld [vmem:[#allocation2 + $0x5f8] sm:$0xff]
    %v2121 = vld [vmem:[#allocation2 + $0x600] sm:$0xff]
    %v2122 = vld [vmem:[#allocation2 + $0x608] sm:$0xff]
    %v2123 = vld [vmem:[#allocation2 + $0x610] sm:$0xff]
    %v2124 = vld [vmem:[#allocation2 + $0x618] sm:$0xff]
    %v2125 = vld [vmem:[#allocation2 + $0x620] sm:$0xff]
    %v2126 = vld [vmem:[#allocation2 + $0x628] sm:$0xff]
    %v2127 = vld [vmem:[#allocation2 + $0x630] sm:$0xff]
    %v2128 = vld [vmem:[#allocation2 + $0x638] sm:$0xff]
    %v2129 = vld [vmem:[#allocation2 + $0x640] sm:$0xff]
    %v2130 = vld [vmem:[#allocation2 + $0x648] sm:$0xff]
    %v2131 = vld [vmem:[#allocation2 + $0x650] sm:$0xff]
    %v2132 = vld [vmem:[#allocation2 + $0x658] sm:$0xff]
    %v2133 = vld [vmem:[#allocation2 + $0x660] sm:$0xff]
    %v2134 = vld [vmem:[#allocation2 + $0x668] sm:$0xff]
    %v2135 = vld [vmem:[#allocation2 + $0x670] sm:$0xff]
    %v2136 = vld [vmem:[#allocation2 + $0x678] sm:$0xff]
    %v2137 = vld [vmem:[#allocation2 + $0x680] sm:$0xff]
    %v2138 = vld [vmem:[#allocation2 + $0x688] sm:$0xff]
    %v2139 = vld [vmem:[#allocation2 + $0x690] sm:$0xff]
    %v2140 = vld [vmem:[#allocation2 + $0x698] sm:$0xff]
    %v2141 = vld [vmem:[#allocation2 + $0x6a0] sm:$0xff]
    %v2142 = vld [vmem:[#allocation2 + $0x6a8] sm:$0xff]
    %v2143 = vld [vmem:[#allocation2 + $0x6b0] sm:$0xff]
    %v2144 = vld [vmem:[#allocation2 + $0x6b8] sm:$0xff]
    %v2145 = vld [vmem:[#allocation2 + $0x6c0] sm:$0xff]
    %v2146 = vld [vmem:[#allocation2 + $0x6c8] sm:$0xff]
    %v2147 = vld [vmem:[#allocation2 + $0x6d0] sm:$0xff]
    %v2148 = vld [vmem:[#allocation2 + $0x6d8] sm:$0xff]
    %v2149 = vld [vmem:[#allocation2 + $0x6e0] sm:$0xff]
    %v2150 = vld [vmem:[#allocation2 + $0x6e8] sm:$0xff]
    %v2151 = vld [vmem:[#allocation2 + $0x6f0] sm:$0xff]
    %v2152 = vld [vmem:[#allocation2 + $0x6f8] sm:$0xff]
    %v2153 = vld [vmem:[#allocation2 + $0x700] sm:$0xff]
    %v2154 = vld [vmem:[#allocation2 + $0x708] sm:$0xff]
    %v2155 = vld [vmem:[#allocation2 + $0x710] sm:$0xff]
    %v2156 = vld [vmem:[#allocation2 + $0x718] sm:$0xff]
    %v2157 = vld [vmem:[#allocation2 + $0x720] sm:$0xff]
    %v2158 = vld [vmem:[#allocation2 + $0x728] sm:$0xff]
    %v2159 = vld [vmem:[#allocation2 + $0x730] sm:$0xff]
    %v2160 = vld [vmem:[#allocation2 + $0x738] sm:$0xff]
    %v2161 = vld [vmem:[#allocation2 + $0x740] sm:$0xff]
    %v2162 = vld [vmem:[#allocation2 + $0x748] sm:$0xff]
    %v2163 = vld [vmem:[#allocation2 + $0x750] sm:$0xff]
    %v2164 = vld [vmem:[#allocation2 + $0x758] sm:$0xff]
    %v2165 = vld [vmem:[#allocation2 + $0x760] sm:$0xff]
    %v2166 = vld [vmem:[#allocation2 + $0x768] sm:$0xff]
    %v2167 = vld [vmem:[#allocation2 + $0x770] sm:$0xff]
    %v2168 = vld [vmem:[#allocation2 + $0x778] sm:$0xff]
    %v2169 = vld [vmem:[#allocation2 + $0x780] sm:$0xff]
    %v2170 = vld [vmem:[#allocation2 + $0x788] sm:$0xff]
    %v2171 = vld [vmem:[#allocation2 + $0x790] sm:$0xff]
    %v2172 = vld [vmem:[#allocation2 + $0x798] sm:$0xff]
    %v2173 = vld [vmem:[#allocation2 + $0x7a0] sm:$0xff]
    %v2174 = vld [vmem:[#allocation2 + $0x7a8] sm:$0xff]
    %v2175 = vld [vmem:[#allocation2 + $0x7b0] sm:$0xff]
    %v2176 = vld [vmem:[#allocation2 + $0x7b8] sm:$0xff]
    %v2177 = vld [vmem:[#allocation2 + $0x7c0] sm:$0xff]
    %v2178 = vld [vmem:[#allocation2 + $0x7c8] sm:$0xff]
    %v2179 = vld [vmem:[#allocation2 + $0x7d0] sm:$0xff]
    %v2180 = vld [vmem:[#allocation2 + $0x7d8] sm:$0xff]
    %v2181 = vld [vmem:[#allocation2 + $0x7e0] sm:$0xff]
    %v2182 = vld [vmem:[#allocation2 + $0x7e8] sm:$0xff]
    %v2183 = vld [vmem:[#allocation2 + $0x7f0] sm:$0xff]
    %v2184 = vld [vmem:[#allocation2 + $0x7f8] sm:$0xff]
    %v2185 = vld [vmem:[#allocation2 + $0x800] sm:$0xff]
    %v2186 = vld [vmem:[#allocation2 + $0x808] sm:$0xff]
    %v2187 = vld [vmem:[#allocation2 + $0x810] sm:$0xff]
    %v2188 = vld [vmem:[#allocation2 + $0x818] sm:$0xff]
    %v2189 = vld [vmem:[#allocation2 + $0x820] sm:$0xff]
    %v2190 = vld [vmem:[#allocation2 + $0x828] sm:$0xff]
    %v2191 = vld [vmem:[#allocation2 + $0x830] sm:$0xff]
    %v2192 = vld [vmem:[#allocation2 + $0x838] sm:$0xff]
    %v2193 = vld [vmem:[#allocation2 + $0x840] sm:$0xff]
    %v2194 = vld [vmem:[#allocation2 + $0x848] sm:$0xff]
    %v2195 = vld [vmem:[#allocation2 + $0x850] sm:$0xff]
    %v2196 = vld [vmem:[#allocation2 + $0x858] sm:$0xff]
    %v2197 = vld [vmem:[#allocation2 + $0x860] sm:$0xff]
    %v2198 = vld [vmem:[#allocation2 + $0x868] sm:$0xff]
    %v2199 = vld [vmem:[#allocation2 + $0x870] sm:$0xff]
    %v2200 = vld [vmem:[#allocation2 + $0x878] sm:$0xff]
    %v2201 = vld [vmem:[#allocation2 + $0x880] sm:$0xff]
    %v2202 = vld [vmem:[#allocation2 + $0x888] sm:$0xff]
    %v2203 = vld [vmem:[#allocation2 + $0x890] sm:$0xff]
    %v2204 = vld [vmem:[#allocation2 + $0x898] sm:$0xff]
    %v2205 = vld [vmem:[#allocation2 + $0x8a0] sm:$0xff]
    %v2206 = vld [vmem:[#allocation2 + $0x8a8] sm:$0xff]
    %v2207 = vld [vmem:[#allocation2 + $0x8b0] sm:$0xff]
    %v2208 = vld [vmem:[#allocation2 + $0x8b8] sm:$0xff]
    %v2209 = vld [vmem:[#allocation2 + $0x8c0] sm:$0xff]
    %v2210 = vld [vmem:[#allocation2 + $0x8c8] sm:$0xff]
    %v2211 = vld [vmem:[#allocation2 + $0x8d0] sm:$0xff]
    %v2212 = vld [vmem:[#allocation2 + $0x8d8] sm:$0xff]
    %v2213 = vld [vmem:[#allocation2 + $0x8e0] sm:$0xff]
    %v2214 = vld [vmem:[#allocation2 + $0x8e8] sm:$0xff]
    %v2215 = vld [vmem:[#allocation2 + $0x8f0] sm:$0xff]
    %v2216 = vld [vmem:[#allocation2 + $0x8f8] sm:$0xff]
    %v2217 = vld [vmem:[#allocation2 + $0x900] sm:$0xff]
    %v2218 = vld [vmem:[#allocation2 + $0x908] sm:$0xff]
    %v2219 = vld [vmem:[#allocation2 + $0x910] sm:$0xff]
    %v2220 = vld [vmem:[#allocation2 + $0x918] sm:$0xff]
    %v2221 = vld [vmem:[#allocation2 + $0x920] sm:$0xff]
    %v2222 = vld [vmem:[#allocation2 + $0x928] sm:$0xff]
    %v2223 = vld [vmem:[#allocation2 + $0x930] sm:$0xff]
    %v2224 = vld [vmem:[#allocation2 + $0x938] sm:$0xff]
    %v2225 = vld [vmem:[#allocation2 + $0x940] sm:$0xff]
    %v2226 = vld [vmem:[#allocation2 + $0x948] sm:$0xff]
    %v2227 = vld [vmem:[#allocation2 + $0x950] sm:$0xff]
    %v2228 = vld [vmem:[#allocation2 + $0x958] sm:$0xff]
    %v2229 = vld [vmem:[#allocation2 + $0x960] sm:$0xff]
    %v2230 = vld [vmem:[#allocation2 + $0x968] sm:$0xff]
    %v2231 = vld [vmem:[#allocation2 + $0x970] sm:$0xff]
    %v2232 = vld [vmem:[#allocation2 + $0x978] sm:$0xff]
    %v2233 = vld [vmem:[#allocation2 + $0x980] sm:$0xff]
    %v2234 = vld [vmem:[#allocation2 + $0x988] sm:$0xff]
    %v2235 = vld [vmem:[#allocation2 + $0x990] sm:$0xff]
    %v2236 = vld [vmem:[#allocation2 + $0x998] sm:$0xff]
    %v2237 = vld [vmem:[#allocation2 + $0x9a0] sm:$0xff]
    %v2238 = vld [vmem:[#allocation2 + $0x9a8] sm:$0xff]
    %v2239 = vld [vmem:[#allocation2 + $0x9b0] sm:$0xff]
    %v2240 = vld [vmem:[#allocation2 + $0x9b8] sm:$0xff]
    %v2241 = vld [vmem:[#allocation2 + $0x9c0] sm:$0xff]
    %v2242 = vld [vmem:[#allocation2 + $0x9c8] sm:$0xff]
    %v2243 = vld [vmem:[#allocation2 + $0x9d0] sm:$0xff]
    %v2244 = vld [vmem:[#allocation2 + $0x9d8] sm:$0xff]
    %v2245 = vld [vmem:[#allocation2 + $0x9e0] sm:$0xff]
    %v2246 = vld [vmem:[#allocation2 + $0x9e8] sm:$0xff]
    %v2247 = vld [vmem:[#allocation2 + $0x9f0] sm:$0xff]
    %v2248 = vld [vmem:[#allocation2 + $0x9f8] sm:$0xff]
    %v2249 = vld [vmem:[#allocation2 + $0xa00] sm:$0xff]
    %v2250 = vld [vmem:[#allocation2 + $0xa08] sm:$0xff]
    %v2251 = vld [vmem:[#allocation2 + $0xa10] sm:$0xff]
    %v2252 = vld [vmem:[#allocation2 + $0xa18] sm:$0xff]
    %v2253 = vld [vmem:[#allocation2 + $0xa20] sm:$0xff]
    %v2254 = vld [vmem:[#allocation2 + $0xa28] sm:$0xff]
    %v2255 = vld [vmem:[#allocation2 + $0xa30] sm:$0xff]
    %v2256 = vld [vmem:[#allocation2 + $0xa38] sm:$0xff]
    %v2257 = vld [vmem:[#allocation2 + $0xa40] sm:$0xff]
    %v2258 = vld [vmem:[#allocation2 + $0xa48] sm:$0xff]
    %v2259 = vld [vmem:[#allocation2 + $0xa50] sm:$0xff]
    %v2260 = vld [vmem:[#allocation2 + $0xa58] sm:$0xff]
    %v2261 = vld [vmem:[#allocation2 + $0xa60] sm:$0xff]
    %v2262 = vld [vmem:[#allocation2 + $0xa68] sm:$0xff]
    %v2263 = vld [vmem:[#allocation2 + $0xa70] sm:$0xff]
    %v2264 = vld [vmem:[#allocation2 + $0xa78] sm:$0xff]
    %v2265 = vld [vmem:[#allocation2 + $0xa80] sm:$0xff]
    %v2266 = vld [vmem:[#allocation2 + $0xa88] sm:$0xff]
    %v2267 = vld [vmem:[#allocation2 + $0xa90] sm:$0xff]
    %v2268 = vld [vmem:[#allocation2 + $0xa98] sm:$0xff]
    %v2269 = vld [vmem:[#allocation2 + $0xaa0] sm:$0xff]
    %v2270 = vld [vmem:[#allocation2 + $0xaa8] sm:$0xff]
    %v2271 = vld [vmem:[#allocation2 + $0xab0] sm:$0xff]
    %v2272 = vld [vmem:[#allocation2 + $0xab8] sm:$0xff]
    %v2273 = vld [vmem:[#allocation2 + $0xac0] sm:$0xff]
    %v2274 = vld [vmem:[#allocation2 + $0xac8] sm:$0xff]
    %v2275 = vld [vmem:[#allocation2 + $0xad0] sm:$0xff]
    %v2276 = vld [vmem:[#allocation2 + $0xad8] sm:$0xff]
    %v2277 = vld [vmem:[#allocation2 + $0xae0] sm:$0xff]
    %v2278 = vld [vmem:[#allocation2 + $0xae8] sm:$0xff]
    %v2279 = vld [vmem:[#allocation2 + $0xaf0] sm:$0xff]
    %v2280 = vld [vmem:[#allocation2 + $0xaf8] sm:$0xff]
    %v2281 = vld [vmem:[#allocation2 + $0xb00] sm:$0xff]
    %v2282 = vld [vmem:[#allocation2 + $0xb08] sm:$0xff]
    %v2283 = vld [vmem:[#allocation2 + $0xb10] sm:$0xff]
    %v2284 = vld [vmem:[#allocation2 + $0xb18] sm:$0xff]
    %v2285 = vld [vmem:[#allocation2 + $0xb20] sm:$0xff]
    %v2286 = vld [vmem:[#allocation2 + $0xb28] sm:$0xff]
    %v2287 = vld [vmem:[#allocation2 + $0xb30] sm:$0xff]
    %v2288 = vld [vmem:[#allocation2 + $0xb38] sm:$0xff]
    %v2289 = vld [vmem:[#allocation2 + $0xb40] sm:$0xff]
    %v2290 = vld [vmem:[#allocation2 + $0xb48] sm:$0xff]
    %v2291 = vld [vmem:[#allocation2 + $0xb50] sm:$0xff]
    %v2292 = vld [vmem:[#allocation2 + $0xb58] sm:$0xff]
    %v2293 = vld [vmem:[#allocation2 + $0xb60] sm:$0xff]
    %v2294 = vld [vmem:[#allocation2 + $0xb68] sm:$0xff]
    %v2295 = vld [vmem:[#allocation2 + $0xb70] sm:$0xff]
    %v2296 = vld [vmem:[#allocation2 + $0xb78] sm:$0xff]
    %v2297 = vld [vmem:[#allocation2 + $0xb80] sm:$0xff]
    %v2298 = vld [vmem:[#allocation2 + $0xb88] sm:$0xff]
    %v2299 = vld [vmem:[#allocation2 + $0xb90] sm:$0xff]
    %v2300 = vld [vmem:[#allocation2 + $0xb98] sm:$0xff]
    %v2301 = vld [vmem:[#allocation2 + $0xba0] sm:$0xff]
    %v2302 = vld [vmem:[#allocation2 + $0xba8] sm:$0xff]
    %v2303 = vld [vmem:[#allocation2 + $0xbb0] sm:$0xff]
    %v2304 = vld [vmem:[#allocation2 + $0xbb8] sm:$0xff]
    %v2305 = vld [vmem:[#allocation2 + $0xbc0] sm:$0xff]
    %v2306 = vld [vmem:[#allocation2 + $0xbc8] sm:$0xff]
    %v2307 = vld [vmem:[#allocation2 + $0xbd0] sm:$0xff]
    %v2308 = vld [vmem:[#allocation2 + $0xbd8] sm:$0xff]
    %v2309 = vld [vmem:[#allocation2 + $0xbe0] sm:$0xff]
    %v2310 = vld [vmem:[#allocation2 + $0xbe8] sm:$0xff]
    %v2311 = vld [vmem:[#allocation2 + $0xbf0] sm:$0xff]
    %v2312 = vld [vmem:[#allocation2 + $0xbf8] sm:$0xff]
    %v2313 = vld [vmem:[#allocation2 + $0xc00] sm:$0xff]
    %v2314 = vld [vmem:[#allocation2 + $0xc08] sm:$0xff]
    %v2315 = vld [vmem:[#allocation2 + $0xc10] sm:$0xff]
    %v2316 = vld [vmem:[#allocation2 + $0xc18] sm:$0xff]
    %v2317 = vld [vmem:[#allocation2 + $0xc20] sm:$0xff]
    %v2318 = vld [vmem:[#allocation2 + $0xc28] sm:$0xff]
    %v2319 = vld [vmem:[#allocation2 + $0xc30] sm:$0xff]
    %v2320 = vld [vmem:[#allocation2 + $0xc38] sm:$0xff]
    %v2321 = vld [vmem:[#allocation2 + $0xc40] sm:$0xff]
    %v2322 = vld [vmem:[#allocation2 + $0xc48] sm:$0xff]
    %v2323 = vld [vmem:[#allocation2 + $0xc50] sm:$0xff]
    %v2324 = vld [vmem:[#allocation2 + $0xc58] sm:$0xff]
    %v2325 = vld [vmem:[#allocation2 + $0xc60] sm:$0xff]
    %v2326 = vld [vmem:[#allocation2 + $0xc68] sm:$0xff]
    %v2327 = vld [vmem:[#allocation2 + $0xc70] sm:$0xff]
    %v2328 = vld [vmem:[#allocation2 + $0xc78] sm:$0xff]
    %v2329 = vld [vmem:[#allocation2 + $0xc80] sm:$0xff]
    %v2330 = vld [vmem:[#allocation2 + $0xc88] sm:$0xff]
    %v2331 = vld [vmem:[#allocation2 + $0xc90] sm:$0xff]
    %v2332 = vld [vmem:[#allocation2 + $0xc98] sm:$0xff]
    %v2333 = vld [vmem:[#allocation2 + $0xca0] sm:$0xff]
    %v2334 = vld [vmem:[#allocation2 + $0xca8] sm:$0xff]
    %v2335 = vld [vmem:[#allocation2 + $0xcb0] sm:$0xff]
    %v2336 = vld [vmem:[#allocation2 + $0xcb8] sm:$0xff]
    %v2337 = vld [vmem:[#allocation2 + $0xcc0] sm:$0xff]
    %v2338 = vld [vmem:[#allocation2 + $0xcc8] sm:$0xff]
    %v2339 = vld [vmem:[#allocation2 + $0xcd0] sm:$0xff]
    %v2340 = vld [vmem:[#allocation2 + $0xcd8] sm:$0xff]
    %v2341 = vld [vmem:[#allocation2 + $0xce0] sm:$0xff]
    %v2342 = vld [vmem:[#allocation2 + $0xce8] sm:$0xff]
    %v2343 = vld [vmem:[#allocation2 + $0xcf0] sm:$0xff]
    %v2344 = vld [vmem:[#allocation2 + $0xcf8] sm:$0xff]
    %v2345 = vld [vmem:[#allocation2 + $0xd00] sm:$0xff]
    %v2346 = vld [vmem:[#allocation2 + $0xd08] sm:$0xff]
    %v2347 = vld [vmem:[#allocation2 + $0xd10] sm:$0xff]
    %v2348 = vld [vmem:[#allocation2 + $0xd18] sm:$0xff]
    %v2349 = vld [vmem:[#allocation2 + $0xd20] sm:$0xff]
    %v2350 = vld [vmem:[#allocation2 + $0xd28] sm:$0xff]
    %v2351 = vld [vmem:[#allocation2 + $0xd30] sm:$0xff]
    %v2352 = vld [vmem:[#allocation2 + $0xd38] sm:$0xff]
    %v2353 = vld [vmem:[#allocation2 + $0xd40] sm:$0xff]
    %v2354 = vld [vmem:[#allocation2 + $0xd48] sm:$0xff]
    %v2355 = vld [vmem:[#allocation2 + $0xd50] sm:$0xff]
    %v2356 = vld [vmem:[#allocation2 + $0xd58] sm:$0xff]
    %v2357 = vld [vmem:[#allocation2 + $0xd60] sm:$0xff]
    %v2358 = vld [vmem:[#allocation2 + $0xd68] sm:$0xff]
    %v2359 = vld [vmem:[#allocation2 + $0xd70] sm:$0xff]
    %v2360 = vld [vmem:[#allocation2 + $0xd78] sm:$0xff]
    %v2361 = vld [vmem:[#allocation2 + $0xd80] sm:$0xff]
    %v2362 = vld [vmem:[#allocation2 + $0xd88] sm:$0xff]
    %v2363 = vld [vmem:[#allocation2 + $0xd90] sm:$0xff]
    %v2364 = vld [vmem:[#allocation2 + $0xd98] sm:$0xff]
    %v2365 = vld [vmem:[#allocation2 + $0xda0] sm:$0xff]
    %v2366 = vld [vmem:[#allocation2 + $0xda8] sm:$0xff]
    %v2367 = vld [vmem:[#allocation2 + $0xdb0] sm:$0xff]
    %v2368 = vld [vmem:[#allocation2 + $0xdb8] sm:$0xff]
    %v2369 = vld [vmem:[#allocation2 + $0xdc0] sm:$0xff]
    %v2370 = vld [vmem:[#allocation2 + $0xdc8] sm:$0xff]
    %v2371 = vld [vmem:[#allocation2 + $0xdd0] sm:$0xff]
    %v2372 = vld [vmem:[#allocation2 + $0xdd8] sm:$0xff]
    %v2373 = vld [vmem:[#allocation2 + $0xde0] sm:$0xff]
    %v2374 = vld [vmem:[#allocation2 + $0xde8] sm:$0xff]
    %v2375 = vld [vmem:[#allocation2 + $0xdf0] sm:$0xff]
    %v2376 = vld [vmem:[#allocation2 + $0xdf8] sm:$0xff]
    %v2377 = vld [vmem:[#allocation3] sm:$0xff]
    %v2378 = vld [vmem:[#allocation3 + $0x8] sm:$0xff]
    %v2379 = vld [vmem:[#allocation3 + $0x10] sm:$0xff]
    %v2380 = vld [vmem:[#allocation3 + $0x18] sm:$0xff]
    %v2381 = vld [vmem:[#allocation3 + $0x20] sm:$0xff]
    %v2382 = vld [vmem:[#allocation3 + $0x28] sm:$0xff]
    %v2383 = vld [vmem:[#allocation3 + $0x30] sm:$0xff]
    %v2384 = vld [vmem:[#allocation3 + $0x38] sm:$0xff]
    %v2385 = vld [vmem:[#allocation3 + $0x40] sm:$0xff]
    %v2386 = vld [vmem:[#allocation3 + $0x48] sm:$0xff]
    %v2387 = vld [vmem:[#allocation3 + $0x50] sm:$0xff]
    %v2388 = vld [vmem:[#allocation3 + $0x58] sm:$0xff]
    %v2389 = vld [vmem:[#allocation3 + $0x60] sm:$0xff]
    %v2390 = vld [vmem:[#allocation3 + $0x68] sm:$0xff]
    %v2391 = vld [vmem:[#allocation3 + $0x70] sm:$0xff]
    %v2392 = vld [vmem:[#allocation3 + $0x78] sm:$0xff]
    %v2393 = vld [vmem:[#allocation3 + $0x80] sm:$0xff]
    %v2394 = vld [vmem:[#allocation3 + $0x88] sm:$0xff]
    %v2395 = vld [vmem:[#allocation3 + $0x90] sm:$0xff]
    %v2396 = vld [vmem:[#allocation3 + $0x98] sm:$0xff]
    %v2397 = vld [vmem:[#allocation3 + $0xa0] sm:$0xff]
    %v2398 = vld [vmem:[#allocation3 + $0xa8] sm:$0xff]
    %v2399 = vld [vmem:[#allocation3 + $0xb0] sm:$0xff]
    %v2400 = vld [vmem:[#allocation3 + $0xb8] sm:$0xff]
    %v2401 = vld [vmem:[#allocation3 + $0xc0] sm:$0xff]
    %v2402 = vld [vmem:[#allocation3 + $0xc8] sm:$0xff]
    %v2403 = vld [vmem:[#allocation3 + $0xd0] sm:$0xff]
    %v2404 = vld [vmem:[#allocation3 + $0xd8] sm:$0xff]
    %v2405 = vld [vmem:[#allocation3 + $0xe0] sm:$0xff]
    %v2406 = vld [vmem:[#allocation3 + $0xe8] sm:$0xff]
    %v2407 = vld [vmem:[#allocation3 + $0xf0] sm:$0xff]
    %v2408 = vld [vmem:[#allocation3 + $0xf8] sm:$0xff]
    %v2409 = vld [vmem:[#allocation3 + $0x100] sm:$0xff]
    %v2410 = vld [vmem:[#allocation3 + $0x108] sm:$0xff]
    %v2411 = vld [vmem:[#allocation3 + $0x110] sm:$0xff]
    %v2412 = vld [vmem:[#allocation3 + $0x118] sm:$0xff]
    %v2413 = vld [vmem:[#allocation3 + $0x120] sm:$0xff]
    %v2414 = vld [vmem:[#allocation3 + $0x128] sm:$0xff]
    %v2415 = vld [vmem:[#allocation3 + $0x130] sm:$0xff]
    %v2416 = vld [vmem:[#allocation3 + $0x138] sm:$0xff]
    %v2417 = vld [vmem:[#allocation3 + $0x140] sm:$0xff]
    %v2418 = vld [vmem:[#allocation3 + $0x148] sm:$0xff]
    %v2419 = vld [vmem:[#allocation3 + $0x150] sm:$0xff]
    %v2420 = vld [vmem:[#allocation3 + $0x158] sm:$0xff]
    %v2421 = vld [vmem:[#allocation3 + $0x160] sm:$0xff]
    %v2422 = vld [vmem:[#allocation3 + $0x168] sm:$0xff]
    %v2423 = vld [vmem:[#allocation3 + $0x170] sm:$0xff]
    %v2424 = vld [vmem:[#allocation3 + $0x178] sm:$0xff]
    %v2425 = vld [vmem:[#allocation3 + $0x180] sm:$0xff]
    %v2426 = vld [vmem:[#allocation3 + $0x188] sm:$0xff]
    %v2427 = vld [vmem:[#allocation3 + $0x190] sm:$0xff]
    %v2428 = vld [vmem:[#allocation3 + $0x198] sm:$0xff]
    %v2429 = vld [vmem:[#allocation3 + $0x1a0] sm:$0xff]
    %v2430 = vld [vmem:[#allocation3 + $0x1a8] sm:$0xff]
    %v2431 = vld [vmem:[#allocation3 + $0x1b0] sm:$0xff]
    %v2432 = vld [vmem:[#allocation3 + $0x1b8] sm:$0xff]
    %v2433 = vld [vmem:[#allocation3 + $0x1c0] sm:$0xff]
    %v2434 = vld [vmem:[#allocation3 + $0x1c8] sm:$0xff]
    %v2435 = vld [vmem:[#allocation3 + $0x1d0] sm:$0xff]
    %v2436 = vld [vmem:[#allocation3 + $0x1d8] sm:$0xff]
    %v2437 = vld [vmem:[#allocation3 + $0x1e0] sm:$0xff]
    %v2438 = vld [vmem:[#allocation3 + $0x1e8] sm:$0xff]
    %v2439 = vld [vmem:[#allocation3 + $0x1f0] sm:$0xff]
    %v2440 = vld [vmem:[#allocation3 + $0x1f8] sm:$0xff]
    %v2441 = vpack.c.bf16 %v1412, %v1412
    %v2442 = vpack.c.bf16 %v1413, %v1413
    %v2443 = vpack.c.bf16 %v1414, %v1414
    %v2444 = vpack.c.bf16 %v1480, %v1480
    %v2445 = vpack.c.bf16 %v1481, %v1481
    %v2446 = vpack.c.bf16 %v1482, %v1482
    %v2447 = vpack.c.bf16 %v1913, %v1913
    %v2448 = vld [vmem:[#allocation19] sm:$0xff]
    %v2450 = vlaneseq
    %v2451 = vshrl.u32 %v2450, 7
    %v2452 = vsub.s32 0, %v2451
    %v2453 = vrot.slane %v2448, %v2452
    %v2454 = vlaneseq
    %v2455 = vshrl.u32 %v2454, 7
    %v2456 = vsub.s32 1, %v2455
    %v2457 = vrot.slane %v2448, %v2456
    %v2458 = vlaneseq
    %v2459 = vshrl.u32 %v2458, 7
    %v2460 = vsub.s32 2, %v2459
    %v2461 = vrot.slane %v2448, %v2460
    %v2462 = vlaneseq
    %v2463 = vshrl.u32 %v2462, 7
    %v2464 = vsub.s32 3, %v2463
    %v2465 = vrot.slane %v2448, %v2464
    %v2466 = vlaneseq
    %v2467 = vshrl.u32 %v2466, 7
    %v2468 = vsub.s32 4, %v2467
    %v2469 = vrot.slane %v2448, %v2468
    %v2470 = vlaneseq
    %v2471 = vshrl.u32 %v2470, 7
    %v2472 = vsub.s32 5, %v2471
    %v2473 = vrot.slane %v2448, %v2472
    %v2474 = vlaneseq
    %v2475 = vshrl.u32 %v2474, 7
    %v2476 = vsub.s32 6, %v2475
    %v2477 = vrot.slane %v2448, %v2476
    %v2478 = vlaneseq
    %v2479 = vshrl.u32 %v2478, 7
    %v2480 = vsub.s32 7, %v2479
    %v2481 = vrot.slane %v2448, %v2480
    %2490 = vmatprep.subr.bf16.mxu0 %v1930
    %2491 = vmatpush1.bf16.msra.mxu0 %v1929
    %2492 = vmatprep.subr.bf16.mxu0 %v1938
    %2493 = vmatpush1.bf16.msra.mxu0 %v1937
    %2494 = vmatprep.subr.bf16.mxu0 %v1946
    %2495 = vmatpush1.bf16.msra.mxu0 %v1945
    %2496 = vmatprep.subr.bf16.mxu0 %v1954
    %2497 = vmatpush1.bf16.msra.mxu0 %v1953
    %2498 = vmatprep.subr.bf16.mxu0 %v1962
    %2499 = vmatpush1.bf16.msra.mxu0 %v1961
    %2500 = vmatprep.subr.bf16.mxu0 %v1970
    %2501 = vmatpush1.bf16.msra.mxu0 %v1969
    %2502 = vmatprep.subr.bf16.mxu0 %v1978
    %2503 = vmatpush1.bf16.msra.mxu0 %v1977
    %2504 = vmatprep.subr.bf16.mxu0 %v1986
    %2505 = vmatpush1.bf16.msra.mxu0 %v1985
    %2506 = vmatprep.subr.bf16.mxu0 %v1994
    %2507 = vmatpush1.bf16.msra.mxu0 %v1993
    %2508 = vmatprep.subr.bf16.mxu0 %v2002
    %2509 = vmatpush1.bf16.msra.mxu0 %v2001
    %2510 = vmatprep.subr.bf16.mxu0 %v2010
    %2511 = vmatpush1.bf16.msra.mxu0 %v2009
    %2512 = vmatprep.subr.bf16.mxu0 %v2018
    %2513 = vmatpush1.bf16.msra.mxu0 %v2017
    %2514 = vmatprep.subr.bf16.mxu0 %v2026
    %2515 = vmatpush1.bf16.msra.mxu0 %v2025
    %2516 = vmatprep.subr.bf16.mxu0 %v2034
    %2517 = vmatpush1.bf16.msra.mxu0 %v2033
    %2518 = vmatprep.subr.bf16.mxu0 %v2042
    %2519 = vmatpush1.bf16.msra.mxu0 %v2041
    %2520 = vmatprep.subr.bf16.mxu0 %v2050
    %2521 = vmatpush1.bf16.msra.mxu0 %v2049
    %2522 = vmatprep.mubr.bf16.mxu0 %v2442
    %2523 = vmatmul.mubr.bf16.gmra.mrb[0].mxu0 %v2441
    %v2524 = vpop.f32.mrb[0].mxu0
    %v2525 = vadd.f32 %v2453, %v2524
    %v2526 = vpop.f32.mrb[0].mxu0
    %v2527 = vadd.f32 %v2457, %v2526
    %v2528 = vpop.f32.mrb[0].mxu0
    %v2529 = vpop.f32.mrb[0].mxu0
    %2530 = vdwg.mxu0
    %2531 = vmatprep.subr.bf16.mxu0 %v2058
    %2532 = vmatpush1.bf16.msra.mxu0 %v2057
    %2533 = vmatprep.subr.bf16.mxu0 %v2066
    %2534 = vmatpush1.bf16.msra.mxu0 %v2065
    %2535 = vmatprep.subr.bf16.mxu0 %v2074
    %2536 = vmatpush1.bf16.msra.mxu0 %v2073
    %2537 = vmatprep.subr.bf16.mxu0 %v2082
    %2538 = vmatpush1.bf16.msra.mxu0 %v2081
    %2539 = vmatprep.subr.bf16.mxu0 %v2090
    %2540 = vmatpush1.bf16.msra.mxu0 %v2089
    %2541 = vmatprep.subr.bf16.mxu0 %v2098
    %2542 = vmatpush1.bf16.msra.mxu0 %v2097
    %2543 = vmatprep.subr.bf16.mxu0 %v2106
    %2544 = vmatpush1.bf16.msra.mxu0 %v2105
    %2545 = vmatprep.subr.bf16.mxu0 %v2114
    %2546 = vmatpush1.bf16.msra.mxu0 %v2113
    %2547 = vmatprep.subr.bf16.mxu0 %v2122
    %2548 = vmatpush1.bf16.msra.mxu0 %v2121
    %2549 = vmatprep.subr.bf16.mxu0 %v2130
    %2550 = vmatpush1.bf16.msra.mxu0 %v2129
    %2551 = vmatprep.subr.bf16.mxu0 %v2138
    %2552 = vmatpush1.bf16.msra.mxu0 %v2137
    %2553 = vmatprep.subr.bf16.mxu0 %v2146
    %2554 = vmatpush1.bf16.msra.mxu0 %v2145
    %2555 = vmatprep.subr.bf16.mxu0 %v2154
    %2556 = vmatpush1.bf16.msra.mxu0 %v2153
    %2557 = vmatprep.subr.bf16.mxu0 %v2162
    %2558 = vmatpush1.bf16.msra.mxu0 %v2161
    %2559 = vmatprep.subr.bf16.mxu0 %v2170
    %2560 = vmatpush1.bf16.msra.mxu0 %v2169
    %2561 = vmatprep.subr.bf16.mxu0 %v2178
    %2562 = vmatpush1.bf16.msra.mxu0 %v2177
    %2563 = vmatprep.mubr.bf16.mxu0 %v2444
    %2564 = vmatmul.mubr.bf16.gmra.mrb[0].mxu0 %v2443
    %v2565 = vpop.f32.mrb[0].mxu0
    %v2566 = vadd.f32 %v2525, %v2565
    %v2567 = vpop.f32.mrb[0].mxu0
    %v2568 = vadd.f32 %v2527, %v2567
    %v2569 = vpop.f32.mrb[0].mxu0
    %v2570 = vpop.f32.mrb[0].mxu0
    %2571 = vdwg.mxu0
    %2572 = vmatprep.subr.bf16.mxu0 %v2186
    %2573 = vmatpush1.bf16.msra.mxu0 %v2185
    %2574 = vmatprep.subr.bf16.mxu0 %v2194
    %2575 = vmatpush1.bf16.msra.mxu0 %v2193
    %2576 = vmatprep.subr.bf16.mxu0 %v2202
    %2577 = vmatpush1.bf16.msra.mxu0 %v2201
    %2578 = vmatprep.subr.bf16.mxu0 %v2210
    %2579 = vmatpush1.bf16.msra.mxu0 %v2209
    %2580 = vmatprep.subr.bf16.mxu0 %v2218
    %2581 = vmatpush1.bf16.msra.mxu0 %v2217
    %2582 = vmatprep.subr.bf16.mxu0 %v2226
    %2583 = vmatpush1.bf16.msra.mxu0 %v2225
    %2584 = vmatprep.subr.bf16.mxu0 %v2234
    %2585 = vmatpush1.bf16.msra.mxu0 %v2233
    %2586 = vmatprep.subr.bf16.mxu0 %v2242
    %2587 = vmatpush1.bf16.msra.mxu0 %v2241
    %2588 = vmatprep.subr.bf16.mxu0 %v2250
    %2589 = vmatpush1.bf16.msra.mxu0 %v2249
    %2590 = vmatprep.subr.bf16.mxu0 %v2258
    %2591 = vmatpush1.bf16.msra.mxu0 %v2257
    %2592 = vmatprep.subr.bf16.mxu0 %v2266
    %2593 = vmatpush1.bf16.msra.mxu0 %v2265
    %2594 = vmatprep.subr.bf16.mxu0 %v2274
    %2595 = vmatpush1.bf16.msra.mxu0 %v2273
    %2596 = vmatprep.subr.bf16.mxu0 %v2282
    %2597 = vmatpush1.bf16.msra.mxu0 %v2281
    %2598 = vmatprep.subr.bf16.mxu0 %v2290
    %2599 = vmatpush1.bf16.msra.mxu0 %v2289
    %2600 = vmatprep.subr.bf16.mxu0 %v2298
    %2601 = vmatpush1.bf16.msra.mxu0 %v2297
    %2602 = vmatprep.subr.bf16.mxu0 %v2306
    %2603 = vmatpush1.bf16.msra.mxu0 %v2305
    %2604 = vmatprep.mubr.bf16.mxu0 %v2446
    %2605 = vmatmul.mubr.bf16.gmra.mrb[0].mxu0 %v2445
    %v2606 = vpop.f32.mrb[0].mxu0
    %v2607 = vadd.f32 %v2566, %v2606
    %v2608 = vpop.f32.mrb[0].mxu0
    %v2609 = vadd.f32 %v2568, %v2608
    %v2610 = vpop.f32.mrb[0].mxu0
    %v2611 = vpop.f32.mrb[0].mxu0
    %2612 = vdwg.mxu0
    %2613 = vmatprep.subr.bf16.mxu0 %v2314
    %2614 = vmatpush1.bf16.msra.mxu0 %v2313
    %2615 = vmatprep.subr.bf16.mxu0 %v2322
    %2616 = vmatpush1.bf16.msra.mxu0 %v2321
    %2617 = vmatprep.subr.bf16.mxu0 %v2330
    %2618 = vmatpush1.bf16.msra.mxu0 %v2329
    %2619 = vmatprep.subr.bf16.mxu0 %v2338
    %2620 = vmatpush1.bf16.msra.mxu0 %v2337
    %2621 = vmatprep.subr.bf16.mxu0 %v2346
    %2622 = vmatpush1.bf16.msra.mxu0 %v2345
    %2623 = vmatprep.subr.bf16.mxu0 %v2354
    %2624 = vmatpush1.bf16.msra.mxu0 %v2353
    %2625 = vmatprep.subr.bf16.mxu0 %v2362
    %2626 = vmatpush1.bf16.msra.mxu0 %v2361
    %2627 = vmatprep.subr.bf16.mxu0 %v2370
    %2628 = vmatpush1.bf16.msra.mxu0 %v2369
    %2629 = vmatprep.subr.bf16.mxu0 0
    %2630 = vmatpush1.bf16.msra.mxu0 0
    %2631 = vmatprep.subr.bf16.mxu0 0
    %2632 = vmatpush1.bf16.msra.mxu0 0
    %2633 = vmatprep.subr.bf16.mxu0 0
    %2634 = vmatpush1.bf16.msra.mxu0 0
    %2635 = vmatprep.subr.bf16.mxu0 0
    %2636 = vmatpush1.bf16.msra.mxu0 0
    %2637 = vmatprep.subr.bf16.mxu0 0
    %2638 = vmatpush1.bf16.msra.mxu0 0
    %2639 = vmatprep.subr.bf16.mxu0 0
    %2640 = vmatpush1.bf16.msra.mxu0 0
    %2641 = vmatprep.subr.bf16.mxu0 0
    %2642 = vmatpush1.bf16.msra.mxu0 0
    %2643 = vmatprep.subr.bf16.mxu0 0
    %2644 = vmatpush1.bf16.msra.mxu0 0
    %2645 = vmatprep.mubr.bf16.mxu0 0
    %2646 = vmatmul.mubr.bf16.gmra.mrb[0].mxu0 %v2447
    %v2647 = vpop.f32.mrb[0].mxu0
    %v2648 = vadd.f32 %v2607, %v2647
    %v2649 = vpop.f32.mrb[0].mxu0
    %v2650 = vadd.f32 %v2609, %v2649
    %v2651 = vpop.f32.mrb[0].mxu0
    %v2652 = vpop.f32.mrb[0].mxu0
    %2653 = vdwg.mxu0
    %2654 = vmatprep.subr.bf16.mxu0 %v1932
    %2655 = vmatpush1.bf16.msra.mxu0 %v1931
    %2656 = vmatprep.subr.bf16.mxu0 %v1940
    %2657 = vmatpush1.bf16.msra.mxu0 %v1939
    %2658 = vmatprep.subr.bf16.mxu0 %v1948
    %2659 = vmatpush1.bf16.msra.mxu0 %v1947
    %2660 = vmatprep.subr.bf16.mxu0 %v1956
    %2661 = vmatpush1.bf16.msra.mxu0 %v1955
    %2662 = vmatprep.subr.bf16.mxu0 %v1964
    %2663 = vmatpush1.bf16.msra.mxu0 %v1963
    %2664 = vmatprep.subr.bf16.mxu0 %v1972
    %2665 = vmatpush1.bf16.msra.mxu0 %v1971
    %2666 = vmatprep.subr.bf16.mxu0 %v1980
    %2667 = vmatpush1.bf16.msra.mxu0 %v1979
    %2668 = vmatprep.subr.bf16.mxu0 %v1988
    %2669 = vmatpush1.bf16.msra.mxu0 %v1987
    %2670 = vmatprep.subr.bf16.mxu0 %v1996
    %2671 = vmatpush1.bf16.msra.mxu0 %v1995
    %2672 = vmatprep.subr.bf16.mxu0 %v2004
    %2673 = vmatpush1.bf16.msra.mxu0 %v2003
    %2674 = vmatprep.subr.bf16.mxu0 %v2012
    %2675 = vmatpush1.bf16.msra.mxu0 %v2011
    %2676 = vmatprep.subr.bf16.mxu0 %v2020
    %2677 = vmatpush1.bf16.msra.mxu0 %v2019
    %2678 = vmatprep.subr.bf16.mxu0 %v2028
    %2679 = vmatpush1.bf16.msra.mxu0 %v2027
    %2680 = vmatprep.subr.bf16.mxu0 %v2036
    %2681 = vmatpush1.bf16.msra.mxu0 %v2035
    %2682 = vmatprep.subr.bf16.mxu0 %v2044
    %2683 = vmatpush1.bf16.msra.mxu0 %v2043
    %2684 = vmatprep.subr.bf16.mxu0 %v2052
    %2685 = vmatpush1.bf16.msra.mxu0 %v2051
    %2686 = vmatprep.mubr.bf16.mxu0 %v2442
    %2687 = vmatmul.mubr.bf16.gmra.mrb[0].mxu0 %v2441
    %v2688 = vpop.f32.mrb[0].mxu0
    %v2689 = vadd.f32 %v2461, %v2688
    %v2690 = vpop.f32.mrb[0].mxu0
    %v2691 = vadd.f32 %v2465, %v2690
    %v2692 = vpop.f32.mrb[0].mxu0
    %v2693 = vpop.f32.mrb[0].mxu0
    %2694 = vdwg.mxu0
    %2695 = vmatprep.subr.bf16.mxu0 %v2060
    %2696 = vmatpush1.bf16.msra.mxu0 %v2059
    %2697 = vmatprep.subr.bf16.mxu0 %v2068
    %2698 = vmatpush1.bf16.msra.mxu0 %v2067
    %2699 = vmatprep.subr.bf16.mxu0 %v2076
    %2700 = vmatpush1.bf16.msra.mxu0 %v2075
    %2701 = vmatprep.subr.bf16.mxu0 %v2084
    %2702 = vmatpush1.bf16.msra.mxu0 %v2083
    %2703 = vmatprep.subr.bf16.mxu0 %v2092
    %2704 = vmatpush1.bf16.msra.mxu0 %v2091
    %2705 = vmatprep.subr.bf16.mxu0 %v2100
    %2706 = vmatpush1.bf16.msra.mxu0 %v2099
    %2707 = vmatprep.subr.bf16.mxu0 %v2108
    %2708 = vmatpush1.bf16.msra.mxu0 %v2107
    %2709 = vmatprep.subr.bf16.mxu0 %v2116
    %2710 = vmatpush1.bf16.msra.mxu0 %v2115
    %2711 = vmatprep.subr.bf16.mxu0 %v2124
    %2712 = vmatpush1.bf16.msra.mxu0 %v2123
    %2713 = vmatprep.subr.bf16.mxu0 %v2132
    %2714 = vmatpush1.bf16.msra.mxu0 %v2131
    %2715 = vmatprep.subr.bf16.mxu0 %v2140
    %2716 = vmatpush1.bf16.msra.mxu0 %v2139
    %2717 = vmatprep.subr.bf16.mxu0 %v2148
    %2718 = vmatpush1.bf16.msra.mxu0 %v2147
    %2719 = vmatprep.subr.bf16.mxu0 %v2156
    %2720 = vmatpush1.bf16.msra.mxu0 %v2155
    %2721 = vmatprep.subr.bf16.mxu0 %v2164
    %2722 = vmatpush1.bf16.msra.mxu0 %v2163
    %2723 = vmatprep.subr.bf16.mxu0 %v2172
    %2724 = vmatpush1.bf16.msra.mxu0 %v2171
    %2725 = vmatprep.subr.bf16.mxu0 %v2180
    %2726 = vmatpush1.bf16.msra.mxu0 %v2179
    %2727 = vmatprep.mubr.bf16.mxu0 %v2444
    %2728 = vmatmul.mubr.bf16.gmra.mrb[0].mxu0 %v2443
    %v2729 = vpop.f32.mrb[0].mxu0
    %v2730 = vadd.f32 %v2689, %v2729
    %v2731 = vpop.f32.mrb[0].mxu0
    %v2732 = vadd.f32 %v2691, %v2731
    %v2733 = vpop.f32.mrb[0].mxu0
    %v2734 = vpop.f32.mrb[0].mxu0
    %2735 = vdwg.mxu0
    %2736 = vmatprep.subr.bf16.mxu0 %v2188
    %2737 = vmatpush1.bf16.msra.mxu0 %v2187
    %2738 = vmatprep.subr.bf16.mxu0 %v2196
    %2739 = vmatpush1.bf16.msra.mxu0 %v2195
    %2740 = vmatprep.subr.bf16.mxu0 %v2204
    %2741 = vmatpush1.bf16.msra.mxu0 %v2203
    %2742 = vmatprep.subr.bf16.mxu0 %v2212
    %2743 = vmatpush1.bf16.msra.mxu0 %v2211
    %2744 = vmatprep.subr.bf16.mxu0 %v2220
    %2745 = vmatpush1.bf16.msra.mxu0 %v2219
    %2746 = vmatprep.subr.bf16.mxu0 %v2228
    %2747 = vmatpush1.bf16.msra.mxu0 %v2227
    %2748 = vmatprep.subr.bf16.mxu0 %v2236
    %2749 = vmatpush1.bf16.msra.mxu0 %v2235
    %2750 = vmatprep.subr.bf16.mxu0 %v2244
    %2751 = vmatpush1.bf16.msra.mxu0 %v2243
    %2752 = vmatprep.subr.bf16.mxu0 %v2252
    %2753 = vmatpush1.bf16.msra.mxu0 %v2251
    %2754 = vmatprep.subr.bf16.mxu0 %v2260
    %2755 = vmatpush1.bf16.msra.mxu0 %v2259
    %2756 = vmatprep.subr.bf16.mxu0 %v2268
    %2757 = vmatpush1.bf16.msra.mxu0 %v2267
    %2758 = vmatprep.subr.bf16.mxu0 %v2276
    %2759 = vmatpush1.bf16.msra.mxu0 %v2275
    %2760 = vmatprep.subr.bf16.mxu0 %v2284
    %2761 = vmatpush1.bf16.msra.mxu0 %v2283
    %2762 = vmatprep.subr.bf16.mxu0 %v2292
    %2763 = vmatpush1.bf16.msra.mxu0 %v2291
    %2764 = vmatprep.subr.bf16.mxu0 %v2300
    %2765 = vmatpush1.bf16.msra.mxu0 %v2299
    %2766 = vmatprep.subr.bf16.mxu0 %v2308
    %2767 = vmatpush1.bf16.msra.mxu0 %v2307
    %2768 = vmatprep.mubr.bf16.mxu0 %v2446
    %2769 = vmatmul.mubr.bf16.gmra.mrb[0].mxu0 %v2445
    %v2770 = vpop.f32.mrb[0].mxu0
    %v2771 = vadd.f32 %v2730, %v2770
    %v2772 = vpop.f32.mrb[0].mxu0
    %v2773 = vadd.f32 %v2732, %v2772
    %v2774 = vpop.f32.mrb[0].mxu0
    %v2775 = vpop.f32.mrb[0].mxu0
    %2776 = vdwg.mxu0
    %2777 = vmatprep.subr.bf16.mxu0 %v2316
    %2778 = vmatpush1.bf16.msra.mxu0 %v2315
    %2779 = vmatprep.subr.bf16.mxu0 %v2324
    %2780 = vmatpush1.bf16.msra.mxu0 %v2323
    %2781 = vmatprep.subr.bf16.mxu0 %v2332
    %2782 = vmatpush1.bf16.msra.mxu0 %v2331
    %2783 = vmatprep.subr.bf16.mxu0 %v2340
    %2784 = vmatpush1.bf16.msra.mxu0 %v2339
    %2785 = vmatprep.subr.bf16.mxu0 %v2348
    %2786 = vmatpush1.bf16.msra.mxu0 %v2347
    %2787 = vmatprep.subr.bf16.mxu0 %v2356
    %2788 = vmatpush1.bf16.msra.mxu0 %v2355
    %2789 = vmatprep.subr.bf16.mxu0 %v2364
    %2790 = vmatpush1.bf16.msra.mxu0 %v2363
    %2791 = vmatprep.subr.bf16.mxu0 %v2372
    %2792 = vmatpush1.bf16.msra.mxu0 %v2371
    %2793 = vmatprep.subr.bf16.mxu0 0
    %2794 = vmatpush1.bf16.msra.mxu0 0
    %2795 = vmatprep.subr.bf16.mxu0 0
    %2796 = vmatpush1.bf16.msra.mxu0 0
    %2797 = vmatprep.subr.bf16.mxu0 0
    %2798 = vmatpush1.bf16.msra.mxu0 0
    %2799 = vmatprep.subr.bf16.mxu0 0
    %2800 = vmatpush1.bf16.msra.mxu0 0
    %2801 = vmatprep.subr.bf16.mxu0 0
    %2802 = vmatpush1.bf16.msra.mxu0 0
    %2803 = vmatprep.subr.bf16.mxu0 0
    %2804 = vmatpush1.bf16.msra.mxu0 0
    %2805 = vmatprep.subr.bf16.mxu0 0
    %2806 = vmatpush1.bf16.msra.mxu0 0
    %2807 = vmatprep.subr.bf16.mxu0 0
    %2808 = vmatpush1.bf16.msra.mxu0 0
    %2809 = vmatprep.mubr.bf16.mxu0 0
    %2810 = vmatmul.mubr.bf16.gmra.mrb[0].mxu0 %v2447
    %v2811 = vpop.f32.mrb[0].mxu0
    %v2812 = vadd.f32 %v2771, %v2811
    %v2813 = vpop.f32.mrb[0].mxu0
    %v2814 = vadd.f32 %v2773, %v2813
    %v2815 = vpop.f32.mrb[0].mxu0
    %v2816 = vpop.f32.mrb[0].mxu0
    %2817 = vdwg.mxu0
    %2818 = vmatprep.subr.bf16.mxu0 %v1934
    %2819 = vmatpush1.bf16.msra.mxu0 %v1933
    %2820 = vmatprep.subr.bf16.mxu0 %v1942
    %2821 = vmatpush1.bf16.msra.mxu0 %v1941
    %2822 = vmatprep.subr.bf16.mxu0 %v1950
    %2823 = vmatpush1.bf16.msra.mxu0 %v1949
    %2824 = vmatprep.subr.bf16.mxu0 %v1958
    %2825 = vmatpush1.bf16.msra.mxu0 %v1957
    %2826 = vmatprep.subr.bf16.mxu0 %v1966
    %2827 = vmatpush1.bf16.msra.mxu0 %v1965
    %2828 = vmatprep.subr.bf16.mxu0 %v1974
    %2829 = vmatpush1.bf16.msra.mxu0 %v1973
    %2830 = vmatprep.subr.bf16.mxu0 %v1982
    %2831 = vmatpush1.bf16.msra.mxu0 %v1981
    %2832 = vmatprep.subr.bf16.mxu0 %v1990
    %2833 = vmatpush1.bf16.msra.mxu0 %v1989
    %2834 = vmatprep.subr.bf16.mxu0 %v1998
    %2835 = vmatpush1.bf16.msra.mxu0 %v1997
    %2836 = vmatprep.subr.bf16.mxu0 %v2006
    %2837 = vmatpush1.bf16.msra.mxu0 %v2005
    %2838 = vmatprep.subr.bf16.mxu0 %v2014
    %2839 = vmatpush1.bf16.msra.mxu0 %v2013
    %2840 = vmatprep.subr.bf16.mxu0 %v2022
    %2841 = vmatpush1.bf16.msra.mxu0 %v2021
    %2842 = vmatprep.subr.bf16.mxu0 %v2030
    %2843 = vmatpush1.bf16.msra.mxu0 %v2029
    %2844 = vmatprep.subr.bf16.mxu0 %v2038
    %2845 = vmatpush1.bf16.msra.mxu0 %v2037
    %2846 = vmatprep.subr.bf16.mxu0 %v2046
    %2847 = vmatpush1.bf16.msra.mxu0 %v2045
    %2848 = vmatprep.subr.bf16.mxu0 %v2054
    %2849 = vmatpush1.bf16.msra.mxu0 %v2053
    %2850 = vmatprep.mubr.bf16.mxu0 %v2442
    %2851 = vmatmul.mubr.bf16.gmra.mrb[0].mxu0 %v2441
    %v2852 = vpop.f32.mrb[0].mxu0
    %v2853 = vadd.f32 %v2469, %v2852
    %v2854 = vpop.f32.mrb[0].mxu0
    %v2855 = vadd.f32 %v2473, %v2854
    %v2856 = vpop.f32.mrb[0].mxu0
    %v2857 = vpop.f32.mrb[0].mxu0
    %2858 = vdwg.mxu0
    %2859 = vmatprep.subr.bf16.mxu0 %v2062
    %2860 = vmatpush1.bf16.msra.mxu0 %v2061
    %2861 = vmatprep.subr.bf16.mxu0 %v2070
    %2862 = vmatpush1.bf16.msra.mxu0 %v2069
    %2863 = vmatprep.subr.bf16.mxu0 %v2078
    %2864 = vmatpush1.bf16.msra.mxu0 %v2077
    %2865 = vmatprep.subr.bf16.mxu0 %v2086
    %2866 = vmatpush1.bf16.msra.mxu0 %v2085
    %2867 = vmatprep.subr.bf16.mxu0 %v2094
    %2868 = vmatpush1.bf16.msra.mxu0 %v2093
    %2869 = vmatprep.subr.bf16.mxu0 %v2102
    %2870 = vmatpush1.bf16.msra.mxu0 %v2101
    %2871 = vmatprep.subr.bf16.mxu0 %v2110
    %2872 = vmatpush1.bf16.msra.mxu0 %v2109
    %2873 = vmatprep.subr.bf16.mxu0 %v2118
    %2874 = vmatpush1.bf16.msra.mxu0 %v2117
    %2875 = vmatprep.subr.bf16.mxu0 %v2126
    %2876 = vmatpush1.bf16.msra.mxu0 %v2125
    %2877 = vmatprep.subr.bf16.mxu0 %v2134
    %2878 = vmatpush1.bf16.msra.mxu0 %v2133
    %2879 = vmatprep.subr.bf16.mxu0 %v2142
    %2880 = vmatpush1.bf16.msra.mxu0 %v2141
    %2881 = vmatprep.subr.bf16.mxu0 %v2150
    %2882 = vmatpush1.bf16.msra.mxu0 %v2149
    %2883 = vmatprep.subr.bf16.mxu0 %v2158
    %2884 = vmatpush1.bf16.msra.mxu0 %v2157
    %2885 = vmatprep.subr.bf16.mxu0 %v2166
    %2886 = vmatpush1.bf16.msra.mxu0 %v2165
    %2887 = vmatprep.subr.bf16.mxu0 %v2174
    %2888 = vmatpush1.bf16.msra.mxu0 %v2173
    %2889 = vmatprep.subr.bf16.mxu0 %v2182
    %2890 = vmatpush1.bf16.msra.mxu0 %v2181
    %2891 = vmatprep.mubr.bf16.mxu0 %v2444
    %2892 = vmatmul.mubr.bf16.gmra.mrb[0].mxu0 %v2443
    %v2893 = vpop.f32.mrb[0].mxu0
    %v2894 = vadd.f32 %v2853, %v2893
    %v2895 = vpop.f32.mrb[0].mxu0
    %v2896 = vadd.f32 %v2855, %v2895
    %v2897 = vpop.f32.mrb[0].mxu0
    %v2898 = vpop.f32.mrb[0].mxu0
    %2899 = vdwg.mxu0
    %2900 = vmatprep.subr.bf16.mxu0 %v2190
    %2901 = vmatpush1.bf16.msra.mxu0 %v2189
    %2902 = vmatprep.subr.bf16.mxu0 %v2198
    %2903 = vmatpush1.bf16.msra.mxu0 %v2197
    %2904 = vmatprep.subr.bf16.mxu0 %v2206
    %2905 = vmatpush1.bf16.msra.mxu0 %v2205
    %2906 = vmatprep.subr.bf16.mxu0 %v2214
    %2907 = vmatpush1.bf16.msra.mxu0 %v2213
    %2908 = vmatprep.subr.bf16.mxu0 %v2222
    %2909 = vmatpush1.bf16.msra.mxu0 %v2221
    %2910 = vmatprep.subr.bf16.mxu0 %v2230
    %2911 = vmatpush1.bf16.msra.mxu0 %v2229
    %2912 = vmatprep.subr.bf16.mxu0 %v2238
    %2913 = vmatpush1.bf16.msra.mxu0 %v2237
    %2914 = vmatprep.subr.bf16.mxu0 %v2246
    %2915 = vmatpush1.bf16.msra.mxu0 %v2245
    %2916 = vmatprep.subr.bf16.mxu0 %v2254
    %2917 = vmatpush1.bf16.msra.mxu0 %v2253
    %2918 = vmatprep.subr.bf16.mxu0 %v2262
    %2919 = vmatpush1.bf16.msra.mxu0 %v2261
    %2920 = vmatprep.subr.bf16.mxu0 %v2270
    %2921 = vmatpush1.bf16.msra.mxu0 %v2269
    %2922 = vmatprep.subr.bf16.mxu0 %v2278
    %2923 = vmatpush1.bf16.msra.mxu0 %v2277
    %2924 = vmatprep.subr.bf16.mxu0 %v2286
    %2925 = vmatpush1.bf16.msra.mxu0 %v2285
    %2926 = vmatprep.subr.bf16.mxu0 %v2294
    %2927 = vmatpush1.bf16.msra.mxu0 %v2293
    %2928 = vmatprep.subr.bf16.mxu0 %v2302
    %2929 = vmatpush1.bf16.msra.mxu0 %v2301
    %2930 = vmatprep.subr.bf16.mxu0 %v2310
    %2931 = vmatpush1.bf16.msra.mxu0 %v2309
    %2932 = vmatprep.mubr.bf16.mxu0 %v2446
    %2933 = vmatmul.mubr.bf16.gmra.mrb[0].mxu0 %v2445
    %v2934 = vpop.f32.mrb[0].mxu0
    %v2935 = vadd.f32 %v2894, %v2934
    %v2936 = vpop.f32.mrb[0].mxu0
    %v2937 = vadd.f32 %v2896, %v2936
    %v2938 = vpop.f32.mrb[0].mxu0
    %v2939 = vpop.f32.mrb[0].mxu0
    %2940 = vdwg.mxu0
    %2941 = vmatprep.subr.bf16.mxu0 %v2318
    %2942 = vmatpush1.bf16.msra.mxu0 %v2317
    %2943 = vmatprep.subr.bf16.mxu0 %v2326
    %2944 = vmatpush1.bf16.msra.mxu0 %v2325
    %2945 = vmatprep.subr.bf16.mxu0 %v2334
    %2946 = vmatpush1.bf16.msra.mxu0 %v2333
    %2947 = vmatprep.subr.bf16.mxu0 %v2342
    %2948 = vmatpush1.bf16.msra.mxu0 %v2341
    %2949 = vmatprep.subr.bf16.mxu0 %v2350
    %2950 = vmatpush1.bf16.msra.mxu0 %v2349
    %2951 = vmatprep.subr.bf16.mxu0 %v2358
    %2952 = vmatpush1.bf16.msra.mxu0 %v2357
    %2953 = vmatprep.subr.bf16.mxu0 %v2366
    %2954 = vmatpush1.bf16.msra.mxu0 %v2365
    %2955 = vmatprep.subr.bf16.mxu0 %v2374
    %2956 = vmatpush1.bf16.msra.mxu0 %v2373
    %2957 = vmatprep.subr.bf16.mxu0 0
    %2958 = vmatpush1.bf16.msra.mxu0 0
    %2959 = vmatprep.subr.bf16.mxu0 0
    %2960 = vmatpush1.bf16.msra.mxu0 0
    %2961 = vmatprep.subr.bf16.mxu0 0
    %2962 = vmatpush1.bf16.msra.mxu0 0
    %2963 = vmatprep.subr.bf16.mxu0 0
    %2964 = vmatpush1.bf16.msra.mxu0 0
    %2965 = vmatprep.subr.bf16.mxu0 0
    %2966 = vmatpush1.bf16.msra.mxu0 0
    %2967 = vmatprep.subr.bf16.mxu0 0
    %2968 = vmatpush1.bf16.msra.mxu0 0
    %2969 = vmatprep.subr.bf16.mxu0 0
    %2970 = vmatpush1.bf16.msra.mxu0 0
    %2971 = vmatprep.subr.bf16.mxu0 0
    %2972 = vmatpush1.bf16.msra.mxu0 0
    %2973 = vmatprep.mubr.bf16.mxu0 0
    %2974 = vmatmul.mubr.bf16.gmra.mrb[0].mxu0 %v2447
    %v2975 = vpop.f32.mrb[0].mxu0
    %v2976 = vadd.f32 %v2935, %v2975
    %v2977 = vpop.f32.mrb[0].mxu0
    %v2978 = vadd.f32 %v2937, %v2977
    %v2979 = vpop.f32.mrb[0].mxu0
    %v2980 = vpop.f32.mrb[0].mxu0
    %2981 = vdwg.mxu0
    %2982 = vmatprep.subr.bf16.mxu0 %v1936
    %2983 = vmatpush1.bf16.msra.mxu0 %v1935
    %2984 = vmatprep.subr.bf16.mxu0 %v1944
    %2985 = vmatpush1.bf16.msra.mxu0 %v1943
    %2986 = vmatprep.subr.bf16.mxu0 %v1952
    %2987 = vmatpush1.bf16.msra.mxu0 %v1951
    %2988 = vmatprep.subr.bf16.mxu0 %v1960
    %2989 = vmatpush1.bf16.msra.mxu0 %v1959
    %2990 = vmatprep.subr.bf16.mxu0 %v1968
    %2991 = vmatpush1.bf16.msra.mxu0 %v1967
    %2992 = vmatprep.subr.bf16.mxu0 %v1976
    %2993 = vmatpush1.bf16.msra.mxu0 %v1975
    %2994 = vmatprep.subr.bf16.mxu0 %v1984
    %2995 = vmatpush1.bf16.msra.mxu0 %v1983
    %2996 = vmatprep.subr.bf16.mxu0 %v1992
    %2997 = vmatpush1.bf16.msra.mxu0 %v1991
    %2998 = vmatprep.subr.bf16.mxu0 %v2000
    %2999 = vmatpush1.bf16.msra.mxu0 %v1999
    %3000 = vmatprep.subr.bf16.mxu0 %v2008
    %3001 = vmatpush1.bf16.msra.mxu0 %v2007
    %3002 = vmatprep.subr.bf16.mxu0 %v2016
    %3003 = vmatpush1.bf16.msra.mxu0 %v2015
    %3004 = vmatprep.subr.bf16.mxu0 %v2024
    %3005 = vmatpush1.bf16.msra.mxu0 %v2023
    %3006 = vmatprep.subr.bf16.mxu0 %v2032
    %3007 = vmatpush1.bf16.msra.mxu0 %v2031
    %3008 = vmatprep.subr.bf16.mxu0 %v2040
    %3009 = vmatpush1.bf16.msra.mxu0 %v2039
    %3010 = vmatprep.subr.bf16.mxu0 %v2048
    %3011 = vmatpush1.bf16.msra.mxu0 %v2047
    %3012 = vmatprep.subr.bf16.mxu0 %v2056
    %3013 = vmatpush1.bf16.msra.mxu0 %v2055
    %3014 = vmatprep.mubr.bf16.mxu0 %v2442
    %3015 = vmatmul.mubr.bf16.gmra.mrb[0].mxu0 %v2441
    %v3016 = vpop.f32.mrb[0].mxu0
    %v3017 = vadd.f32 %v2477, %v3016
    %v3018 = vpop.f32.mrb[0].mxu0
    %v3019 = vadd.f32 %v2481, %v3018
    %v3020 = vpop.f32.mrb[0].mxu0
    %v3021 = vpop.f32.mrb[0].mxu0
    %3022 = vdwg.mxu0
    %3023 = vmatprep.subr.bf16.mxu0 %v2064
    %3024 = vmatpush1.bf16.msra.mxu0 %v2063
    %3025 = vmatprep.subr.bf16.mxu0 %v2072
    %3026 = vmatpush1.bf16.msra.mxu0 %v2071
    %3027 = vmatprep.subr.bf16.mxu0 %v2080
    %3028 = vmatpush1.bf16.msra.mxu0 %v2079
    %3029 = vmatprep.subr.bf16.mxu0 %v2088
    %3030 = vmatpush1.bf16.msra.mxu0 %v2087
    %3031 = vmatprep.subr.bf16.mxu0 %v2096
    %3032 = vmatpush1.bf16.msra.mxu0 %v2095
    %3033 = vmatprep.subr.bf16.mxu0 %v2104
    %3034 = vmatpush1.bf16.msra.mxu0 %v2103
    %3035 = vmatprep.subr.bf16.mxu0 %v2112
    %3036 = vmatpush1.bf16.msra.mxu0 %v2111
    %3037 = vmatprep.subr.bf16.mxu0 %v2120
    %3038 = vmatpush1.bf16.msra.mxu0 %v2119
    %3039 = vmatprep.subr.bf16.mxu0 %v2128
    %3040 = vmatpush1.bf16.msra.mxu0 %v2127
    %3041 = vmatprep.subr.bf16.mxu0 %v2136
    %3042 = vmatpush1.bf16.msra.mxu0 %v2135
    %3043 = vmatprep.subr.bf16.mxu0 %v2144
    %3044 = vmatpush1.bf16.msra.mxu0 %v2143
    %3045 = vmatprep.subr.bf16.mxu0 %v2152
    %3046 = vmatpush1.bf16.msra.mxu0 %v2151
    %3047 = vmatprep.subr.bf16.mxu0 %v2160
    %3048 = vmatpush1.bf16.msra.mxu0 %v2159
    %3049 = vmatprep.subr.bf16.mxu0 %v2168
    %3050 = vmatpush1.bf16.msra.mxu0 %v2167
    %3051 = vmatprep.subr.bf16.mxu0 %v2176
    %3052 = vmatpush1.bf16.msra.mxu0 %v2175
    %3053 = vmatprep.subr.bf16.mxu0 %v2184
    %3054 = vmatpush1.bf16.msra.mxu0 %v2183
    %3055 = vmatprep.mubr.bf16.mxu0 %v2444
    %3056 = vmatmul.mubr.bf16.gmra.mrb[0].mxu0 %v2443
    %v3057 = vpop.f32.mrb[0].mxu0
    %v3058 = vadd.f32 %v3017, %v3057
    %v3059 = vpop.f32.mrb[0].mxu0
    %v3060 = vadd.f32 %v3019, %v3059
    %v3061 = vpop.f32.mrb[0].mxu0
    %v3062 = vpop.f32.mrb[0].mxu0
    %3063 = vdwg.mxu0
    %3064 = vmatprep.subr.bf16.mxu0 %v2192
    %3065 = vmatpush1.bf16.msra.mxu0 %v2191
    %3066 = vmatprep.subr.bf16.mxu0 %v2200
    %3067 = vmatpush1.bf16.msra.mxu0 %v2199
    %3068 = vmatprep.subr.bf16.mxu0 %v2208
    %3069 = vmatpush1.bf16.msra.mxu0 %v2207
    %3070 = vmatprep.subr.bf16.mxu0 %v2216
    %3071 = vmatpush1.bf16.msra.mxu0 %v2215
    %3072 = vmatprep.subr.bf16.mxu0 %v2224
    %3073 = vmatpush1.bf16.msra.mxu0 %v2223
    %3074 = vmatprep.subr.bf16.mxu0 %v2232
    %3075 = vmatpush1.bf16.msra.mxu0 %v2231
    %3076 = vmatprep.subr.bf16.mxu0 %v2240
    %3077 = vmatpush1.bf16.msra.mxu0 %v2239
    %3078 = vmatprep.subr.bf16.mxu0 %v2248
    %3079 = vmatpush1.bf16.msra.mxu0 %v2247
    %3080 = vmatprep.subr.bf16.mxu0 %v2256
    %3081 = vmatpush1.bf16.msra.mxu0 %v2255
    %3082 = vmatprep.subr.bf16.mxu0 %v2264
    %3083 = vmatpush1.bf16.msra.mxu0 %v2263
    %3084 = vmatprep.subr.bf16.mxu0 %v2272
    %3085 = vmatpush1.bf16.msra.mxu0 %v2271
    %3086 = vmatprep.subr.bf16.mxu0 %v2280
    %3087 = vmatpush1.bf16.msra.mxu0 %v2279
    %3088 = vmatprep.subr.bf16.mxu0 %v2288
    %3089 = vmatpush1.bf16.msra.mxu0 %v2287
    %3090 = vmatprep.subr.bf16.mxu0 %v2296
    %3091 = vmatpush1.bf16.msra.mxu0 %v2295
    %3092 = vmatprep.subr.bf16.mxu0 %v2304
    %3093 = vmatpush1.bf16.msra.mxu0 %v2303
    %3094 = vmatprep.subr.bf16.mxu0 %v2312
    %3095 = vmatpush1.bf16.msra.mxu0 %v2311
    %3096 = vmatprep.mubr.bf16.mxu0 %v2446
    %3097 = vmatmul.mubr.bf16.gmra.mrb[0].mxu0 %v2445
    %v3098 = vpop.f32.mrb[0].mxu0
    %v3099 = vadd.f32 %v3058, %v3098
    %v3100 = vpop.f32.mrb[0].mxu0
    %v3101 = vadd.f32 %v3060, %v3100
    %v3102 = vpop.f32.mrb[0].mxu0
    %v3103 = vpop.f32.mrb[0].mxu0
    %3104 = vdwg.mxu0
    %3105 = vmatprep.subr.bf16.mxu0 %v2320
    %3106 = vmatpush1.bf16.msra.mxu0 %v2319
    %3107 = vmatprep.subr.bf16.mxu0 %v2328
    %3108 = vmatpush1.bf16.msra.mxu0 %v2327
    %3109 = vmatprep.subr.bf16.mxu0 %v2336
    %3110 = vmatpush1.bf16.msra.mxu0 %v2335
    %3111 = vmatprep.subr.bf16.mxu0 %v2344
    %3112 = vmatpush1.bf16.msra.mxu0 %v2343
    %3113 = vmatprep.subr.bf16.mxu0 %v2352
    %3114 = vmatpush1.bf16.msra.mxu0 %v2351
    %3115 = vmatprep.subr.bf16.mxu0 %v2360
    %3116 = vmatpush1.bf16.msra.mxu0 %v2359
    %3117 = vmatprep.subr.bf16.mxu0 %v2368
    %3118 = vmatpush1.bf16.msra.mxu0 %v2367
    %3119 = vmatprep.subr.bf16.mxu0 %v2376
    %3120 = vmatpush1.bf16.msra.mxu0 %v2375
    %3121 = vmatprep.subr.bf16.mxu0 0
    %3122 = vmatpush1.bf16.msra.mxu0 0
    %3123 = vmatprep.subr.bf16.mxu0 0
    %3124 = vmatpush1.bf16.msra.mxu0 0
    %3125 = vmatprep.subr.bf16.mxu0 0
    %3126 = vmatpush1.bf16.msra.mxu0 0
    %3127 = vmatprep.subr.bf16.mxu0 0
    %3128 = vmatpush1.bf16.msra.mxu0 0
    %3129 = vmatprep.subr.bf16.mxu0 0
    %3130 = vmatpush1.bf16.msra.mxu0 0
    %3131 = vmatprep.subr.bf16.mxu0 0
    %3132 = vmatpush1.bf16.msra.mxu0 0
    %3133 = vmatprep.subr.bf16.mxu0 0
    %3134 = vmatpush1.bf16.msra.mxu0 0
    %3135 = vmatprep.subr.bf16.mxu0 0
    %3136 = vmatpush1.bf16.msra.mxu0 0
    %3137 = vmatprep.mubr.bf16.mxu0 0
    %3138 = vmatmul.mubr.bf16.gmra.mrb[0].mxu0 %v2447
    %v3139 = vpop.f32.mrb[0].mxu0
    %v3140 = vadd.f32 %v3099, %v3139
    %v3141 = vpop.f32.mrb[0].mxu0
    %v3142 = vadd.f32 %v3101, %v3141
    %v3143 = vpop.f32.mrb[0].mxu0
    %v3144 = vpop.f32.mrb[0].mxu0
    %3145 = vdwg.mxu0
    %v3146 = vmax.f32 %v2648, 0.0
    %v3147 = vmax.f32 %v2650, 0.0
    %v3148 = vmax.f32 %v2812, 0.0
    %v3149 = vmax.f32 %v2814, 0.0
    %v3150 = vmax.f32 %v2976, 0.0
    %v3151 = vmax.f32 %v2978, 0.0
    %v3152 = vmax.f32 %v3140, 0.0
    %v3153 = vmax.f32 %v3142, 0.0
    %v3154 = vpack.c.bf16 %v3146, %v3146
    %v3155 = vpack.c.bf16 %v3147, %v3147
    %v3156 = vpack.c.bf16 %v3148, %v3148
    %v3157 = vpack.c.bf16 %v3149, %v3149
    %v3158 = vpack.c.bf16 %v3150, %v3150
    %v3159 = vpack.c.bf16 %v3151, %v3151
    %v3160 = vpack.c.bf16 %v3152, %v3152
    %v3161 = vpack.c.bf16 %v3153, %v3153
    %v3162 = vld [vmem:[#allocation21] sm:$0x1]
    %v3164 = vlaneseq
    %v3165 = vshrl.u32 %v3164, 7
    %v3166 = vsub.s32 0, %v3165
    %v3167 = vrot.slane %v3162, %v3166
    %3169 = vmatprep.subr.bf16.mxu0 0
    %3170 = vmatpush1.bf16.msra.mxu0 %v2377
    %3171 = vmatprep.subr.bf16.mxu0 0
    %3172 = vmatpush1.bf16.msra.mxu0 %v2378
    %3173 = vmatprep.subr.bf16.mxu0 0
    %3174 = vmatpush1.bf16.msra.mxu0 %v2379
    %3175 = vmatprep.subr.bf16.mxu0 0
    %3176 = vmatpush1.bf16.msra.mxu0 %v2380
    %3177 = vmatprep.subr.bf16.mxu0 0
    %3178 = vmatpush1.bf16.msra.mxu0 %v2381
    %3179 = vmatprep.subr.bf16.mxu0 0
    %3180 = vmatpush1.bf16.msra.mxu0 %v2382
    %3181 = vmatprep.subr.bf16.mxu0 0
    %3182 = vmatpush1.bf16.msra.mxu0 %v2383
    %3183 = vmatprep.subr.bf16.mxu0 0
    %3184 = vmatpush1.bf16.msra.mxu0 %v2384
    %3185 = vmatprep.subr.bf16.mxu0 0
    %3186 = vmatpush1.bf16.msra.mxu0 %v2385
    %3187 = vmatprep.subr.bf16.mxu0 0
    %3188 = vmatpush1.bf16.msra.mxu0 %v2386
    %3189 = vmatprep.subr.bf16.mxu0 0
    %3190 = vmatpush1.bf16.msra.mxu0 %v2387
    %3191 = vmatprep.subr.bf16.mxu0 0
    %3192 = vmatpush1.bf16.msra.mxu0 %v2388
    %3193 = vmatprep.subr.bf16.mxu0 0
    %3194 = vmatpush1.bf16.msra.mxu0 %v2389
    %3195 = vmatprep.subr.bf16.mxu0 0
    %3196 = vmatpush1.bf16.msra.mxu0 %v2390
    %3197 = vmatprep.subr.bf16.mxu0 0
    %3198 = vmatpush1.bf16.msra.mxu0 %v2391
    %3199 = vmatprep.subr.bf16.mxu0 0
    %3200 = vmatpush1.bf16.msra.mxu0 %v2392
    %3201 = vmatprep.mubr.bf16.mxu0 %v3155
    %3202 = vmatmul.mubr.bf16.gmra.mrb[0].mxu0 %v3154
    %v3203 = vpop.f32.mrb[0].mxu0
    %v3204 = vadd.f32 %v3167, %v3203
    %v3205 = vpop.f32.mrb[0].mxu0
    %v3206 = vpop.f32.mrb[0].mxu0
    %v3207 = vpop.f32.mrb[0].mxu0
    %3208 = vdwg.mxu0
    %3209 = vmatprep.subr.bf16.mxu0 0
    %3210 = vmatpush1.bf16.msra.mxu0 %v2393
    %3211 = vmatprep.subr.bf16.mxu0 0
    %3212 = vmatpush1.bf16.msra.mxu0 %v2394
    %3213 = vmatprep.subr.bf16.mxu0 0
    %3214 = vmatpush1.bf16.msra.mxu0 %v2395
    %3215 = vmatprep.subr.bf16.mxu0 0
    %3216 = vmatpush1.bf16.msra.mxu0 %v2396
    %3217 = vmatprep.subr.bf16.mxu0 0
    %3218 = vmatpush1.bf16.msra.mxu0 %v2397
    %3219 = vmatprep.subr.bf16.mxu0 0
    %3220 = vmatpush1.bf16.msra.mxu0 %v2398
    %3221 = vmatprep.subr.bf16.mxu0 0
    %3222 = vmatpush1.bf16.msra.mxu0 %v2399
    %3223 = vmatprep.subr.bf16.mxu0 0
    %3224 = vmatpush1.bf16.msra.mxu0 %v2400
    %3225 = vmatprep.subr.bf16.mxu0 0
    %3226 = vmatpush1.bf16.msra.mxu0 %v2401
    %3227 = vmatprep.subr.bf16.mxu0 0
    %3228 = vmatpush1.bf16.msra.mxu0 %v2402
    %3229 = vmatprep.subr.bf16.mxu0 0
    %3230 = vmatpush1.bf16.msra.mxu0 %v2403
    %3231 = vmatprep.subr.bf16.mxu0 0
    %3232 = vmatpush1.bf16.msra.mxu0 %v2404
    %3233 = vmatprep.subr.bf16.mxu0 0
    %3234 = vmatpush1.bf16.msra.mxu0 %v2405
    %3235 = vmatprep.subr.bf16.mxu0 0
    %3236 = vmatpush1.bf16.msra.mxu0 %v2406
    %3237 = vmatprep.subr.bf16.mxu0 0
    %3238 = vmatpush1.bf16.msra.mxu0 %v2407
    %3239 = vmatprep.subr.bf16.mxu0 0
    %3240 = vmatpush1.bf16.msra.mxu0 %v2408
    %3241 = vmatprep.mubr.bf16.mxu0 %v3157
    %3242 = vmatmul.mubr.bf16.gmra.mrb[0].mxu0 %v3156
    %v3243 = vpop.f32.mrb[0].mxu0
    %v3244 = vadd.f32 %v3204, %v3243
    %v3245 = vpop.f32.mrb[0].mxu0
    %v3246 = vpop.f32.mrb[0].mxu0
    %v3247 = vpop.f32.mrb[0].mxu0
    %3248 = vdwg.mxu0
    %3249 = vmatprep.subr.bf16.mxu0 0
    %3250 = vmatpush1.bf16.msra.mxu0 %v2409
    %3251 = vmatprep.subr.bf16.mxu0 0
    %3252 = vmatpush1.bf16.msra.mxu0 %v2410
    %3253 = vmatprep.subr.bf16.mxu0 0
    %3254 = vmatpush1.bf16.msra.mxu0 %v2411
    %3255 = vmatprep.subr.bf16.mxu0 0
    %3256 = vmatpush1.bf16.msra.mxu0 %v2412
    %3257 = vmatprep.subr.bf16.mxu0 0
    %3258 = vmatpush1.bf16.msra.mxu0 %v2413
    %3259 = vmatprep.subr.bf16.mxu0 0
    %3260 = vmatpush1.bf16.msra.mxu0 %v2414
    %3261 = vmatprep.subr.bf16.mxu0 0
    %3262 = vmatpush1.bf16.msra.mxu0 %v2415
    %3263 = vmatprep.subr.bf16.mxu0 0
    %3264 = vmatpush1.bf16.msra.mxu0 %v2416
    %3265 = vmatprep.subr.bf16.mxu0 0
    %3266 = vmatpush1.bf16.msra.mxu0 %v2417
    %3267 = vmatprep.subr.bf16.mxu0 0
    %3268 = vmatpush1.bf16.msra.mxu0 %v2418
    %3269 = vmatprep.subr.bf16.mxu0 0
    %3270 = vmatpush1.bf16.msra.mxu0 %v2419
    %3271 = vmatprep.subr.bf16.mxu0 0
    %3272 = vmatpush1.bf16.msra.mxu0 %v2420
    %3273 = vmatprep.subr.bf16.mxu0 0
    %3274 = vmatpush1.bf16.msra.mxu0 %v2421
    %3275 = vmatprep.subr.bf16.mxu0 0
    %3276 = vmatpush1.bf16.msra.mxu0 %v2422
    %3277 = vmatprep.subr.bf16.mxu0 0
    %3278 = vmatpush1.bf16.msra.mxu0 %v2423
    %3279 = vmatprep.subr.bf16.mxu0 0
    %3280 = vmatpush1.bf16.msra.mxu0 %v2424
    %3281 = vmatprep.mubr.bf16.mxu0 %v3159
    %3282 = vmatmul.mubr.bf16.gmra.mrb[0].mxu0 %v3158
    %v3283 = vpop.f32.mrb[0].mxu0
    %v3284 = vadd.f32 %v3244, %v3283
    %v3285 = vpop.f32.mrb[0].mxu0
    %v3286 = vpop.f32.mrb[0].mxu0
    %v3287 = vpop.f32.mrb[0].mxu0
    %3288 = vdwg.mxu0
    %3289 = vmatprep.subr.bf16.mxu0 0
    %3290 = vmatpush1.bf16.msra.mxu0 %v2425
    %3291 = vmatprep.subr.bf16.mxu0 0
    %3292 = vmatpush1.bf16.msra.mxu0 %v2426
    %3293 = vmatprep.subr.bf16.mxu0 0
    %3294 = vmatpush1.bf16.msra.mxu0 %v2427
    %3295 = vmatprep.subr.bf16.mxu0 0
    %3296 = vmatpush1.bf16.msra.mxu0 %v2428
    %3297 = vmatprep.subr.bf16.mxu0 0
    %3298 = vmatpush1.bf16.msra.mxu0 %v2429
    %3299 = vmatprep.subr.bf16.mxu0 0
    %3300 = vmatpush1.bf16.msra.mxu0 %v2430
    %3301 = vmatprep.subr.bf16.mxu0 0
    %3302 = vmatpush1.bf16.msra.mxu0 %v2431
    %3303 = vmatprep.subr.bf16.mxu0 0
    %3304 = vmatpush1.bf16.msra.mxu0 %v2432
    %3305 = vmatprep.subr.bf16.mxu0 0
    %3306 = vmatpush1.bf16.msra.mxu0 %v2433
    %3307 = vmatprep.subr.bf16.mxu0 0
    %3308 = vmatpush1.bf16.msra.mxu0 %v2434
    %3309 = vmatprep.subr.bf16.mxu0 0
    %3310 = vmatpush1.bf16.msra.mxu0 %v2435
    %3311 = vmatprep.subr.bf16.mxu0 0
    %3312 = vmatpush1.bf16.msra.mxu0 %v2436
    %3313 = vmatprep.subr.bf16.mxu0 0
    %3314 = vmatpush1.bf16.msra.mxu0 %v2437
    %3315 = vmatprep.subr.bf16.mxu0 0
    %3316 = vmatpush1.bf16.msra.mxu0 %v2438
    %3317 = vmatprep.subr.bf16.mxu0 0
    %3318 = vmatpush1.bf16.msra.mxu0 %v2439
    %3319 = vmatprep.subr.bf16.mxu0 0
    %3320 = vmatpush1.bf16.msra.mxu0 %v2440
    %3321 = vmatprep.mubr.bf16.mxu0 %v3161
    %3322 = vmatmul.mubr.bf16.gmra.mrb[0].mxu0 %v3160
    %v3323 = vpop.f32.mrb[0].mxu0
    %v3324 = vadd.f32 %v3284, %v3323
    %v3325 = vpop.f32.mrb[0].mxu0
    %v3326 = vpop.f32.mrb[0].mxu0
    %v3327 = vpop.f32.mrb[0].mxu0
    %3328 = vdwg.mxu0
    %v3329 = vlaneseq
    %v3330 = vand.u32 %v3329, 127
    %vm3331 = vcmp.lt.s32.totalorder %v3330, 4
    %v3332 = vxor.u32 %v3324, 2147483648
    %v3333 = vmul.f32 %v3332, 1.442695
    %v3334 = vpow.pop %v3333
    %v3335 = vadd.f32 %v3334, 1.0
    %v3336 = vrcp.pop %v3335
    %v3337 = vmul.f32 1.0, %v3336
    %v3338 = vsel %vm3331, %v3337, %v3324
    %3339 = vst [vmem:[%s15] sm:$0xff] %v3338
    // Predicated region
    $region98: #{forward.1} parent=1 // pred_check
      _
    $region99: #{forward.1} parent=1 // pred_check_branch
      %3341 = sbr.rel (0) target = $region101
    $region100: #{forward.1} parent=1 // pred_region
      _
    $region101: #{forward.1} parent=1 // pred_fallthru
      _
    // Predicated region
    $region102: #{forward.1} parent=1 // pred_check
      _
    $region103: #{forward.1} parent=1 // pred_check_branch
      %3343 = sbr.rel (0) target = $region105
    $region104: #{forward.1} parent=1 // pred_region
      _
    $region105: #{forward.1} parent=1 // pred_fallthru
      _
    // Predicated region
    $region106: #{forward.1} parent=1 // pred_check
      _
    $region107: #{forward.1} parent=1 // pred_check_branch
      %3345 = sbr.rel (0) target = $region109
    $region108: #{forward.1} parent=1 // pred_region
      _
    $region109: #{forward.1} parent=1 // pred_fallthru
      _
    // Predicated region
    $region110: #{forward.1} parent=1 // pred_check
      _
    $region111: #{forward.1} parent=1 // pred_check_branch
      %3347 = sbr.rel (0) target = $region113
    $region112: #{forward.1} parent=1 // pred_region
      _
    $region113: #{forward.1} parent=1 // pred_fallthru
      _
    %3348 = vsyncpa [#allocation6], 1
    %3349 = vsyncpa [#allocation8], 1
    %3350 = vsyncpa [#allocation11], 1
    %3351 = vsyncpa [#allocation14], 1
    %3352 = vsyncpa [#allocation17], 1
    %3353 = vsyncpa [#allocation20], 1
  %3354 = vsyncmov [#allocation4]
  %s3355 = vpop.sfrf %3354
  %p3356 = scmp.eq.s32.totalorder %s3355, 0
  %p3357 = pneg %p3356
  %3359 = shalt.err (%p3357)
  %s3360 = scalar_lea.sflag [#allocation4], 1
  %3361 = vsyncmov %s3360
  %s3362 = vpop.sfrf %3361
  %p3363 = scmp.eq.s32.totalorder %s3362, 0
  %p3364 = pneg %p3363
  %3366 = shalt.err (%p3364)

</llo_original>
